<compile_context>
chip_gen: v6e
topology: v6e:2x2x1
jax: 0.10.0
libtpu: 0.0.40
codegen_flags: <defaults>
</compile_context>

<pallas_src>
import functools

import numpy as np
import jax
import jax.numpy as jnp
from jax.experimental import pallas as pl
from jax.experimental.pallas import tpu as pltpu

EPS = 1e-5


def _vmem():
    return pl.BlockSpec(memory_space=pltpu.MemorySpace.VMEM)


# ----------------------------------------------------------------------------
# Fused kernel
# ----------------------------------------------------------------------------
def predict_net_kernel(x_ref, mask_ref, gath_ref,
                       w_res_ref, shift_res_ref,
                       wa_ref, ba_ref,
                       wv_ref, bv_ref,
                       fc1w_ref, fc1b_ref, fc2w_ref, fc2b_ref,
                       policy_ref, value_ref,
                       *, num_blocks, batch, hw, cv, shifts, npix):
    mask = mask_ref[...]                    # (1, NPIX)  1.0 on valid pixels
    act = x_ref[...]                        # (C, NPIX)  f32, zero borders

    def conv3x3_bn(a, idx):
        # im2col along K: 9 pixel-shifted copies stacked on the sublane axis,
        # then a single K=9*C matmul (bf16 operands, f32 accumulate on MXU).
        # BN scale is pre-folded into the weights; only the shift remains.
        cols = [a if s == 0 else pltpu.roll(a, (-s) % npix, 1) for s in shifts]
        xcat = jnp.concatenate(cols, axis=0).astype(jnp.bfloat16)   # (9C, NPIX)
        y = jnp.dot(w_res_ref[idx], xcat,
                    preferred_element_type=jnp.float32)             # (C, NPIX)
        return y + shift_res_ref[idx]

    # ---- residual trunk (num_blocks blocks, fully unrolled) ----
    for blk in range(num_blocks):
        residual = act
        h = jnp.maximum(conv3x3_bn(act, 2 * blk), 0.0) * mask
        act = jnp.maximum(conv3x3_bn(h, 2 * blk + 1) + residual, 0.0) * mask

    # gather the B*H*W valid pixels (NCHW row-major order) via a 0/1 matmul
    compact = jnp.dot(act, gath_ref[...],
                      preferred_element_type=jnp.float32)           # (C, B*HW)

    # ---- action head: 1x1 conv (BN folded) + ReLU + per-sample softmax ----
    logits = jnp.dot(wa_ref[...], compact,
                     preferred_element_type=jnp.float32)            # (Ca, B*HW)
    logits = jnp.maximum(logits + ba_ref[...], 0.0)
    probs = []
    for b in range(batch):
        lb = logits[:, b * hw:(b + 1) * hw]                         # (Ca, HW)
        m = jnp.max(jnp.max(lb, axis=1, keepdims=True), axis=0, keepdims=True)
        e = jnp.exp(lb - m)
        denom = jnp.sum(jnp.sum(e, axis=1, keepdims=True),
                        axis=0, keepdims=True)
        probs.append(e / denom)
    policy_ref[...] = jnp.concatenate(probs, axis=0)                # (B*Ca, HW)

    # ---- value head: 1x1 conv (BN folded) + ReLU + fc1 + ReLU + fc2 + tanh ----
    vfeat = jnp.dot(wv_ref[...], compact,
                    preferred_element_type=jnp.float32)             # (Cv, B*HW)
    vfeat = jnp.maximum(vfeat + bv_ref[...], 0.0)
    # rebuild the PyTorch view order (b, c*HW+p) and run fc1/fc2 as batched matmuls
    vrows = []
    for b in range(batch):
        vrows.append(jnp.concatenate(
            [vfeat[c:c + 1, b * hw:(b + 1) * hw] for c in range(cv)], axis=1))
    vflat = jnp.concatenate(vrows, axis=0)                          # (B, Cv*HW)
    hidden = jnp.maximum(
        jnp.dot(vflat, fc1w_ref[...], preferred_element_type=jnp.float32)
        + fc1b_ref[...], 0.0)                                       # (B, 8)
    value_ref[...] = jnp.tanh(
        jnp.dot(hidden, fc2w_ref[...], preferred_element_type=jnp.float32)
        + fc2b_ref[...])                                            # (B, 1)


# ----------------------------------------------------------------------------
# Layout constants (padded pixel mask + NCHW-order gather matrix)
# ----------------------------------------------------------------------------
def make_layout_consts(B, H, W):
    Hp, Wp = H + 2, W + 2
    npix_raw = B * Hp * Wp
    npix = ((npix_raw + 127) // 128) * 128          # lane-align the pixel axis
    mask = np.zeros((1, npix), np.float32)
    gather = np.zeros((npix, B * H * W), np.float32)
    for b in range(B):
        for i in range(H):
            for j in range(W):
                q = b * Hp * Wp + (i + 1) * Wp + (j + 1)
                m = b * H * W + i * W + j
                mask[0, q] = 1.0
                gather[q, m] = 1.0
    return {'mask': jnp.asarray(mask), 'gather': jnp.asarray(gather)}


# ----------------------------------------------------------------------------
# Parameter construction (deterministic, synthetic; BN folded for inference)
# ----------------------------------------------------------------------------
def _bn_affine(key, cout):
    kb, kg, kbeta, km, kv = jax.random.split(key, 5)
    bias = 0.1 * jax.random.normal(kb, (cout,), jnp.float32)
    gamma = 1.0 + 0.1 * jax.random.normal(kg, (cout,), jnp.float32)
    beta = 0.1 * jax.random.normal(kbeta, (cout,), jnp.float32)
    mean = 0.1 * jax.random.normal(km, (cout,), jnp.float32)
    var = 1.0 + 0.1 * jax.random.uniform(kv, (cout,), jnp.float32)
    scale = gamma / jnp.sqrt(var + EPS)
    shift = beta + (bias - mean) * scale
    return scale.reshape(cout, 1), shift.reshape(cout, 1)


def init_params(key, num_res_blocks=5, num_actions=512, channels=32,
                image_size=(8, 8)):
    H, W = image_size
    hw = H * W
    ca = num_actions // hw               # action-head channels (8)
    cv = channels // 16                  # value-head channels (2)
    n_conv = 2 * num_res_blocks
    keys = jax.random.split(key, 2 * n_conv + 6)

    # 3x3 conv weights, stored in im2col layout (Cout, 9*Cin) with tap
    # t = dy*3 + dx (matches the kernel's roll order); BN scale folded in.
    w_res, bn_shifts = [], []
    for k in range(n_conv):
        w4 = jax.random.normal(keys[2 * k], (channels, channels, 3, 3),
                               jnp.float32) / np.sqrt(9 * channels)
        scale, shift = _bn_affine(keys[2 * k + 1], channels)
        w_im = jnp.transpose(w4, (0, 2, 3, 1)).reshape(channels, 9 * channels)
        w_res.append(w_im * scale)       # fold BN scale per output channel
        bn_shifts.append(shift)
    idx = 2 * n_conv
    wa = jax.random.normal(keys[idx], (ca, channels), jnp.float32) / np.sqrt(channels)
    sa, ba = _bn_affine(keys[idx + 1], ca)
    wv = jax.random.normal(keys[idx + 2], (cv, channels), jnp.float32) / np.sqrt(channels)
    sv, bv = _bn_affine(keys[idx + 3], cv)
    fin = cv * hw
    fc1_w = jax.random.normal(keys[idx + 4], (fin, 8), jnp.float32) / np.sqrt(fin)
    fc1_b = 0.1 * jnp.ones((1, 8), jnp.float32)
    fc2_w = jax.random.normal(keys[idx + 5], (8, 1), jnp.float32) / np.sqrt(8)
    fc2_b = jnp.zeros((1, 1), jnp.float32)

    return {
        'w_res': jnp.stack(w_res).astype(jnp.bfloat16),   # (2R, C, 9C) bf16 MXU operands
        'shift_res': jnp.stack(bn_shifts),                # (2R, C, 1)  f32 epilogue
        'wa': wa * sa, 'shift_a': ba,                     # BN scale folded into 1x1 conv
        'wv': wv * sv, 'shift_v': bv,
        'fc1_w': fc1_w, 'fc1_b': fc1_b,
        'fc2_w': fc2_w, 'fc2_b': fc2_b,
    }


# ----------------------------------------------------------------------------
# Forward pass (matches Predict_Net.forward semantics, inference-mode BN)
# ----------------------------------------------------------------------------
def predict_net_forward(x_nchw, params, consts):
    B, C, H, W = x_nchw.shape
    Hp, Wp = H + 2, W + 2
    hw = H * W
    ca = params['wa'].shape[0]
    cv = params['wv'].shape[0]
    num_blocks = params['w_res'].shape[0] // 2
    npix = consts['mask'].shape[1]

    # NCHW -> channel-major, spatially padded, lane-aligned pixel layout (C, NPIX)
    xp = jnp.pad(x_nchw, ((0, 0), (0, 0), (1, 1), (1, 1)))
    x_cm = jnp.transpose(xp, (1, 0, 2, 3)).reshape(C, B * Hp * Wp)
    x_cm = jnp.pad(x_cm, ((0, 0), (0, npix - B * Hp * Wp)))

    shifts = tuple((dy - 1) * Wp + (dx - 1) for dy in range(3) for dx in range(3))

    kernel = functools.partial(
        predict_net_kernel, num_blocks=num_blocks, batch=B, hw=hw,
        cv=cv, shifts=shifts, npix=npix)

    args = (x_cm, consts['mask'], consts['gather'],
            params['w_res'], params['shift_res'],
            params['wa'], params['shift_a'],
            params['wv'], params['shift_v'],
            params['fc1_w'], params['fc1_b'], params['fc2_w'], params['fc2_b'])

    policy, value = pl.pallas_call(
        kernel,
        out_shape=(jax.ShapeDtypeStruct((B * ca, hw), jnp.float32),
                   jax.ShapeDtypeStruct((B, 1), jnp.float32)),
        in_specs=[_vmem() for _ in args],
        out_specs=(_vmem(), _vmem()),
    )(*args)

    # (B*Ca, H*W) rows ordered (b, c) -> free reshape to NCHW-flat (B, num_actions)
    return policy.reshape(B, ca * hw), value


if __name__ == "__main__":
    key = jax.random.PRNGKey(0)
    kx, kp = jax.random.split(key)

    B, C, H, W = 2, 32, 8, 8
    num_res_blocks = 5
    num_actions = 512

    x = jax.random.normal(kx, (B, C, H, W), jnp.float32)
    params = init_params(kp, num_res_blocks=num_res_blocks,
                         num_actions=num_actions, channels=C,
                         image_size=(H, W))
    consts = make_layout_consts(B, H, W)

    fwd = jax.jit(predict_net_forward)
    policy, value = fwd(x, params, consts)
    policy = jax.block_until_ready(policy)
    value = jax.block_until_ready(value)

    assert policy.shape == (B, num_actions)
    assert value.shape == (B, 1)
    assert bool(jnp.all(jnp.isfinite(policy)))
    assert bool(jnp.all(jnp.isfinite(value)))
    assert bool(jnp.allclose(jnp.sum(policy, axis=-1), 1.0, atol=1e-3))
    assert bool(jnp.all(jnp.abs(value) <= 1.0 + 1e-5))
    print("KERNEL_OK")
</pallas_src>

<mosaic_0001>
module attributes {stable_mosaic.version = 11 : i64} {
  func.func @predict_net_kernel(%arg0: memref<32x256xf32, #tpu.memory_space<vmem>>, %arg1: memref<1x256xf32, #tpu.memory_space<vmem>>, %arg2: memref<256x128xf32, #tpu.memory_space<vmem>>, %arg3: memref<10x32x288xbf16, #tpu.memory_space<vmem>>, %arg4: memref<10x32x1xf32, #tpu.memory_space<vmem>>, %arg5: memref<8x32xf32, #tpu.memory_space<vmem>>, %arg6: memref<8x1xf32, #tpu.memory_space<vmem>>, %arg7: memref<2x32xf32, #tpu.memory_space<vmem>>, %arg8: memref<2x1xf32, #tpu.memory_space<vmem>>, %arg9: memref<128x8xf32, #tpu.memory_space<vmem>>, %arg10: memref<1x8xf32, #tpu.memory_space<vmem>>, %arg11: memref<8x1xf32, #tpu.memory_space<vmem>>, %arg12: memref<1x1xf32, #tpu.memory_space<vmem>>, %arg13: memref<16x64xf32, #tpu.memory_space<vmem>>, %arg14: memref<2x1xf32, #tpu.memory_space<vmem>>) attributes {dimension_semantics = [], scalar_prefetch = 0 : i64, scratch_operands = 0 : i64, tpu.core_type = #tpu.core_type<tc>} {
    %c0 = arith.constant 0 : index
    %c0_0 = arith.constant 0 : index
    %0 = vector.load %arg1[%c0, %c0_0] : memref<1x256xf32, #tpu.memory_space<vmem>>, vector<1x256xf32>
    %c0_1 = arith.constant 0 : index
    %c0_2 = arith.constant 0 : index
    %1 = vector.load %arg0[%c0_1, %c0_2] : memref<32x256xf32, #tpu.memory_space<vmem>>, vector<32x256xf32>
    %c11_i32 = arith.constant 11 : i32
    %2 = tpu.dynamic_rotate %1 by %c11_i32 dim 1 : vector<32x256xf32>, i32 -> vector<32x256xf32>
    %c10_i32 = arith.constant 10 : i32
    %3 = tpu.dynamic_rotate %1 by %c10_i32 dim 1 : vector<32x256xf32>, i32 -> vector<32x256xf32>
    %c9_i32 = arith.constant 9 : i32
    %4 = tpu.dynamic_rotate %1 by %c9_i32 dim 1 : vector<32x256xf32>, i32 -> vector<32x256xf32>
    %c1_i32 = arith.constant 1 : i32
    %5 = tpu.dynamic_rotate %1 by %c1_i32 dim 1 : vector<32x256xf32>, i32 -> vector<32x256xf32>
    %c255_i32 = arith.constant 255 : i32
    %6 = tpu.dynamic_rotate %1 by %c255_i32 dim 1 : vector<32x256xf32>, i32 -> vector<32x256xf32>
    %c247_i32 = arith.constant 247 : i32
    %7 = tpu.dynamic_rotate %1 by %c247_i32 dim 1 : vector<32x256xf32>, i32 -> vector<32x256xf32>
    %c246_i32 = arith.constant 246 : i32
    %8 = tpu.dynamic_rotate %1 by %c246_i32 dim 1 : vector<32x256xf32>, i32 -> vector<32x256xf32>
    %c245_i32 = arith.constant 245 : i32
    %9 = tpu.dynamic_rotate %1 by %c245_i32 dim 1 : vector<32x256xf32>, i32 -> vector<32x256xf32>
    %10 = tpu.concatenate %2, %3, %4, %5, %1, %6, %7, %8, %9 in 0 : vector<32x256xf32>, vector<32x256xf32>, vector<32x256xf32>, vector<32x256xf32>, vector<32x256xf32>, vector<32x256xf32>, vector<32x256xf32>, vector<32x256xf32>, vector<32x256xf32> -> vector<288x256xf32>
    %11 = arith.truncf %10 : vector<288x256xf32> to vector<288x256xbf16>
    %c0_3 = arith.constant 0 : index
    %c0_4 = arith.constant 0 : index
    %c0_5 = arith.constant 0 : index
    %12 = vector.load %arg3[%c0_3, %c0_4, %c0_5] : memref<10x32x288xbf16, #tpu.memory_space<vmem>>, vector<1x32x288xbf16>
    %13 = vector.shape_cast %12 : vector<1x32x288xbf16> to vector<32x288xbf16>
    %cst = arith.constant dense<0.000000e+00> : vector<32x256xf32>
    %14 = tpu.matmul %13, %11, %cst {dimension_numbers = #tpu.dot_dimension_numbers<[1], [0], [0], [1], [0, 0, 1, 1], [], []>} : vector<32x288xbf16>, vector<288x256xbf16>, vector<32x256xf32> -> vector<32x256xf32>
    %c0_6 = arith.constant 0 : index
    %c0_7 = arith.constant 0 : index
    %c0_8 = arith.constant 0 : index
    %15 = vector.load %arg4[%c0_6, %c0_7, %c0_8] : memref<10x32x1xf32, #tpu.memory_space<vmem>>, vector<1x32x1xf32>
    %16 = vector.shape_cast %15 : vector<1x32x1xf32> to vector<32x1xf32>
    %17 = vector.broadcast %16 : vector<32x1xf32> to vector<32x256xf32>
    %18 = arith.addf %14, %17 : vector<32x256xf32>
    %cst_9 = arith.constant 0.000000e+00 : f32
    %19 = vector.broadcast %cst_9 : f32 to vector<32x256xf32>
    %20 = arith.maximumf %18, %19 : vector<32x256xf32>
    %21 = vector.broadcast %0 : vector<1x256xf32> to vector<32x256xf32>
    %22 = arith.mulf %20, %21 : vector<32x256xf32>
    %c11_i32_10 = arith.constant 11 : i32
    %23 = tpu.dynamic_rotate %22 by %c11_i32_10 dim 1 : vector<32x256xf32>, i32 -> vector<32x256xf32>
    %c10_i32_11 = arith.constant 10 : i32
    %24 = tpu.dynamic_rotate %22 by %c10_i32_11 dim 1 : vector<32x256xf32>, i32 -> vector<32x256xf32>
    %c9_i32_12 = arith.constant 9 : i32
    %25 = tpu.dynamic_rotate %22 by %c9_i32_12 dim 1 : vector<32x256xf32>, i32 -> vector<32x256xf32>
    %c1_i32_13 = arith.constant 1 : i32
    %26 = tpu.dynamic_rotate %22 by %c1_i32_13 dim 1 : vector<32x256xf32>, i32 -> vector<32x256xf32>
    %c255_i32_14 = arith.constant 255 : i32
    %27 = tpu.dynamic_rotate %22 by %c255_i32_14 dim 1 : vector<32x256xf32>, i32 -> vector<32x256xf32>
    %c247_i32_15 = arith.constant 247 : i32
    %28 = tpu.dynamic_rotate %22 by %c247_i32_15 dim 1 : vector<32x256xf32>, i32 -> vector<32x256xf32>
    %c246_i32_16 = arith.constant 246 : i32
    %29 = tpu.dynamic_rotate %22 by %c246_i32_16 dim 1 : vector<32x256xf32>, i32 -> vector<32x256xf32>
    %c245_i32_17 = arith.constant 245 : i32
    %30 = tpu.dynamic_rotate %22 by %c245_i32_17 dim 1 : vector<32x256xf32>, i32 -> vector<32x256xf32>
    %31 = tpu.concatenate %23, %24, %25, %26, %22, %27, %28, %29, %30 in 0 : vector<32x256xf32>, vector<32x256xf32>, vector<32x256xf32>, vector<32x256xf32>, vector<32x256xf32>, vector<32x256xf32>, vector<32x256xf32>, vector<32x256xf32>, vector<32x256xf32> -> vector<288x256xf32>
    %32 = arith.truncf %31 : vector<288x256xf32> to vector<288x256xbf16>
    %c1 = arith.constant 1 : index
    %c0_18 = arith.constant 0 : index
    %c0_19 = arith.constant 0 : index
    %33 = vector.load %arg3[%c1, %c0_18, %c0_19] : memref<10x32x288xbf16, #tpu.memory_space<vmem>>, vector<1x32x288xbf16>
    %34 = vector.shape_cast %33 : vector<1x32x288xbf16> to vector<32x288xbf16>
    %cst_20 = arith.constant dense<0.000000e+00> : vector<32x256xf32>
    %35 = tpu.matmul %34, %32, %cst_20 {dimension_numbers = #tpu.dot_dimension_numbers<[1], [0], [0], [1], [0, 0, 1, 1], [], []>} : vector<32x288xbf16>, vector<288x256xbf16>, vector<32x256xf32> -> vector<32x256xf32>
    %c1_21 = arith.constant 1 : index
    %c0_22 = arith.constant 0 : index
    %c0_23 = arith.constant 0 : index
    %36 = vector.load %arg4[%c1_21, %c0_22, %c0_23] : memref<10x32x1xf32, #tpu.memory_space<vmem>>, vector<1x32x1xf32>
    %37 = vector.shape_cast %36 : vector<1x32x1xf32> to vector<32x1xf32>
    %38 = vector.broadcast %37 : vector<32x1xf32> to vector<32x256xf32>
    %39 = arith.addf %35, %38 : vector<32x256xf32>
    %40 = arith.addf %39, %1 : vector<32x256xf32>
    %cst_24 = arith.constant 0.000000e+00 : f32
    %41 = vector.broadcast %cst_24 : f32 to vector<32x256xf32>
    %42 = arith.maximumf %40, %41 : vector<32x256xf32>
    %43 = vector.broadcast %0 : vector<1x256xf32> to vector<32x256xf32>
    %44 = arith.mulf %42, %43 : vector<32x256xf32>
    %c11_i32_25 = arith.constant 11 : i32
    %45 = tpu.dynamic_rotate %44 by %c11_i32_25 dim 1 : vector<32x256xf32>, i32 -> vector<32x256xf32>
    %c10_i32_26 = arith.constant 10 : i32
    %46 = tpu.dynamic_rotate %44 by %c10_i32_26 dim 1 : vector<32x256xf32>, i32 -> vector<32x256xf32>
    %c9_i32_27 = arith.constant 9 : i32
    %47 = tpu.dynamic_rotate %44 by %c9_i32_27 dim 1 : vector<32x256xf32>, i32 -> vector<32x256xf32>
    %c1_i32_28 = arith.constant 1 : i32
    %48 = tpu.dynamic_rotate %44 by %c1_i32_28 dim 1 : vector<32x256xf32>, i32 -> vector<32x256xf32>
    %c255_i32_29 = arith.constant 255 : i32
    %49 = tpu.dynamic_rotate %44 by %c255_i32_29 dim 1 : vector<32x256xf32>, i32 -> vector<32x256xf32>
    %c247_i32_30 = arith.constant 247 : i32
    %50 = tpu.dynamic_rotate %44 by %c247_i32_30 dim 1 : vector<32x256xf32>, i32 -> vector<32x256xf32>
    %c246_i32_31 = arith.constant 246 : i32
    %51 = tpu.dynamic_rotate %44 by %c246_i32_31 dim 1 : vector<32x256xf32>, i32 -> vector<32x256xf32>
    %c245_i32_32 = arith.constant 245 : i32
    %52 = tpu.dynamic_rotate %44 by %c245_i32_32 dim 1 : vector<32x256xf32>, i32 -> vector<32x256xf32>
    %53 = tpu.concatenate %45, %46, %47, %48, %44, %49, %50, %51, %52 in 0 : vector<32x256xf32>, vector<32x256xf32>, vector<32x256xf32>, vector<32x256xf32>, vector<32x256xf32>, vector<32x256xf32>, vector<32x256xf32>, vector<32x256xf32>, vector<32x256xf32> -> vector<288x256xf32>
    %54 = arith.truncf %53 : vector<288x256xf32> to vector<288x256xbf16>
    %c2 = arith.constant 2 : index
    %c0_33 = arith.constant 0 : index
    %c0_34 = arith.constant 0 : index
    %55 = vector.load %arg3[%c2, %c0_33, %c0_34] : memref<10x32x288xbf16, #tpu.memory_space<vmem>>, vector<1x32x288xbf16>
    %56 = vector.shape_cast %55 : vector<1x32x288xbf16> to vector<32x288xbf16>
    %cst_35 = arith.constant dense<0.000000e+00> : vector<32x256xf32>
    %57 = tpu.matmul %56, %54, %cst_35 {dimension_numbers = #tpu.dot_dimension_numbers<[1], [0], [0], [1], [0, 0, 1, 1], [], []>} : vector<32x288xbf16>, vector<288x256xbf16>, vector<32x256xf32> -> vector<32x256xf32>
    %c2_36 = arith.constant 2 : index
    %c0_37 = arith.constant 0 : index
    %c0_38 = arith.constant 0 : index
    %58 = vector.load %arg4[%c2_36, %c0_37, %c0_38] : memref<10x32x1xf32, #tpu.memory_space<vmem>>, vector<1x32x1xf32>
    %59 = vector.shape_cast %58 : vector<1x32x1xf32> to vector<32x1xf32>
    %60 = vector.broadcast %59 : vector<32x1xf32> to vector<32x256xf32>
    %61 = arith.addf %57, %60 : vector<32x256xf32>
    %cst_39 = arith.constant 0.000000e+00 : f32
    %62 = vector.broadcast %cst_39 : f32 to vector<32x256xf32>
    %63 = arith.maximumf %61, %62 : vector<32x256xf32>
    %64 = vector.broadcast %0 : vector<1x256xf32> to vector<32x256xf32>
    %65 = arith.mulf %63, %64 : vector<32x256xf32>
    %c11_i32_40 = arith.constant 11 : i32
    %66 = tpu.dynamic_rotate %65 by %c11_i32_40 dim 1 : vector<32x256xf32>, i32 -> vector<32x256xf32>
    %c10_i32_41 = arith.constant 10 : i32
    %67 = tpu.dynamic_rotate %65 by %c10_i32_41 dim 1 : vector<32x256xf32>, i32 -> vector<32x256xf32>
    %c9_i32_42 = arith.constant 9 : i32
    %68 = tpu.dynamic_rotate %65 by %c9_i32_42 dim 1 : vector<32x256xf32>, i32 -> vector<32x256xf32>
    %c1_i32_43 = arith.constant 1 : i32
    %69 = tpu.dynamic_rotate %65 by %c1_i32_43 dim 1 : vector<32x256xf32>, i32 -> vector<32x256xf32>
    %c255_i32_44 = arith.constant 255 : i32
    %70 = tpu.dynamic_rotate %65 by %c255_i32_44 dim 1 : vector<32x256xf32>, i32 -> vector<32x256xf32>
    %c247_i32_45 = arith.constant 247 : i32
    %71 = tpu.dynamic_rotate %65 by %c247_i32_45 dim 1 : vector<32x256xf32>, i32 -> vector<32x256xf32>
    %c246_i32_46 = arith.constant 246 : i32
    %72 = tpu.dynamic_rotate %65 by %c246_i32_46 dim 1 : vector<32x256xf32>, i32 -> vector<32x256xf32>
    %c245_i32_47 = arith.constant 245 : i32
    %73 = tpu.dynamic_rotate %65 by %c245_i32_47 dim 1 : vector<32x256xf32>, i32 -> vector<32x256xf32>
    %74 = tpu.concatenate %66, %67, %68, %69, %65, %70, %71, %72, %73 in 0 : vector<32x256xf32>, vector<32x256xf32>, vector<32x256xf32>, vector<32x256xf32>, vector<32x256xf32>, vector<32x256xf32>, vector<32x256xf32>, vector<32x256xf32>, vector<32x256xf32> -> vector<288x256xf32>
    %75 = arith.truncf %74 : vector<288x256xf32> to vector<288x256xbf16>
    %c3 = arith.constant 3 : index
    %c0_48 = arith.constant 0 : index
    %c0_49 = arith.constant 0 : index
    %76 = vector.load %arg3[%c3, %c0_48, %c0_49] : memref<10x32x288xbf16, #tpu.memory_space<vmem>>, vector<1x32x288xbf16>
    %77 = vector.shape_cast %76 : vector<1x32x288xbf16> to vector<32x288xbf16>
    %cst_50 = arith.constant dense<0.000000e+00> : vector<32x256xf32>
    %78 = tpu.matmul %77, %75, %cst_50 {dimension_numbers = #tpu.dot_dimension_numbers<[1], [0], [0], [1], [0, 0, 1, 1], [], []>} : vector<32x288xbf16>, vector<288x256xbf16>, vector<32x256xf32> -> vector<32x256xf32>
    %c3_51 = arith.constant 3 : index
    %c0_52 = arith.constant 0 : index
    %c0_53 = arith.constant 0 : index
    %79 = vector.load %arg4[%c3_51, %c0_52, %c0_53] : memref<10x32x1xf32, #tpu.memory_space<vmem>>, vector<1x32x1xf32>
    %80 = vector.shape_cast %79 : vector<1x32x1xf32> to vector<32x1xf32>
    %81 = vector.broadcast %80 : vector<32x1xf32> to vector<32x256xf32>
    %82 = arith.addf %78, %81 : vector<32x256xf32>
    %83 = arith.addf %82, %44 : vector<32x256xf32>
    %cst_54 = arith.constant 0.000000e+00 : f32
    %84 = vector.broadcast %cst_54 : f32 to vector<32x256xf32>
    %85 = arith.maximumf %83, %84 : vector<32x256xf32>
    %86 = vector.broadcast %0 : vector<1x256xf32> to vector<32x256xf32>
    %87 = arith.mulf %85, %86 : vector<32x256xf32>
    %c11_i32_55 = arith.constant 11 : i32
    %88 = tpu.dynamic_rotate %87 by %c11_i32_55 dim 1 : vector<32x256xf32>, i32 -> vector<32x256xf32>
    %c10_i32_56 = arith.constant 10 : i32
    %89 = tpu.dynamic_rotate %87 by %c10_i32_56 dim 1 : vector<32x256xf32>, i32 -> vector<32x256xf32>
    %c9_i32_57 = arith.constant 9 : i32
    %90 = tpu.dynamic_rotate %87 by %c9_i32_57 dim 1 : vector<32x256xf32>, i32 -> vector<32x256xf32>
    %c1_i32_58 = arith.constant 1 : i32
    %91 = tpu.dynamic_rotate %87 by %c1_i32_58 dim 1 : vector<32x256xf32>, i32 -> vector<32x256xf32>
    %c255_i32_59 = arith.constant 255 : i32
    %92 = tpu.dynamic_rotate %87 by %c255_i32_59 dim 1 : vector<32x256xf32>, i32 -> vector<32x256xf32>
    %c247_i32_60 = arith.constant 247 : i32
    %93 = tpu.dynamic_rotate %87 by %c247_i32_60 dim 1 : vector<32x256xf32>, i32 -> vector<32x256xf32>
    %c246_i32_61 = arith.constant 246 : i32
    %94 = tpu.dynamic_rotate %87 by %c246_i32_61 dim 1 : vector<32x256xf32>, i32 -> vector<32x256xf32>
    %c245_i32_62 = arith.constant 245 : i32
    %95 = tpu.dynamic_rotate %87 by %c245_i32_62 dim 1 : vector<32x256xf32>, i32 -> vector<32x256xf32>
    %96 = tpu.concatenate %88, %89, %90, %91, %87, %92, %93, %94, %95 in 0 : vector<32x256xf32>, vector<32x256xf32>, vector<32x256xf32>, vector<32x256xf32>, vector<32x256xf32>, vector<32x256xf32>, vector<32x256xf32>, vector<32x256xf32>, vector<32x256xf32> -> vector<288x256xf32>
    %97 = arith.truncf %96 : vector<288x256xf32> to vector<288x256xbf16>
    %c4 = arith.constant 4 : index
    %c0_63 = arith.constant 0 : index
    %c0_64 = arith.constant 0 : index
    %98 = vector.load %arg3[%c4, %c0_63, %c0_64] : memref<10x32x288xbf16, #tpu.memory_space<vmem>>, vector<1x32x288xbf16>
    %99 = vector.shape_cast %98 : vector<1x32x288xbf16> to vector<32x288xbf16>
    %cst_65 = arith.constant dense<0.000000e+00> : vector<32x256xf32>
    %100 = tpu.matmul %99, %97, %cst_65 {dimension_numbers = #tpu.dot_dimension_numbers<[1], [0], [0], [1], [0, 0, 1, 1], [], []>} : vector<32x288xbf16>, vector<288x256xbf16>, vector<32x256xf32> -> vector<32x256xf32>
    %c4_66 = arith.constant 4 : index
    %c0_67 = arith.constant 0 : index
    %c0_68 = arith.constant 0 : index
    %101 = vector.load %arg4[%c4_66, %c0_67, %c0_68] : memref<10x32x1xf32, #tpu.memory_space<vmem>>, vector<1x32x1xf32>
    %102 = vector.shape_cast %101 : vector<1x32x1xf32> to vector<32x1xf32>
    %103 = vector.broadcast %102 : vector<32x1xf32> to vector<32x256xf32>
    %104 = arith.addf %100, %103 : vector<32x256xf32>
    %cst_69 = arith.constant 0.000000e+00 : f32
    %105 = vector.broadcast %cst_69 : f32 to vector<32x256xf32>
    %106 = arith.maximumf %104, %105 : vector<32x256xf32>
    %107 = vector.broadcast %0 : vector<1x256xf32> to vector<32x256xf32>
    %108 = arith.mulf %106, %107 : vector<32x256xf32>
    %c11_i32_70 = arith.constant 11 : i32
    %109 = tpu.dynamic_rotate %108 by %c11_i32_70 dim 1 : vector<32x256xf32>, i32 -> vector<32x256xf32>
    %c10_i32_71 = arith.constant 10 : i32
    %110 = tpu.dynamic_rotate %108 by %c10_i32_71 dim 1 : vector<32x256xf32>, i32 -> vector<32x256xf32>
    %c9_i32_72 = arith.constant 9 : i32
    %111 = tpu.dynamic_rotate %108 by %c9_i32_72 dim 1 : vector<32x256xf32>, i32 -> vector<32x256xf32>
    %c1_i32_73 = arith.constant 1 : i32
    %112 = tpu.dynamic_rotate %108 by %c1_i32_73 dim 1 : vector<32x256xf32>, i32 -> vector<32x256xf32>
    %c255_i32_74 = arith.constant 255 : i32
    %113 = tpu.dynamic_rotate %108 by %c255_i32_74 dim 1 : vector<32x256xf32>, i32 -> vector<32x256xf32>
    %c247_i32_75 = arith.constant 247 : i32
    %114 = tpu.dynamic_rotate %108 by %c247_i32_75 dim 1 : vector<32x256xf32>, i32 -> vector<32x256xf32>
    %c246_i32_76 = arith.constant 246 : i32
    %115 = tpu.dynamic_rotate %108 by %c246_i32_76 dim 1 : vector<32x256xf32>, i32 -> vector<32x256xf32>
    %c245_i32_77 = arith.constant 245 : i32
    %116 = tpu.dynamic_rotate %108 by %c245_i32_77 dim 1 : vector<32x256xf32>, i32 -> vector<32x256xf32>
    %117 = tpu.concatenate %109, %110, %111, %112, %108, %113, %114, %115, %116 in 0 : vector<32x256xf32>, vector<32x256xf32>, vector<32x256xf32>, vector<32x256xf32>, vector<32x256xf32>, vector<32x256xf32>, vector<32x256xf32>, vector<32x256xf32>, vector<32x256xf32> -> vector<288x256xf32>
    %118 = arith.truncf %117 : vector<288x256xf32> to vector<288x256xbf16>
    %c5 = arith.constant 5 : index
    %c0_78 = arith.constant 0 : index
    %c0_79 = arith.constant 0 : index
    %119 = vector.load %arg3[%c5, %c0_78, %c0_79] : memref<10x32x288xbf16, #tpu.memory_space<vmem>>, vector<1x32x288xbf16>
    %120 = vector.shape_cast %119 : vector<1x32x288xbf16> to vector<32x288xbf16>
    %cst_80 = arith.constant dense<0.000000e+00> : vector<32x256xf32>
    %121 = tpu.matmul %120, %118, %cst_80 {dimension_numbers = #tpu.dot_dimension_numbers<[1], [0], [0], [1], [0, 0, 1, 1], [], []>} : vector<32x288xbf16>, vector<288x256xbf16>, vector<32x256xf32> -> vector<32x256xf32>
    %c5_81 = arith.constant 5 : index
    %c0_82 = arith.constant 0 : index
    %c0_83 = arith.constant 0 : index
    %122 = vector.load %arg4[%c5_81, %c0_82, %c0_83] : memref<10x32x1xf32, #tpu.memory_space<vmem>>, vector<1x32x1xf32>
    %123 = vector.shape_cast %122 : vector<1x32x1xf32> to vector<32x1xf32>
    %124 = vector.broadcast %123 : vector<32x1xf32> to vector<32x256xf32>
    %125 = arith.addf %121, %124 : vector<32x256xf32>
    %126 = arith.addf %125, %87 : vector<32x256xf32>
    %cst_84 = arith.constant 0.000000e+00 : f32
    %127 = vector.broadcast %cst_84 : f32 to vector<32x256xf32>
    %128 = arith.maximumf %126, %127 : vector<32x256xf32>
    %129 = vector.broadcast %0 : vector<1x256xf32> to vector<32x256xf32>
    %130 = arith.mulf %128, %129 : vector<32x256xf32>
    %c11_i32_85 = arith.constant 11 : i32
    %131 = tpu.dynamic_rotate %130 by %c11_i32_85 dim 1 : vector<32x256xf32>, i32 -> vector<32x256xf32>
    %c10_i32_86 = arith.constant 10 : i32
    %132 = tpu.dynamic_rotate %130 by %c10_i32_86 dim 1 : vector<32x256xf32>, i32 -> vector<32x256xf32>
    %c9_i32_87 = arith.constant 9 : i32
    %133 = tpu.dynamic_rotate %130 by %c9_i32_87 dim 1 : vector<32x256xf32>, i32 -> vector<32x256xf32>
    %c1_i32_88 = arith.constant 1 : i32
    %134 = tpu.dynamic_rotate %130 by %c1_i32_88 dim 1 : vector<32x256xf32>, i32 -> vector<32x256xf32>
    %c255_i32_89 = arith.constant 255 : i32
    %135 = tpu.dynamic_rotate %130 by %c255_i32_89 dim 1 : vector<32x256xf32>, i32 -> vector<32x256xf32>
    %c247_i32_90 = arith.constant 247 : i32
    %136 = tpu.dynamic_rotate %130 by %c247_i32_90 dim 1 : vector<32x256xf32>, i32 -> vector<32x256xf32>
    %c246_i32_91 = arith.constant 246 : i32
    %137 = tpu.dynamic_rotate %130 by %c246_i32_91 dim 1 : vector<32x256xf32>, i32 -> vector<32x256xf32>
    %c245_i32_92 = arith.constant 245 : i32
    %138 = tpu.dynamic_rotate %130 by %c245_i32_92 dim 1 : vector<32x256xf32>, i32 -> vector<32x256xf32>
    %139 = tpu.concatenate %131, %132, %133, %134, %130, %135, %136, %137, %138 in 0 : vector<32x256xf32>, vector<32x256xf32>, vector<32x256xf32>, vector<32x256xf32>, vector<32x256xf32>, vector<32x256xf32>, vector<32x256xf32>, vector<32x256xf32>, vector<32x256xf32> -> vector<288x256xf32>
    %140 = arith.truncf %139 : vector<288x256xf32> to vector<288x256xbf16>
    %c6 = arith.constant 6 : index
    %c0_93 = arith.constant 0 : index
    %c0_94 = arith.constant 0 : index
    %141 = vector.load %arg3[%c6, %c0_93, %c0_94] : memref<10x32x288xbf16, #tpu.memory_space<vmem>>, vector<1x32x288xbf16>
    %142 = vector.shape_cast %141 : vector<1x32x288xbf16> to vector<32x288xbf16>
    %cst_95 = arith.constant dense<0.000000e+00> : vector<32x256xf32>
    %143 = tpu.matmul %142, %140, %cst_95 {dimension_numbers = #tpu.dot_dimension_numbers<[1], [0], [0], [1], [0, 0, 1, 1], [], []>} : vector<32x288xbf16>, vector<288x256xbf16>, vector<32x256xf32> -> vector<32x256xf32>
    %c6_96 = arith.constant 6 : index
    %c0_97 = arith.constant 0 : index
    %c0_98 = arith.constant 0 : index
    %144 = vector.load %arg4[%c6_96, %c0_97, %c0_98] : memref<10x32x1xf32, #tpu.memory_space<vmem>>, vector<1x32x1xf32>
    %145 = vector.shape_cast %144 : vector<1x32x1xf32> to vector<32x1xf32>
    %146 = vector.broadcast %145 : vector<32x1xf32> to vector<32x256xf32>
    %147 = arith.addf %143, %146 : vector<32x256xf32>
    %cst_99 = arith.constant 0.000000e+00 : f32
    %148 = vector.broadcast %cst_99 : f32 to vector<32x256xf32>
    %149 = arith.maximumf %147, %148 : vector<32x256xf32>
    %150 = vector.broadcast %0 : vector<1x256xf32> to vector<32x256xf32>
    %151 = arith.mulf %149, %150 : vector<32x256xf32>
    %c11_i32_100 = arith.constant 11 : i32
    %152 = tpu.dynamic_rotate %151 by %c11_i32_100 dim 1 : vector<32x256xf32>, i32 -> vector<32x256xf32>
    %c10_i32_101 = arith.constant 10 : i32
    %153 = tpu.dynamic_rotate %151 by %c10_i32_101 dim 1 : vector<32x256xf32>, i32 -> vector<32x256xf32>
    %c9_i32_102 = arith.constant 9 : i32
    %154 = tpu.dynamic_rotate %151 by %c9_i32_102 dim 1 : vector<32x256xf32>, i32 -> vector<32x256xf32>
    %c1_i32_103 = arith.constant 1 : i32
    %155 = tpu.dynamic_rotate %151 by %c1_i32_103 dim 1 : vector<32x256xf32>, i32 -> vector<32x256xf32>
    %c255_i32_104 = arith.constant 255 : i32
    %156 = tpu.dynamic_rotate %151 by %c255_i32_104 dim 1 : vector<32x256xf32>, i32 -> vector<32x256xf32>
    %c247_i32_105 = arith.constant 247 : i32
    %157 = tpu.dynamic_rotate %151 by %c247_i32_105 dim 1 : vector<32x256xf32>, i32 -> vector<32x256xf32>
    %c246_i32_106 = arith.constant 246 : i32
    %158 = tpu.dynamic_rotate %151 by %c246_i32_106 dim 1 : vector<32x256xf32>, i32 -> vector<32x256xf32>
    %c245_i32_107 = arith.constant 245 : i32
    %159 = tpu.dynamic_rotate %151 by %c245_i32_107 dim 1 : vector<32x256xf32>, i32 -> vector<32x256xf32>
    %160 = tpu.concatenate %152, %153, %154, %155, %151, %156, %157, %158, %159 in 0 : vector<32x256xf32>, vector<32x256xf32>, vector<32x256xf32>, vector<32x256xf32>, vector<32x256xf32>, vector<32x256xf32>, vector<32x256xf32>, vector<32x256xf32>, vector<32x256xf32> -> vector<288x256xf32>
    %161 = arith.truncf %160 : vector<288x256xf32> to vector<288x256xbf16>
    %c7 = arith.constant 7 : index
    %c0_108 = arith.constant 0 : index
    %c0_109 = arith.constant 0 : index
    %162 = vector.load %arg3[%c7, %c0_108, %c0_109] : memref<10x32x288xbf16, #tpu.memory_space<vmem>>, vector<1x32x288xbf16>
    %163 = vector.shape_cast %162 : vector<1x32x288xbf16> to vector<32x288xbf16>
    %cst_110 = arith.constant dense<0.000000e+00> : vector<32x256xf32>
    %164 = tpu.matmul %163, %161, %cst_110 {dimension_numbers = #tpu.dot_dimension_numbers<[1], [0], [0], [1], [0, 0, 1, 1], [], []>} : vector<32x288xbf16>, vector<288x256xbf16>, vector<32x256xf32> -> vector<32x256xf32>
    %c7_111 = arith.constant 7 : index
    %c0_112 = arith.constant 0 : index
    %c0_113 = arith.constant 0 : index
    %165 = vector.load %arg4[%c7_111, %c0_112, %c0_113] : memref<10x32x1xf32, #tpu.memory_space<vmem>>, vector<1x32x1xf32>
    %166 = vector.shape_cast %165 : vector<1x32x1xf32> to vector<32x1xf32>
    %167 = vector.broadcast %166 : vector<32x1xf32> to vector<32x256xf32>
    %168 = arith.addf %164, %167 : vector<32x256xf32>
    %169 = arith.addf %168, %130 : vector<32x256xf32>
    %cst_114 = arith.constant 0.000000e+00 : f32
    %170 = vector.broadcast %cst_114 : f32 to vector<32x256xf32>
    %171 = arith.maximumf %169, %170 : vector<32x256xf32>
    %172 = vector.broadcast %0 : vector<1x256xf32> to vector<32x256xf32>
    %173 = arith.mulf %171, %172 : vector<32x256xf32>
    %c11_i32_115 = arith.constant 11 : i32
    %174 = tpu.dynamic_rotate %173 by %c11_i32_115 dim 1 : vector<32x256xf32>, i32 -> vector<32x256xf32>
    %c10_i32_116 = arith.constant 10 : i32
    %175 = tpu.dynamic_rotate %173 by %c10_i32_116 dim 1 : vector<32x256xf32>, i32 -> vector<32x256xf32>
    %c9_i32_117 = arith.constant 9 : i32
    %176 = tpu.dynamic_rotate %173 by %c9_i32_117 dim 1 : vector<32x256xf32>, i32 -> vector<32x256xf32>
    %c1_i32_118 = arith.constant 1 : i32
    %177 = tpu.dynamic_rotate %173 by %c1_i32_118 dim 1 : vector<32x256xf32>, i32 -> vector<32x256xf32>
    %c255_i32_119 = arith.constant 255 : i32
    %178 = tpu.dynamic_rotate %173 by %c255_i32_119 dim 1 : vector<32x256xf32>, i32 -> vector<32x256xf32>
    %c247_i32_120 = arith.constant 247 : i32
    %179 = tpu.dynamic_rotate %173 by %c247_i32_120 dim 1 : vector<32x256xf32>, i32 -> vector<32x256xf32>
    %c246_i32_121 = arith.constant 246 : i32
    %180 = tpu.dynamic_rotate %173 by %c246_i32_121 dim 1 : vector<32x256xf32>, i32 -> vector<32x256xf32>
    %c245_i32_122 = arith.constant 245 : i32
    %181 = tpu.dynamic_rotate %173 by %c245_i32_122 dim 1 : vector<32x256xf32>, i32 -> vector<32x256xf32>
    %182 = tpu.concatenate %174, %175, %176, %177, %173, %178, %179, %180, %181 in 0 : vector<32x256xf32>, vector<32x256xf32>, vector<32x256xf32>, vector<32x256xf32>, vector<32x256xf32>, vector<32x256xf32>, vector<32x256xf32>, vector<32x256xf32>, vector<32x256xf32> -> vector<288x256xf32>
    %183 = arith.truncf %182 : vector<288x256xf32> to vector<288x256xbf16>
    %c8 = arith.constant 8 : index
    %c0_123 = arith.constant 0 : index
    %c0_124 = arith.constant 0 : index
    %184 = vector.load %arg3[%c8, %c0_123, %c0_124] : memref<10x32x288xbf16, #tpu.memory_space<vmem>>, vector<1x32x288xbf16>
    %185 = vector.shape_cast %184 : vector<1x32x288xbf16> to vector<32x288xbf16>
    %cst_125 = arith.constant dense<0.000000e+00> : vector<32x256xf32>
    %186 = tpu.matmul %185, %183, %cst_125 {dimension_numbers = #tpu.dot_dimension_numbers<[1], [0], [0], [1], [0, 0, 1, 1], [], []>} : vector<32x288xbf16>, vector<288x256xbf16>, vector<32x256xf32> -> vector<32x256xf32>
    %c8_126 = arith.constant 8 : index
    %c0_127 = arith.constant 0 : index
    %c0_128 = arith.constant 0 : index
    %187 = vector.load %arg4[%c8_126, %c0_127, %c0_128] : memref<10x32x1xf32, #tpu.memory_space<vmem>>, vector<1x32x1xf32>
    %188 = vector.shape_cast %187 : vector<1x32x1xf32> to vector<32x1xf32>
    %189 = vector.broadcast %188 : vector<32x1xf32> to vector<32x256xf32>
    %190 = arith.addf %186, %189 : vector<32x256xf32>
    %cst_129 = arith.constant 0.000000e+00 : f32
    %191 = vector.broadcast %cst_129 : f32 to vector<32x256xf32>
    %192 = arith.maximumf %190, %191 : vector<32x256xf32>
    %193 = vector.broadcast %0 : vector<1x256xf32> to vector<32x256xf32>
    %194 = arith.mulf %192, %193 : vector<32x256xf32>
    %c11_i32_130 = arith.constant 11 : i32
    %195 = tpu.dynamic_rotate %194 by %c11_i32_130 dim 1 : vector<32x256xf32>, i32 -> vector<32x256xf32>
    %c10_i32_131 = arith.constant 10 : i32
    %196 = tpu.dynamic_rotate %194 by %c10_i32_131 dim 1 : vector<32x256xf32>, i32 -> vector<32x256xf32>
    %c9_i32_132 = arith.constant 9 : i32
    %197 = tpu.dynamic_rotate %194 by %c9_i32_132 dim 1 : vector<32x256xf32>, i32 -> vector<32x256xf32>
    %c1_i32_133 = arith.constant 1 : i32
    %198 = tpu.dynamic_rotate %194 by %c1_i32_133 dim 1 : vector<32x256xf32>, i32 -> vector<32x256xf32>
    %c255_i32_134 = arith.constant 255 : i32
    %199 = tpu.dynamic_rotate %194 by %c255_i32_134 dim 1 : vector<32x256xf32>, i32 -> vector<32x256xf32>
    %c247_i32_135 = arith.constant 247 : i32
    %200 = tpu.dynamic_rotate %194 by %c247_i32_135 dim 1 : vector<32x256xf32>, i32 -> vector<32x256xf32>
    %c246_i32_136 = arith.constant 246 : i32
    %201 = tpu.dynamic_rotate %194 by %c246_i32_136 dim 1 : vector<32x256xf32>, i32 -> vector<32x256xf32>
    %c245_i32_137 = arith.constant 245 : i32
    %202 = tpu.dynamic_rotate %194 by %c245_i32_137 dim 1 : vector<32x256xf32>, i32 -> vector<32x256xf32>
    %203 = tpu.concatenate %195, %196, %197, %198, %194, %199, %200, %201, %202 in 0 : vector<32x256xf32>, vector<32x256xf32>, vector<32x256xf32>, vector<32x256xf32>, vector<32x256xf32>, vector<32x256xf32>, vector<32x256xf32>, vector<32x256xf32>, vector<32x256xf32> -> vector<288x256xf32>
    %204 = arith.truncf %203 : vector<288x256xf32> to vector<288x256xbf16>
    %c9 = arith.constant 9 : index
    %c0_138 = arith.constant 0 : index
    %c0_139 = arith.constant 0 : index
    %205 = vector.load %arg3[%c9, %c0_138, %c0_139] : memref<10x32x288xbf16, #tpu.memory_space<vmem>>, vector<1x32x288xbf16>
    %206 = vector.shape_cast %205 : vector<1x32x288xbf16> to vector<32x288xbf16>
    %cst_140 = arith.constant dense<0.000000e+00> : vector<32x256xf32>
    %207 = tpu.matmul %206, %204, %cst_140 {dimension_numbers = #tpu.dot_dimension_numbers<[1], [0], [0], [1], [0, 0, 1, 1], [], []>} : vector<32x288xbf16>, vector<288x256xbf16>, vector<32x256xf32> -> vector<32x256xf32>
    %c9_141 = arith.constant 9 : index
    %c0_142 = arith.constant 0 : index
    %c0_143 = arith.constant 0 : index
    %208 = vector.load %arg4[%c9_141, %c0_142, %c0_143] : memref<10x32x1xf32, #tpu.memory_space<vmem>>, vector<1x32x1xf32>
    %209 = vector.shape_cast %208 : vector<1x32x1xf32> to vector<32x1xf32>
    %210 = vector.broadcast %209 : vector<32x1xf32> to vector<32x256xf32>
    %211 = arith.addf %207, %210 : vector<32x256xf32>
    %212 = arith.addf %211, %173 : vector<32x256xf32>
    %cst_144 = arith.constant 0.000000e+00 : f32
    %213 = vector.broadcast %cst_144 : f32 to vector<32x256xf32>
    %214 = arith.maximumf %212, %213 : vector<32x256xf32>
    %215 = vector.broadcast %0 : vector<1x256xf32> to vector<32x256xf32>
    %216 = arith.mulf %214, %215 : vector<32x256xf32>
    %c0_145 = arith.constant 0 : index
    %c0_146 = arith.constant 0 : index
    %217 = vector.load %arg2[%c0_145, %c0_146] : memref<256x128xf32, #tpu.memory_space<vmem>>, vector<256x128xf32>
    %cst_147 = arith.constant dense<0.000000e+00> : vector<32x128xf32>
    %218 = tpu.matmul %216, %217, %cst_147 {dimension_numbers = #tpu.dot_dimension_numbers<[1], [0], [0], [1], [0, 0, 1, 1], [], []>} : vector<32x256xf32>, vector<256x128xf32>, vector<32x128xf32> -> vector<32x128xf32>
    %c0_148 = arith.constant 0 : index
    %c0_149 = arith.constant 0 : index
    %219 = vector.load %arg5[%c0_148, %c0_149] : memref<8x32xf32, #tpu.memory_space<vmem>>, vector<8x32xf32>
    %cst_150 = arith.constant dense<0.000000e+00> : vector<8x128xf32>
    %220 = tpu.matmul %219, %218, %cst_150 {dimension_numbers = #tpu.dot_dimension_numbers<[1], [0], [0], [1], [0, 0, 1, 1], [], []>} : vector<8x32xf32>, vector<32x128xf32>, vector<8x128xf32> -> vector<8x128xf32>
    %c0_151 = arith.constant 0 : index
    %c0_152 = arith.constant 0 : index
    %221 = vector.load %arg6[%c0_151, %c0_152] : memref<8x1xf32, #tpu.memory_space<vmem>>, vector<8x1xf32>
    %222 = vector.broadcast %221 : vector<8x1xf32> to vector<8x128xf32>
    %223 = arith.addf %220, %222 : vector<8x128xf32>
    %cst_153 = arith.constant 0.000000e+00 : f32
    %224 = vector.broadcast %cst_153 : f32 to vector<8x128xf32>
    %225 = arith.maximumf %223, %224 : vector<8x128xf32>
    %226 = vector.extract_strided_slice %225 {offsets = [0, 0], sizes = [8, 64], strides = [1, 1]} : vector<8x128xf32> to vector<8x64xf32>
    %cst_154 = arith.constant dense<0xFF800000> : vector<8xf32>
    %227 = vector.multi_reduction <maximumf>, %226, %cst_154 [1] : vector<8x64xf32> to vector<8xf32>
    %228 = vector.shape_cast %227 : vector<8xf32> to vector<8x1xf32>
    %cst_155 = arith.constant dense<0xFF800000> : vector<1xf32>
    %229 = vector.multi_reduction <maximumf>, %228, %cst_155 [0] : vector<8x1xf32> to vector<1xf32>
    %230 = vector.shape_cast %229 : vector<1xf32> to vector<1x1xf32>
    %231 = vector.broadcast %230 : vector<1x1xf32> to vector<8x64xf32>
    %232 = arith.subf %226, %231 : vector<8x64xf32>
    %233 = math.exp %232 : vector<8x64xf32>
    %cst_156 = arith.constant dense<0.000000e+00> : vector<8xf32>
    %234 = vector.multi_reduction <add>, %233, %cst_156 [1] : vector<8x64xf32> to vector<8xf32>
    %235 = vector.shape_cast %234 : vector<8xf32> to vector<8x1xf32>
    %cst_157 = arith.constant dense<0.000000e+00> : vector<1xf32>
    %236 = vector.multi_reduction <add>, %235, %cst_157 [0] : vector<8x1xf32> to vector<1xf32>
    %237 = vector.shape_cast %236 : vector<1xf32> to vector<1x1xf32>
    %238 = vector.broadcast %237 : vector<1x1xf32> to vector<8x64xf32>
    %239 = arith.divf %233, %238 : vector<8x64xf32>
    %240 = vector.extract_strided_slice %225 {offsets = [0, 64], sizes = [8, 64], strides = [1, 1]} : vector<8x128xf32> to vector<8x64xf32>
    %cst_158 = arith.constant dense<0xFF800000> : vector<8xf32>
    %241 = vector.multi_reduction <maximumf>, %240, %cst_158 [1] : vector<8x64xf32> to vector<8xf32>
    %242 = vector.shape_cast %241 : vector<8xf32> to vector<8x1xf32>
    %cst_159 = arith.constant dense<0xFF800000> : vector<1xf32>
    %243 = vector.multi_reduction <maximumf>, %242, %cst_159 [0] : vector<8x1xf32> to vector<1xf32>
    %244 = vector.shape_cast %243 : vector<1xf32> to vector<1x1xf32>
    %245 = vector.broadcast %244 : vector<1x1xf32> to vector<8x64xf32>
    %246 = arith.subf %240, %245 : vector<8x64xf32>
    %247 = math.exp %246 : vector<8x64xf32>
    %cst_160 = arith.constant dense<0.000000e+00> : vector<8xf32>
    %248 = vector.multi_reduction <add>, %247, %cst_160 [1] : vector<8x64xf32> to vector<8xf32>
    %249 = vector.shape_cast %248 : vector<8xf32> to vector<8x1xf32>
    %cst_161 = arith.constant dense<0.000000e+00> : vector<1xf32>
    %250 = vector.multi_reduction <add>, %249, %cst_161 [0] : vector<8x1xf32> to vector<1xf32>
    %251 = vector.shape_cast %250 : vector<1xf32> to vector<1x1xf32>
    %252 = vector.broadcast %251 : vector<1x1xf32> to vector<8x64xf32>
    %253 = arith.divf %247, %252 : vector<8x64xf32>
    %254 = tpu.concatenate %239, %253 in 0 : vector<8x64xf32>, vector<8x64xf32> -> vector<16x64xf32>
    %c0_162 = arith.constant 0 : index
    %c0_163 = arith.constant 0 : index
    %255 = vector.load %arg13[%c0_162, %c0_163] : memref<16x64xf32, #tpu.memory_space<vmem>>, vector<16x64xf32>
    tpu.vector_store %arg13[%c0_162, %c0_163], %254 {strides = array<i32>} : memref<16x64xf32, #tpu.memory_space<vmem>>, vector<16x64xf32>,
    %c0_164 = arith.constant 0 : index
    %c0_165 = arith.constant 0 : index
    %256 = vector.load %arg7[%c0_164, %c0_165] : memref<2x32xf32, #tpu.memory_space<vmem>>, vector<2x32xf32>
    %cst_166 = arith.constant dense<0.000000e+00> : vector<2x128xf32>
    %257 = tpu.matmul %256, %218, %cst_166 {dimension_numbers = #tpu.dot_dimension_numbers<[1], [0], [0], [1], [0, 0, 1, 1], [], []>} : vector<2x32xf32>, vector<32x128xf32>, vector<2x128xf32> -> vector<2x128xf32>
    %c0_167 = arith.constant 0 : index
    %c0_168 = arith.constant 0 : index
    %258 = vector.load %arg8[%c0_167, %c0_168] : memref<2x1xf32, #tpu.memory_space<vmem>>, vector<2x1xf32>
    %259 = vector.broadcast %258 : vector<2x1xf32> to vector<2x128xf32>
    %260 = arith.addf %257, %259 : vector<2x128xf32>
    %cst_169 = arith.constant 0.000000e+00 : f32
    %261 = vector.broadcast %cst_169 : f32 to vector<2x128xf32>
    %262 = arith.maximumf %260, %261 : vector<2x128xf32>
    %263 = vector.extract_strided_slice %262 {offsets = [0, 0], sizes = [1, 64], strides = [1, 1]} : vector<2x128xf32> to vector<1x64xf32>
    %264 = vector.extract_strided_slice %262 {offsets = [1, 0], sizes = [1, 64], strides = [1, 1]} : vector<2x128xf32> to vector<1x64xf32>
    %265 = tpu.concatenate %263, %264 in 1 : vector<1x64xf32>, vector<1x64xf32> -> vector<1x128xf32>
    %266 = vector.extract_strided_slice %262 {offsets = [0, 64], sizes = [1, 64], strides = [1, 1]} : vector<2x128xf32> to vector<1x64xf32>
    %267 = vector.extract_strided_slice %262 {offsets = [1, 64], sizes = [1, 64], strides = [1, 1]} : vector<2x128xf32> to vector<1x64xf32>
    %268 = tpu.concatenate %266, %267 in 1 : vector<1x64xf32>, vector<1x64xf32> -> vector<1x128xf32>
    %269 = tpu.concatenate %265, %268 in 0 : vector<1x128xf32>, vector<1x128xf32> -> vector<2x128xf32>
    %c0_170 = arith.constant 0 : index
    %c0_171 = arith.constant 0 : index
    %270 = vector.load %arg9[%c0_170, %c0_171] : memref<128x8xf32, #tpu.memory_space<vmem>>, vector<128x8xf32>
    %cst_172 = arith.constant dense<0.000000e+00> : vector<2x8xf32>
    %271 = tpu.matmul %269, %270, %cst_172 {dimension_numbers = #tpu.dot_dimension_numbers<[1], [0], [0], [1], [0, 0, 1, 1], [], []>} : vector<2x128xf32>, vector<128x8xf32>, vector<2x8xf32> -> vector<2x8xf32>
    %c0_173 = arith.constant 0 : index
    %c0_174 = arith.constant 0 : index
    %272 = vector.load %arg10[%c0_173, %c0_174] : memref<1x8xf32, #tpu.memory_space<vmem>>, vector<1x8xf32>
    %273 = vector.broadcast %272 : vector<1x8xf32> to vector<2x8xf32>
    %274 = arith.addf %271, %273 : vector<2x8xf32>
    %cst_175 = arith.constant 0.000000e+00 : f32
    %275 = vector.broadcast %cst_175 : f32 to vector<2x8xf32>
    %276 = arith.maximumf %274, %275 : vector<2x8xf32>
    %c0_176 = arith.constant 0 : index
    %c0_177 = arith.constant 0 : index
    %277 = vector.load %arg11[%c0_176, %c0_177] : memref<8x1xf32, #tpu.memory_space<vmem>>, vector<8x1xf32>
    %cst_178 = arith.constant dense<0.000000e+00> : vector<2x1xf32>
    %278 = tpu.matmul %276, %277, %cst_178 {dimension_numbers = #tpu.dot_dimension_numbers<[1], [0], [0], [1], [0, 0, 1, 1], [], []>} : vector<2x8xf32>, vector<8x1xf32>, vector<2x1xf32> -> vector<2x1xf32>
    %c0_179 = arith.constant 0 : index
    %c0_180 = arith.constant 0 : index
    %279 = vector.load %arg12[%c0_179, %c0_180] : memref<1x1xf32, #tpu.memory_space<vmem>>, vector<1x1xf32>
    %280 = vector.broadcast %279 : vector<1x1xf32> to vector<2x1xf32>
    %281 = arith.addf %278, %280 : vector<2x1xf32>
    %282 = math.tanh %281 : vector<2x1xf32>
    %c0_181 = arith.constant 0 : index
    %c0_182 = arith.constant 0 : index
    %283 = vector.load %arg14[%c0_181, %c0_182] : memref<2x1xf32, #tpu.memory_space<vmem>>, vector<2x1xf32>
    tpu.vector_store %arg14[%c0_181, %c0_182], %282 {strides = array<i32>} : memref<2x1xf32, #tpu.memory_space<vmem>>, vector<2x1xf32>,
    return
  }
}

</mosaic_0001>

<llo_original>
// kernel: predict_net_forward.1
$region0: #{predict_net_forward.1}
  #allocation0 [shape = 'u32[]', space=smem, size = 0x4, offset = 0x4, fixed_abs, tag = 'smem constant byte address 0x4 - core index']
  #allocation1 [shape = 'u32[144,128]{1,0:T(1,128)}', space=vmem, size = 0x12000, scoped, tag = 'internal scratch']
  #allocation2 [shape = 'f32[1,1]{1,0:T(1,128)S(1)}', space=vmem, size = 0x200, scoped, tag = 'scoped memory for predict_net_forward.1']
  %s0 = inlined_call_operand.vmem [shape: f32[32,256], index: 0, kind: input, shape index: {}]
  %s1 = inlined_call_operand.vmem [shape: f32[1,256], index: 1, kind: input, shape index: {}]
  %s2 = inlined_call_operand.vmem [shape: f32[256,128], index: 2, kind: input, shape index: {}]
  %s3 = inlined_call_operand.vmem [shape: bf16[10,32,288], index: 3, kind: input, shape index: {}]
  %s4 = inlined_call_operand.vmem [shape: f32[10,32,1], index: 4, kind: input, shape index: {}]
  %s5 = inlined_call_operand.vmem [shape: f32[8,32], index: 5, kind: input, shape index: {}]
  %s6 = inlined_call_operand.vmem [shape: f32[8,1], index: 6, kind: input, shape index: {}]
  %s7 = inlined_call_operand.vmem [shape: f32[2,32], index: 7, kind: input, shape index: {}]
  %s8 = inlined_call_operand.vmem [shape: f32[2,1], index: 8, kind: input, shape index: {}]
  %s9 = inlined_call_operand.vmem [shape: f32[128,8], index: 9, kind: input, shape index: {}]
  %s10 = inlined_call_operand.vmem [shape: f32[1,8], index: 10, kind: input, shape index: {}]
  %s11 = inlined_call_operand.vmem [shape: f32[8,1], index: 11, kind: input, shape index: {}]
  %s12 = inlined_call_operand.<no memory space> [shape: f32[1,1], index: 12, kind: input, shape index: {}]
  %s13 = inlined_call_operand.vmem [shape: f32[16,64], index: 13, kind: output, shape index: {0}]
  %s14 = inlined_call_operand.vmem [shape: f32[2,1], index: 14, kind: output, shape index: {1}]
  %15 = xla_tuple %s13, %s14
  %s16 = sld [smem:[#allocation0]]
  $region70: #{predict_net_forward.1} parent=0
    _
  %s18 = ssub.s32 1, %s16
  %s19 = scalar_select 0, %s18, %s16
  %v20 = vstv %s12
  %21 = vst [vmem:[#allocation2] sm:$0x1] %v20
  // Predicated region
  $region2: #{predict_net_forward.1} parent=0 // pred_check
    _
  $region3: #{predict_net_forward.1} parent=0 // pred_check_branch
    %23 = sbr.rel (0) target = $region5
  $region4: #{predict_net_forward.1} parent=0 // pred_region
    _
  $region5: #{predict_net_forward.1} parent=0 // pred_fallthru
    _
  // Predicated region
  $region6: #{predict_net_forward.1} parent=0 // pred_check
    _
  $region7: #{predict_net_forward.1} parent=0 // pred_check_branch
    %25 = sbr.rel (0) target = $region9
  $region8: #{predict_net_forward.1} parent=0 // pred_region
    _
  $region9: #{predict_net_forward.1} parent=0 // pred_fallthru
    _
  // Predicated region
  $region10: #{predict_net_forward.1} parent=0 // pred_check
    _
  $region11: #{predict_net_forward.1} parent=0 // pred_check_branch
    %27 = sbr.rel (0) target = $region13
  $region12: #{predict_net_forward.1} parent=0 // pred_region
    _
  $region13: #{predict_net_forward.1} parent=0 // pred_fallthru
    _
  // Predicated region
  $region14: #{predict_net_forward.1} parent=0 // pred_check
    _
  $region15: #{predict_net_forward.1} parent=0 // pred_check_branch
    %29 = sbr.rel (0) target = $region17
  $region16: #{predict_net_forward.1} parent=0 // pred_region
    _
  $region17: #{predict_net_forward.1} parent=0 // pred_fallthru
    _
  // Predicated region
  $region18: #{predict_net_forward.1} parent=0 // pred_check
    _
  $region19: #{predict_net_forward.1} parent=0 // pred_check_branch
    %31 = sbr.rel (0) target = $region21
  $region20: #{predict_net_forward.1} parent=0 // pred_region
    _
  $region21: #{predict_net_forward.1} parent=0 // pred_fallthru
    _
  // Predicated region
  $region22: #{predict_net_forward.1} parent=0 // pred_check
    _
  $region23: #{predict_net_forward.1} parent=0 // pred_check_branch
    %33 = sbr.rel (0) target = $region25
  $region24: #{predict_net_forward.1} parent=0 // pred_region
    _
  $region25: #{predict_net_forward.1} parent=0 // pred_fallthru
    _
  // Predicated region
  $region26: #{predict_net_forward.1} parent=0 // pred_check
    _
  $region27: #{predict_net_forward.1} parent=0 // pred_check_branch
    %35 = sbr.rel (0) target = $region29
  $region28: #{predict_net_forward.1} parent=0 // pred_region
    _
  $region29: #{predict_net_forward.1} parent=0 // pred_fallthru
    _
  // Predicated region
  $region30: #{predict_net_forward.1} parent=0 // pred_check
    _
  $region31: #{predict_net_forward.1} parent=0 // pred_check_branch
    %37 = sbr.rel (0) target = $region33
  $region32: #{predict_net_forward.1} parent=0 // pred_region
    _
  $region33: #{predict_net_forward.1} parent=0 // pred_fallthru
    _
  // Predicated region
  $region34: #{predict_net_forward.1} parent=0 // pred_check
    _
  $region35: #{predict_net_forward.1} parent=0 // pred_check_branch
    %39 = sbr.rel (0) target = $region37
  $region36: #{predict_net_forward.1} parent=0 // pred_region
    _
  $region37: #{predict_net_forward.1} parent=0 // pred_fallthru
    _
  // Predicated region
  $region38: #{predict_net_forward.1} parent=0 // pred_check
    _
  $region39: #{predict_net_forward.1} parent=0 // pred_check_branch
    %41 = sbr.rel (0) target = $region41
  $region40: #{predict_net_forward.1} parent=0 // pred_region
    _
  $region41: #{predict_net_forward.1} parent=0 // pred_fallthru
    _
  // Predicated region
  $region42: #{predict_net_forward.1} parent=0 // pred_check
    _
  $region43: #{predict_net_forward.1} parent=0 // pred_check_branch
    %43 = sbr.rel (0) target = $region45
  $region44: #{predict_net_forward.1} parent=0 // pred_region
    _
  $region45: #{predict_net_forward.1} parent=0 // pred_fallthru
    _
  // Predicated region
  $region46: #{predict_net_forward.1} parent=0 // pred_check
    _
  $region47: #{predict_net_forward.1} parent=0 // pred_check_branch
    %45 = sbr.rel (0) target = $region49
  $region48: #{predict_net_forward.1} parent=0 // pred_region
    _
  $region49: #{predict_net_forward.1} parent=0 // pred_fallthru
    _
  // Predicated region
  $region50: #{predict_net_forward.1} parent=0 // pred_check
    _
  $region51: #{predict_net_forward.1} parent=0 // pred_check_branch
    %47 = sbr.rel (0) target = $region53
  $region52: #{predict_net_forward.1} parent=0 // pred_region
    _
  $region53: #{predict_net_forward.1} parent=0 // pred_fallthru
    _
  %v49 = vld [vmem:[%s1] sm:$0x3]
  %v50 = vld [vmem:[%s0] sm:$0xff]
  %v51 = vld [vmem:[%s0 + $0x8] sm:$0xff]
  %v52 = vld [vmem:[%s0 + $0x10] sm:$0xff]
  %v53 = vld [vmem:[%s0 + $0x18] sm:$0xff]
  %v54 = vld [vmem:[%s0 + $0x20] sm:$0xff]
  %v55 = vld [vmem:[%s0 + $0x28] sm:$0xff]
  %v56 = vld [vmem:[%s0 + $0x30] sm:$0xff]
  %v57 = vld [vmem:[%s0 + $0x38] sm:$0xff]
  %58 = vrot.lane.b32.xlu0 %v50, 11
  %v59 = vpop.permute.xlu0 %58
  %60 = vrot.lane.b32.xlu0 %v52, 11
  %v61 = vpop.permute.xlu0 %60
  %62 = vrot.lane.b32.xlu0 %v54, 11
  %v63 = vpop.permute.xlu0 %62
  %64 = vrot.lane.b32.xlu0 %v56, 11
  %v65 = vpop.permute.xlu0 %64
  %66 = vrot.lane.b32.xlu0 %v51, 11
  %v67 = vpop.permute.xlu0 %66
  %68 = vrot.lane.b32.xlu0 %v53, 11
  %v69 = vpop.permute.xlu0 %68
  %70 = vrot.lane.b32.xlu0 %v55, 11
  %v71 = vpop.permute.xlu0 %70
  %72 = vrot.lane.b32.xlu0 %v57, 11
  %v73 = vpop.permute.xlu0 %72
  %v74 = vlaneseq
  %v75 = vand.u32 %v74, 127
  %vm76 = vcmp.lt.s32.totalorder %v75, 11
  %v77 = vsel %vm76, %v59, %v67
  %v78 = vsel %vm76, %v61, %v69
  %v79 = vsel %vm76, %v63, %v71
  %v80 = vsel %vm76, %v65, %v73
  %v81 = vsel %vm76, %v67, %v59
  %v82 = vsel %vm76, %v69, %v61
  %v83 = vsel %vm76, %v71, %v63
  %v84 = vsel %vm76, %v73, %v65
  %85 = vrot.lane.b32.xlu0 %v50, 10
  %v86 = vpop.permute.xlu0 %85
  %87 = vrot.lane.b32.xlu0 %v52, 10
  %v88 = vpop.permute.xlu0 %87
  %89 = vrot.lane.b32.xlu0 %v54, 10
  %v90 = vpop.permute.xlu0 %89
  %91 = vrot.lane.b32.xlu0 %v56, 10
  %v92 = vpop.permute.xlu0 %91
  %93 = vrot.lane.b32.xlu0 %v51, 10
  %v94 = vpop.permute.xlu0 %93
  %95 = vrot.lane.b32.xlu0 %v53, 10
  %v96 = vpop.permute.xlu0 %95
  %97 = vrot.lane.b32.xlu0 %v55, 10
  %v98 = vpop.permute.xlu0 %97
  %99 = vrot.lane.b32.xlu0 %v57, 10
  %v100 = vpop.permute.xlu0 %99
  %vm101 = vcmp.lt.s32.totalorder %v75, 10
  %v102 = vsel %vm101, %v86, %v94
  %v103 = vsel %vm101, %v88, %v96
  %v104 = vsel %vm101, %v90, %v98
  %v105 = vsel %vm101, %v92, %v100
  %v106 = vsel %vm101, %v94, %v86
  %v107 = vsel %vm101, %v96, %v88
  %v108 = vsel %vm101, %v98, %v90
  %v109 = vsel %vm101, %v100, %v92
  %110 = vrot.lane.b32.xlu0 %v50, 9
  %v111 = vpop.permute.xlu0 %110
  %112 = vrot.lane.b32.xlu0 %v52, 9
  %v113 = vpop.permute.xlu0 %112
  %114 = vrot.lane.b32.xlu0 %v54, 9
  %v115 = vpop.permute.xlu0 %114
  %116 = vrot.lane.b32.xlu0 %v56, 9
  %v117 = vpop.permute.xlu0 %116
  %118 = vrot.lane.b32.xlu0 %v51, 9
  %v119 = vpop.permute.xlu0 %118
  %120 = vrot.lane.b32.xlu0 %v53, 9
  %v121 = vpop.permute.xlu0 %120
  %122 = vrot.lane.b32.xlu0 %v55, 9
  %v123 = vpop.permute.xlu0 %122
  %124 = vrot.lane.b32.xlu0 %v57, 9
  %v125 = vpop.permute.xlu0 %124
  %vm126 = vcmp.lt.s32.totalorder %v75, 9
  %v127 = vsel %vm126, %v111, %v119
  %v128 = vsel %vm126, %v113, %v121
  %v129 = vsel %vm126, %v115, %v123
  %v130 = vsel %vm126, %v117, %v125
  %v131 = vsel %vm126, %v119, %v111
  %v132 = vsel %vm126, %v121, %v113
  %v133 = vsel %vm126, %v123, %v115
  %v134 = vsel %vm126, %v125, %v117
  %135 = vrot.lane.b32.xlu0 %v50, 1
  %v136 = vpop.permute.xlu0 %135
  %137 = vrot.lane.b32.xlu0 %v52, 1
  %v138 = vpop.permute.xlu0 %137
  %139 = vrot.lane.b32.xlu0 %v54, 1
  %v140 = vpop.permute.xlu0 %139
  %141 = vrot.lane.b32.xlu0 %v56, 1
  %v142 = vpop.permute.xlu0 %141
  %143 = vrot.lane.b32.xlu0 %v51, 1
  %v144 = vpop.permute.xlu0 %143
  %145 = vrot.lane.b32.xlu0 %v53, 1
  %v146 = vpop.permute.xlu0 %145
  %147 = vrot.lane.b32.xlu0 %v55, 1
  %v148 = vpop.permute.xlu0 %147
  %149 = vrot.lane.b32.xlu0 %v57, 1
  %v150 = vpop.permute.xlu0 %149
  %vm151 = vcmp.lt.s32.totalorder %v75, 1
  %v152 = vsel %vm151, %v136, %v144
  %v153 = vsel %vm151, %v138, %v146
  %v154 = vsel %vm151, %v140, %v148
  %v155 = vsel %vm151, %v142, %v150
  %v156 = vsel %vm151, %v144, %v136
  %v157 = vsel %vm151, %v146, %v138
  %v158 = vsel %vm151, %v148, %v140
  %v159 = vsel %vm151, %v150, %v142
  %160 = vrot.lane.b32.xlu0 %v50, 127
  %v161 = vpop.permute.xlu0 %160
  %162 = vrot.lane.b32.xlu0 %v52, 127
  %v163 = vpop.permute.xlu0 %162
  %164 = vrot.lane.b32.xlu0 %v54, 127
  %v165 = vpop.permute.xlu0 %164
  %166 = vrot.lane.b32.xlu0 %v56, 127
  %v167 = vpop.permute.xlu0 %166
  %168 = vrot.lane.b32.xlu0 %v51, 127
  %v169 = vpop.permute.xlu0 %168
  %170 = vrot.lane.b32.xlu0 %v53, 127
  %v171 = vpop.permute.xlu0 %170
  %172 = vrot.lane.b32.xlu0 %v55, 127
  %v173 = vpop.permute.xlu0 %172
  %174 = vrot.lane.b32.xlu0 %v57, 127
  %v175 = vpop.permute.xlu0 %174
  %vm176 = vcmp.lt.s32.totalorder %v75, 127
  %v177 = vsel %vm176, %v161, %v169
  %v178 = vsel %vm176, %v163, %v171
  %v179 = vsel %vm176, %v165, %v173
  %v180 = vsel %vm176, %v167, %v175
  %v181 = vsel %vm176, %v169, %v161
  %v182 = vsel %vm176, %v171, %v163
  %v183 = vsel %vm176, %v173, %v165
  %v184 = vsel %vm176, %v175, %v167
  %185 = vrot.lane.b32.xlu0 %v50, 119
  %v186 = vpop.permute.xlu0 %185
  %187 = vrot.lane.b32.xlu0 %v52, 119
  %v188 = vpop.permute.xlu0 %187
  %189 = vrot.lane.b32.xlu0 %v54, 119
  %v190 = vpop.permute.xlu0 %189
  %191 = vrot.lane.b32.xlu0 %v56, 119
  %v192 = vpop.permute.xlu0 %191
  %193 = vrot.lane.b32.xlu0 %v51, 119
  %v194 = vpop.permute.xlu0 %193
  %195 = vrot.lane.b32.xlu0 %v53, 119
  %v196 = vpop.permute.xlu0 %195
  %197 = vrot.lane.b32.xlu0 %v55, 119
  %v198 = vpop.permute.xlu0 %197
  %199 = vrot.lane.b32.xlu0 %v57, 119
  %v200 = vpop.permute.xlu0 %199
  %vm201 = vcmp.lt.s32.totalorder %v75, 119
  %v202 = vsel %vm201, %v186, %v194
  %v203 = vsel %vm201, %v188, %v196
  %v204 = vsel %vm201, %v190, %v198
  %v205 = vsel %vm201, %v192, %v200
  %v206 = vsel %vm201, %v194, %v186
  %v207 = vsel %vm201, %v196, %v188
  %v208 = vsel %vm201, %v198, %v190
  %v209 = vsel %vm201, %v200, %v192
  %210 = vrot.lane.b32.xlu0 %v50, 118
  %v211 = vpop.permute.xlu0 %210
  %212 = vrot.lane.b32.xlu0 %v52, 118
  %v213 = vpop.permute.xlu0 %212
  %214 = vrot.lane.b32.xlu0 %v54, 118
  %v215 = vpop.permute.xlu0 %214
  %216 = vrot.lane.b32.xlu0 %v56, 118
  %v217 = vpop.permute.xlu0 %216
  %218 = vrot.lane.b32.xlu0 %v51, 118
  %v219 = vpop.permute.xlu0 %218
  %220 = vrot.lane.b32.xlu0 %v53, 118
  %v221 = vpop.permute.xlu0 %220
  %222 = vrot.lane.b32.xlu0 %v55, 118
  %v223 = vpop.permute.xlu0 %222
  %224 = vrot.lane.b32.xlu0 %v57, 118
  %v225 = vpop.permute.xlu0 %224
  %vm226 = vcmp.lt.s32.totalorder %v75, 118
  %v227 = vsel %vm226, %v211, %v219
  %v228 = vsel %vm226, %v213, %v221
  %v229 = vsel %vm226, %v215, %v223
  %v230 = vsel %vm226, %v217, %v225
  %v231 = vsel %vm226, %v219, %v211
  %v232 = vsel %vm226, %v221, %v213
  %v233 = vsel %vm226, %v223, %v215
  %v234 = vsel %vm226, %v225, %v217
  %235 = vrot.lane.b32.xlu0 %v50, 117
  %v236 = vpop.permute.xlu0 %235
  %237 = vrot.lane.b32.xlu0 %v52, 117
  %v238 = vpop.permute.xlu0 %237
  %239 = vrot.lane.b32.xlu0 %v54, 117
  %v240 = vpop.permute.xlu0 %239
  %241 = vrot.lane.b32.xlu0 %v56, 117
  %v242 = vpop.permute.xlu0 %241
  %243 = vrot.lane.b32.xlu0 %v51, 117
  %v244 = vpop.permute.xlu0 %243
  %245 = vrot.lane.b32.xlu0 %v53, 117
  %v246 = vpop.permute.xlu0 %245
  %247 = vrot.lane.b32.xlu0 %v55, 117
  %v248 = vpop.permute.xlu0 %247
  %249 = vrot.lane.b32.xlu0 %v57, 117
  %v250 = vpop.permute.xlu0 %249
  %vm251 = vcmp.lt.s32.totalorder %v75, 117
  %v252 = vsel %vm251, %v236, %v244
  %v253 = vsel %vm251, %v238, %v246
  %v254 = vsel %vm251, %v240, %v248
  %v255 = vsel %vm251, %v242, %v250
  %v256 = vsel %vm251, %v244, %v236
  %v257 = vsel %vm251, %v246, %v238
  %v258 = vsel %vm251, %v248, %v240
  %v259 = vsel %vm251, %v250, %v242
  %v260 = vpack.c.bf16 %v82, %v81
  %v261 = vpack.c.bf16 %v78, %v77
  %v262 = vpack.c.bf16 %v84, %v83
  %v263 = vpack.c.bf16 %v80, %v79
  %v264 = vpack.c.bf16 %v107, %v106
  %v265 = vpack.c.bf16 %v103, %v102
  %v266 = vpack.c.bf16 %v109, %v108
  %v267 = vpack.c.bf16 %v105, %v104
  %v268 = vpack.c.bf16 %v132, %v131
  %v269 = vpack.c.bf16 %v128, %v127
  %v270 = vpack.c.bf16 %v134, %v133
  %v271 = vpack.c.bf16 %v130, %v129
  %v272 = vpack.c.bf16 %v157, %v156
  %v273 = vpack.c.bf16 %v153, %v152
  %v274 = vpack.c.bf16 %v159, %v158
  %v275 = vpack.c.bf16 %v155, %v154
  %v276 = vpack.c.bf16 %v52, %v50
  %v277 = vpack.c.bf16 %v53, %v51
  %v278 = vpack.c.bf16 %v56, %v54
  %v279 = vpack.c.bf16 %v57, %v55
  %v280 = vpack.c.bf16 %v178, %v177
  %v281 = vpack.c.bf16 %v182, %v181
  %v282 = vpack.c.bf16 %v180, %v179
  %v283 = vpack.c.bf16 %v184, %v183
  %v284 = vpack.c.bf16 %v203, %v202
  %v285 = vpack.c.bf16 %v207, %v206
  %v286 = vpack.c.bf16 %v205, %v204
  %v287 = vpack.c.bf16 %v209, %v208
  %v288 = vpack.c.bf16 %v228, %v227
  %v289 = vpack.c.bf16 %v232, %v231
  %v290 = vpack.c.bf16 %v230, %v229
  %v291 = vpack.c.bf16 %v234, %v233
  %v292 = vpack.c.bf16 %v253, %v252
  %v293 = vpack.c.bf16 %v257, %v256
  %v294 = vpack.c.bf16 %v255, %v254
  %v295 = vpack.c.bf16 %v259, %v258
  %v296 = vld [vmem:[%s3] sm:$0xff]
  %v297 = vld [vmem:[%s3 + $0x8] sm:$0xf]
  %v298 = vld [vmem:[%s3 + $0xc] sm:$0xff]
  %v299 = vld [vmem:[%s3 + $0x14] sm:$0xf]
  %v300 = vld [vmem:[%s3 + $0x18] sm:$0xff]
  %v301 = vld [vmem:[%s3 + $0x20] sm:$0xf]
  %v302 = vld [vmem:[%s3 + $0x24] sm:$0xff]
  %v303 = vld [vmem:[%s3 + $0x2c] sm:$0xf]
  %v304 = vld [vmem:[%s4] sm:$0xff]
  %v305 = vld [vmem:[%s4 + $0x8] sm:$0xff]
  %v306 = vld [vmem:[%s4 + $0x10] sm:$0xff]
  %v307 = vld [vmem:[%s4 + $0x18] sm:$0xff]
  %309 = vset.pattern.permute.xlu0 0
  %310 = vperm.xlu0 %309, %v304
  %v311 = vpop.permute.xlu0 %310
  %314 = vset.pattern.permute.xlu0 0
  %315 = vperm.xlu0 %314, %v305
  %v316 = vpop.permute.xlu0 %315
  %319 = vset.pattern.permute.xlu0 0
  %320 = vperm.xlu0 %319, %v306
  %v321 = vpop.permute.xlu0 %320
  %324 = vset.pattern.permute.xlu0 0
  %325 = vperm.xlu0 %324, %v307
  %v326 = vpop.permute.xlu0 %325
  %v336 = vunpack.c.l.b16 %v296
  %v337 = vunpack.c.h.b16 %v296
  %v338 = vunpack.c.l.b16 %v297
  %v339 = vunpack.c.l.b16 %v298
  %v340 = vunpack.c.h.b16 %v298
  %v341 = vunpack.c.l.b16 %v299
  %v342 = vunpack.c.l.b16 %v300
  %v343 = vunpack.c.h.b16 %v300
  %v344 = vunpack.c.l.b16 %v301
  %v345 = vunpack.c.l.b16 %v302
  %v346 = vunpack.c.h.b16 %v302
  %v347 = vunpack.c.l.b16 %v303
  %v348 = vpack.c.b16 %v339, %v336
  %v349 = vpack.c.b16 %v340, %v337
  %v350 = vpack.c.b16 %v341, %v338
  %v351 = vpack.c.b16 %v345, %v342
  %v352 = vpack.c.b16 %v346, %v343
  %v353 = vpack.c.b16 %v347, %v344
  %vm358 = vcmask 261120
  %v360 = vsel %vm358, %v350, 0
  %v363 = vsel %vm358, %v353, 0
  %365 = vmatprep.subr.bf16.mxu0 %v275
  %366 = vmatpush1.bf16.msra.mxu0 %v274
  %367 = vmatprep.subr.bf16.mxu0 %v273
  %368 = vmatpush1.bf16.msra.mxu0 %v272
  %369 = vmatprep.subr.bf16.mxu0 %v271
  %370 = vmatpush1.bf16.msra.mxu0 %v270
  %371 = vmatprep.subr.bf16.mxu0 %v269
  %372 = vmatpush1.bf16.msra.mxu0 %v268
  %373 = vmatprep.subr.bf16.mxu0 %v267
  %374 = vmatpush1.bf16.msra.mxu0 %v266
  %375 = vmatprep.subr.bf16.mxu0 %v265
  %376 = vmatpush1.bf16.msra.mxu0 %v264
  %377 = vmatprep.subr.bf16.mxu0 %v263
  %378 = vmatpush1.bf16.msra.mxu0 %v262
  %379 = vmatprep.subr.bf16.mxu0 %v261
  %380 = vmatpush1.bf16.msra.mxu0 %v260
  %381 = vmatprep.subr.bf16.mxu0 %v291
  %382 = vmatpush2.bf16.msra.mxu0 %v290
  %383 = vmatprep.subr.bf16.mxu0 %v289
  %384 = vmatpush2.bf16.msra.mxu0 %v288
  %385 = vmatprep.subr.bf16.mxu0 %v287
  %386 = vmatpush2.bf16.msra.mxu0 %v286
  %387 = vmatprep.subr.bf16.mxu0 %v285
  %388 = vmatpush2.bf16.msra.mxu0 %v284
  %389 = vmatprep.subr.bf16.mxu0 %v283
  %390 = vmatpush2.bf16.msra.mxu0 %v282
  %391 = vmatprep.subr.bf16.mxu0 %v281
  %392 = vmatpush2.bf16.msra.mxu0 %v280
  %393 = vmatprep.subr.bf16.mxu0 %v279
  %394 = vmatpush2.bf16.msra.mxu0 %v278
  %395 = vmatprep.subr.bf16.mxu0 %v277
  %396 = vmatpush2.bf16.msra.mxu0 %v276
  %397 = vmatprep.mubr.bf16.mxu0 %v349
  %398 = vmatmul.mubr.bf16.gmra.mxu0 %v348
  %v399 = vpop.f32.mrf.mxu0
  %v400 = vadd.f32 %v311, %v399
  %v401 = vpop.f32.mrf.mxu0
  %v402 = vadd.f32 %v311, %v401
  %v403 = vpop.f32.mrf.mxu0
  %v404 = vadd.f32 %v316, %v403
  %v405 = vpop.f32.mrf.mxu0
  %v406 = vadd.f32 %v316, %v405
  %407 = vmatprep.mubr.bf16.mxu0 %v352
  %408 = vmatmul.mubr.bf16.gmra.mxu0 %v351
  %v409 = vpop.f32.mrf.mxu0
  %v410 = vadd.f32 %v321, %v409
  %v411 = vpop.f32.mrf.mxu0
  %v412 = vadd.f32 %v321, %v411
  %v413 = vpop.f32.mrf.mxu0
  %v414 = vadd.f32 %v326, %v413
  %v415 = vpop.f32.mrf.mxu0
  %v416 = vadd.f32 %v326, %v415
  %417 = vdwg.mxu0
  %418 = vmatprep.subr.bf16.mxu0 0
  %419 = vmatpush1.bf16.msra.mxu0 0
  %420 = vmatprep.subr.bf16.mxu0 0
  %421 = vmatpush1.bf16.msra.mxu0 0
  %422 = vmatprep.subr.bf16.mxu0 0
  %423 = vmatpush1.bf16.msra.mxu0 0
  %424 = vmatprep.subr.bf16.mxu0 0
  %425 = vmatpush1.bf16.msra.mxu0 0
  %426 = vmatprep.subr.bf16.mxu0 0
  %427 = vmatpush1.bf16.msra.mxu0 0
  %428 = vmatprep.subr.bf16.mxu0 0
  %429 = vmatpush1.bf16.msra.mxu0 0
  %430 = vmatprep.subr.bf16.mxu0 %v295
  %431 = vmatpush1.bf16.msra.mxu0 %v294
  %432 = vmatprep.subr.bf16.mxu0 %v293
  %433 = vmatpush1.bf16.msra.mxu0 %v292
  %434 = vmatprep.subr.bf16.mxu0 0
  %435 = vmatpush2.bf16.msra.mxu0 0
  %436 = vmatprep.subr.bf16.mxu0 0
  %437 = vmatpush2.bf16.msra.mxu0 0
  %438 = vmatprep.subr.bf16.mxu0 0
  %439 = vmatpush2.bf16.msra.mxu0 0
  %440 = vmatprep.subr.bf16.mxu0 0
  %441 = vmatpush2.bf16.msra.mxu0 0
  %442 = vmatprep.subr.bf16.mxu0 0
  %443 = vmatpush2.bf16.msra.mxu0 0
  %444 = vmatprep.subr.bf16.mxu0 0
  %445 = vmatpush2.bf16.msra.mxu0 0
  %446 = vmatprep.subr.bf16.mxu0 0
  %447 = vmatpush2.bf16.msra.mxu0 0
  %448 = vmatprep.subr.bf16.mxu0 0
  %449 = vmatpush2.bf16.msra.mxu0 0
  %450 = vmatprep.mubr.bf16.mxu0 0
  %451 = vmatmul.mubr.bf16.gmra.mxu0 %v360
  %v452 = vpop.f32.mrf.mxu0
  %v453 = vadd.f32 %v400, %v452
  %v454 = vpop.f32.mrf.mxu0
  %v455 = vadd.f32 %v402, %v454
  %v456 = vpop.f32.mrf.mxu0
  %v457 = vadd.f32 %v404, %v456
  %v458 = vpop.f32.mrf.mxu0
  %v459 = vadd.f32 %v406, %v458
  %460 = vmatprep.mubr.bf16.mxu0 0
  %461 = vmatmul.mubr.bf16.gmra.mxu0 %v363
  %v462 = vpop.f32.mrf.mxu0
  %v463 = vadd.f32 %v410, %v462
  %v464 = vpop.f32.mrf.mxu0
  %v465 = vadd.f32 %v412, %v464
  %v466 = vpop.f32.mrf.mxu0
  %v467 = vadd.f32 %v414, %v466
  %v468 = vpop.f32.mrf.mxu0
  %v469 = vadd.f32 %v416, %v468
  %470 = vdwg.mxu0
  %v471 = vmax.f32 %v453, 0.0
  %v472 = vmax.f32 %v455, 0.0
  %v473 = vmax.f32 %v457, 0.0
  %v474 = vmax.f32 %v459, 0.0
  %v475 = vmax.f32 %v463, 0.0
  %v476 = vmax.f32 %v465, 0.0
  %v477 = vmax.f32 %v467, 0.0
  %v478 = vmax.f32 %v469, 0.0
  %v480 = vlaneseq
  %v481 = vshrl.u32 %v480, 7
  %v482 = vsub.s32 0, %v481
  %v483 = vrot.slane %v49, %v482
  %v484 = vlaneseq
  %v485 = vshrl.u32 %v484, 7
  %v486 = vsub.s32 1, %v485
  %v487 = vrot.slane %v49, %v486
  %v490 = vmul.f32 %v471, %v483
  %v491 = vmul.f32 %v472, %v487
  %v492 = vmul.f32 %v473, %v483
  %v493 = vmul.f32 %v474, %v487
  %v494 = vmul.f32 %v475, %v483
  %v495 = vmul.f32 %v476, %v487
  %v496 = vmul.f32 %v477, %v483
  %v497 = vmul.f32 %v478, %v487
  %498 = vrot.lane.b32.xlu0 %v490, 11
  %v499 = vpop.permute.xlu0 %498
  %500 = vrot.lane.b32.xlu0 %v492, 11
  %v501 = vpop.permute.xlu0 %500
  %502 = vrot.lane.b32.xlu0 %v494, 11
  %v503 = vpop.permute.xlu0 %502
  %504 = vrot.lane.b32.xlu0 %v496, 11
  %v505 = vpop.permute.xlu0 %504
  %506 = vrot.lane.b32.xlu0 %v491, 11
  %v507 = vpop.permute.xlu0 %506
  %508 = vrot.lane.b32.xlu0 %v493, 11
  %v509 = vpop.permute.xlu0 %508
  %510 = vrot.lane.b32.xlu0 %v495, 11
  %v511 = vpop.permute.xlu0 %510
  %512 = vrot.lane.b32.xlu0 %v497, 11
  %v513 = vpop.permute.xlu0 %512
  %v514 = vsel %vm76, %v499, %v507
  %v515 = vsel %vm76, %v501, %v509
  %v516 = vsel %vm76, %v503, %v511
  %v517 = vsel %vm76, %v505, %v513
  %v518 = vsel %vm76, %v507, %v499
  %v519 = vsel %vm76, %v509, %v501
  %v520 = vsel %vm76, %v511, %v503
  %v521 = vsel %vm76, %v513, %v505
  %522 = vrot.lane.b32.xlu0 %v490, 10
  %v523 = vpop.permute.xlu0 %522
  %524 = vrot.lane.b32.xlu0 %v492, 10
  %v525 = vpop.permute.xlu0 %524
  %526 = vrot.lane.b32.xlu0 %v494, 10
  %v527 = vpop.permute.xlu0 %526
  %528 = vrot.lane.b32.xlu0 %v496, 10
  %v529 = vpop.permute.xlu0 %528
  %530 = vrot.lane.b32.xlu0 %v491, 10
  %v531 = vpop.permute.xlu0 %530
  %532 = vrot.lane.b32.xlu0 %v493, 10
  %v533 = vpop.permute.xlu0 %532
  %534 = vrot.lane.b32.xlu0 %v495, 10
  %v535 = vpop.permute.xlu0 %534
  %536 = vrot.lane.b32.xlu0 %v497, 10
  %v537 = vpop.permute.xlu0 %536
  %v538 = vsel %vm101, %v523, %v531
  %v539 = vsel %vm101, %v525, %v533
  %v540 = vsel %vm101, %v527, %v535
  %v541 = vsel %vm101, %v529, %v537
  %v542 = vsel %vm101, %v531, %v523
  %v543 = vsel %vm101, %v533, %v525
  %v544 = vsel %vm101, %v535, %v527
  %v545 = vsel %vm101, %v537, %v529
  %546 = vrot.lane.b32.xlu0 %v490, 9
  %v547 = vpop.permute.xlu0 %546
  %548 = vrot.lane.b32.xlu0 %v492, 9
  %v549 = vpop.permute.xlu0 %548
  %550 = vrot.lane.b32.xlu0 %v494, 9
  %v551 = vpop.permute.xlu0 %550
  %552 = vrot.lane.b32.xlu0 %v496, 9
  %v553 = vpop.permute.xlu0 %552
  %554 = vrot.lane.b32.xlu0 %v491, 9
  %v555 = vpop.permute.xlu0 %554
  %556 = vrot.lane.b32.xlu0 %v493, 9
  %v557 = vpop.permute.xlu0 %556
  %558 = vrot.lane.b32.xlu0 %v495, 9
  %v559 = vpop.permute.xlu0 %558
  %560 = vrot.lane.b32.xlu0 %v497, 9
  %v561 = vpop.permute.xlu0 %560
  %v562 = vsel %vm126, %v547, %v555
  %v563 = vsel %vm126, %v549, %v557
  %v564 = vsel %vm126, %v551, %v559
  %v565 = vsel %vm126, %v553, %v561
  %v566 = vsel %vm126, %v555, %v547
  %v567 = vsel %vm126, %v557, %v549
  %v568 = vsel %vm126, %v559, %v551
  %v569 = vsel %vm126, %v561, %v553
  %570 = vrot.lane.b32.xlu0 %v490, 1
  %v571 = vpop.permute.xlu0 %570
  %572 = vrot.lane.b32.xlu0 %v492, 1
  %v573 = vpop.permute.xlu0 %572
  %574 = vrot.lane.b32.xlu0 %v494, 1
  %v575 = vpop.permute.xlu0 %574
  %576 = vrot.lane.b32.xlu0 %v496, 1
  %v577 = vpop.permute.xlu0 %576
  %578 = vrot.lane.b32.xlu0 %v491, 1
  %v579 = vpop.permute.xlu0 %578
  %580 = vrot.lane.b32.xlu0 %v493, 1
  %v581 = vpop.permute.xlu0 %580
  %582 = vrot.lane.b32.xlu0 %v495, 1
  %v583 = vpop.permute.xlu0 %582
  %584 = vrot.lane.b32.xlu0 %v497, 1
  %v585 = vpop.permute.xlu0 %584
  %v586 = vsel %vm151, %v571, %v579
  %v587 = vsel %vm151, %v573, %v581
  %v588 = vsel %vm151, %v575, %v583
  %v589 = vsel %vm151, %v577, %v585
  %v590 = vsel %vm151, %v579, %v571
  %v591 = vsel %vm151, %v581, %v573
  %v592 = vsel %vm151, %v583, %v575
  %v593 = vsel %vm151, %v585, %v577
  %594 = vrot.lane.b32.xlu0 %v490, 127
  %v595 = vpop.permute.xlu0 %594
  %596 = vrot.lane.b32.xlu0 %v492, 127
  %v597 = vpop.permute.xlu0 %596
  %598 = vrot.lane.b32.xlu0 %v494, 127
  %v599 = vpop.permute.xlu0 %598
  %600 = vrot.lane.b32.xlu0 %v496, 127
  %v601 = vpop.permute.xlu0 %600
  %602 = vrot.lane.b32.xlu0 %v491, 127
  %v603 = vpop.permute.xlu0 %602
  %604 = vrot.lane.b32.xlu0 %v493, 127
  %v605 = vpop.permute.xlu0 %604
  %606 = vrot.lane.b32.xlu0 %v495, 127
  %v607 = vpop.permute.xlu0 %606
  %608 = vrot.lane.b32.xlu0 %v497, 127
  %v609 = vpop.permute.xlu0 %608
  %v610 = vsel %vm176, %v595, %v603
  %v611 = vsel %vm176, %v597, %v605
  %v612 = vsel %vm176, %v599, %v607
  %v613 = vsel %vm176, %v601, %v609
  %v614 = vsel %vm176, %v603, %v595
  %v615 = vsel %vm176, %v605, %v597
  %v616 = vsel %vm176, %v607, %v599
  %v617 = vsel %vm176, %v609, %v601
  %618 = vrot.lane.b32.xlu0 %v490, 119
  %v619 = vpop.permute.xlu0 %618
  %620 = vrot.lane.b32.xlu0 %v492, 119
  %v621 = vpop.permute.xlu0 %620
  %622 = vrot.lane.b32.xlu0 %v494, 119
  %v623 = vpop.permute.xlu0 %622
  %624 = vrot.lane.b32.xlu0 %v496, 119
  %v625 = vpop.permute.xlu0 %624
  %626 = vrot.lane.b32.xlu0 %v491, 119
  %v627 = vpop.permute.xlu0 %626
  %628 = vrot.lane.b32.xlu0 %v493, 119
  %v629 = vpop.permute.xlu0 %628
  %630 = vrot.lane.b32.xlu0 %v495, 119
  %v631 = vpop.permute.xlu0 %630
  %632 = vrot.lane.b32.xlu0 %v497, 119
  %v633 = vpop.permute.xlu0 %632
  %v634 = vsel %vm201, %v619, %v627
  %v635 = vsel %vm201, %v621, %v629
  %v636 = vsel %vm201, %v623, %v631
  %v637 = vsel %vm201, %v625, %v633
  %v638 = vsel %vm201, %v627, %v619
  %v639 = vsel %vm201, %v629, %v621
  %v640 = vsel %vm201, %v631, %v623
  %v641 = vsel %vm201, %v633, %v625
  %642 = vrot.lane.b32.xlu0 %v490, 118
  %v643 = vpop.permute.xlu0 %642
  %644 = vrot.lane.b32.xlu0 %v492, 118
  %v645 = vpop.permute.xlu0 %644
  %646 = vrot.lane.b32.xlu0 %v494, 118
  %v647 = vpop.permute.xlu0 %646
  %648 = vrot.lane.b32.xlu0 %v496, 118
  %v649 = vpop.permute.xlu0 %648
  %650 = vrot.lane.b32.xlu0 %v491, 118
  %v651 = vpop.permute.xlu0 %650
  %652 = vrot.lane.b32.xlu0 %v493, 118
  %v653 = vpop.permute.xlu0 %652
  %654 = vrot.lane.b32.xlu0 %v495, 118
  %v655 = vpop.permute.xlu0 %654
  %656 = vrot.lane.b32.xlu0 %v497, 118
  %v657 = vpop.permute.xlu0 %656
  %v658 = vsel %vm226, %v643, %v651
  %v659 = vsel %vm226, %v645, %v653
  %v660 = vsel %vm226, %v647, %v655
  %v661 = vsel %vm226, %v649, %v657
  %v662 = vsel %vm226, %v651, %v643
  %v663 = vsel %vm226, %v653, %v645
  %v664 = vsel %vm226, %v655, %v647
  %v665 = vsel %vm226, %v657, %v649
  %666 = vrot.lane.b32.xlu0 %v490, 117
  %v667 = vpop.permute.xlu0 %666
  %668 = vrot.lane.b32.xlu0 %v492, 117
  %v669 = vpop.permute.xlu0 %668
  %670 = vrot.lane.b32.xlu0 %v494, 117
  %v671 = vpop.permute.xlu0 %670
  %672 = vrot.lane.b32.xlu0 %v496, 117
  %v673 = vpop.permute.xlu0 %672
  %674 = vrot.lane.b32.xlu0 %v491, 117
  %v675 = vpop.permute.xlu0 %674
  %676 = vrot.lane.b32.xlu0 %v493, 117
  %v677 = vpop.permute.xlu0 %676
  %678 = vrot.lane.b32.xlu0 %v495, 117
  %v679 = vpop.permute.xlu0 %678
  %680 = vrot.lane.b32.xlu0 %v497, 117
  %v681 = vpop.permute.xlu0 %680
  %v682 = vsel %vm251, %v667, %v675
  %v683 = vsel %vm251, %v669, %v677
  %v684 = vsel %vm251, %v671, %v679
  %v685 = vsel %vm251, %v673, %v681
  %v686 = vsel %vm251, %v675, %v667
  %v687 = vsel %vm251, %v677, %v669
  %v688 = vsel %vm251, %v679, %v671
  %v689 = vsel %vm251, %v681, %v673
  %v690 = vpack.c.bf16 %v519, %v518
  %v691 = vpack.c.bf16 %v515, %v514
  %v692 = vpack.c.bf16 %v521, %v520
  %v693 = vpack.c.bf16 %v517, %v516
  %v694 = vpack.c.bf16 %v543, %v542
  %v695 = vpack.c.bf16 %v539, %v538
  %v696 = vpack.c.bf16 %v545, %v544
  %v697 = vpack.c.bf16 %v541, %v540
  %v698 = vpack.c.bf16 %v567, %v566
  %v699 = vpack.c.bf16 %v563, %v562
  %v700 = vpack.c.bf16 %v569, %v568
  %v701 = vpack.c.bf16 %v565, %v564
  %v702 = vpack.c.bf16 %v591, %v590
  %v703 = vpack.c.bf16 %v587, %v586
  %v704 = vpack.c.bf16 %v593, %v592
  %v705 = vpack.c.bf16 %v589, %v588
  %v706 = vpack.c.bf16 %v492, %v490
  %v707 = vpack.c.bf16 %v493, %v491
  %v708 = vpack.c.bf16 %v496, %v494
  %v709 = vpack.c.bf16 %v497, %v495
  %v710 = vpack.c.bf16 %v611, %v610
  %v711 = vpack.c.bf16 %v615, %v614
  %v712 = vpack.c.bf16 %v613, %v612
  %v713 = vpack.c.bf16 %v617, %v616
  %v714 = vpack.c.bf16 %v635, %v634
  %v715 = vpack.c.bf16 %v639, %v638
  %v716 = vpack.c.bf16 %v637, %v636
  %v717 = vpack.c.bf16 %v641, %v640
  %v718 = vpack.c.bf16 %v659, %v658
  %v719 = vpack.c.bf16 %v663, %v662
  %v720 = vpack.c.bf16 %v661, %v660
  %v721 = vpack.c.bf16 %v665, %v664
  %v722 = vpack.c.bf16 %v683, %v682
  %v723 = vpack.c.bf16 %v687, %v686
  %v724 = vpack.c.bf16 %v685, %v684
  %v725 = vpack.c.bf16 %v689, %v688
  %s726 = scalar_lea.vmem %s3, 48
  %v727 = vld [vmem:[%s726] sm:$0xff]
  %v728 = vld [vmem:[%s726 + $0x8] sm:$0xf]
  %v729 = vld [vmem:[%s726 + $0xc] sm:$0xff]
  %v730 = vld [vmem:[%s726 + $0x14] sm:$0xf]
  %v731 = vld [vmem:[%s726 + $0x18] sm:$0xff]
  %v732 = vld [vmem:[%s726 + $0x20] sm:$0xf]
  %v733 = vld [vmem:[%s726 + $0x24] sm:$0xff]
  %v734 = vld [vmem:[%s726 + $0x2c] sm:$0xf]
  %s735 = scalar_lea.vmem %s4, 32
  %v736 = vld [vmem:[%s735] sm:$0xff]
  %v737 = vld [vmem:[%s735 + $0x8] sm:$0xff]
  %v738 = vld [vmem:[%s735 + $0x10] sm:$0xff]
  %v739 = vld [vmem:[%s735 + $0x18] sm:$0xff]
  %741 = vset.pattern.permute.xlu0 0
  %742 = vperm.xlu0 %741, %v736
  %v743 = vpop.permute.xlu0 %742
  %746 = vset.pattern.permute.xlu0 0
  %747 = vperm.xlu0 %746, %v737
  %v748 = vpop.permute.xlu0 %747
  %751 = vset.pattern.permute.xlu0 0
  %752 = vperm.xlu0 %751, %v738
  %v753 = vpop.permute.xlu0 %752
  %756 = vset.pattern.permute.xlu0 0
  %757 = vperm.xlu0 %756, %v739
  %v758 = vpop.permute.xlu0 %757
  %v768 = vunpack.c.l.b16 %v727
  %v769 = vunpack.c.h.b16 %v727
  %v770 = vunpack.c.l.b16 %v728
  %v771 = vunpack.c.l.b16 %v729
  %v772 = vunpack.c.h.b16 %v729
  %v773 = vunpack.c.l.b16 %v730
  %v774 = vunpack.c.l.b16 %v731
  %v775 = vunpack.c.h.b16 %v731
  %v776 = vunpack.c.l.b16 %v732
  %v777 = vunpack.c.l.b16 %v733
  %v778 = vunpack.c.h.b16 %v733
  %v779 = vunpack.c.l.b16 %v734
  %v780 = vpack.c.b16 %v771, %v768
  %v781 = vpack.c.b16 %v772, %v769
  %v782 = vpack.c.b16 %v773, %v770
  %v783 = vpack.c.b16 %v777, %v774
  %v784 = vpack.c.b16 %v778, %v775
  %v785 = vpack.c.b16 %v779, %v776
  %v791 = vsel %vm358, %v782, 0
  %v794 = vsel %vm358, %v785, 0
  %796 = vmatprep.subr.bf16.mxu0 %v705
  %797 = vmatpush1.bf16.msra.mxu0 %v704
  %798 = vmatprep.subr.bf16.mxu0 %v703
  %799 = vmatpush1.bf16.msra.mxu0 %v702
  %800 = vmatprep.subr.bf16.mxu0 %v701
  %801 = vmatpush1.bf16.msra.mxu0 %v700
  %802 = vmatprep.subr.bf16.mxu0 %v699
  %803 = vmatpush1.bf16.msra.mxu0 %v698
  %804 = vmatprep.subr.bf16.mxu0 %v697
  %805 = vmatpush1.bf16.msra.mxu0 %v696
  %806 = vmatprep.subr.bf16.mxu0 %v695
  %807 = vmatpush1.bf16.msra.mxu0 %v694
  %808 = vmatprep.subr.bf16.mxu0 %v693
  %809 = vmatpush1.bf16.msra.mxu0 %v692
  %810 = vmatprep.subr.bf16.mxu0 %v691
  %811 = vmatpush1.bf16.msra.mxu0 %v690
  %812 = vmatprep.subr.bf16.mxu0 %v721
  %813 = vmatpush2.bf16.msra.mxu0 %v720
  %814 = vmatprep.subr.bf16.mxu0 %v719
  %815 = vmatpush2.bf16.msra.mxu0 %v718
  %816 = vmatprep.subr.bf16.mxu0 %v717
  %817 = vmatpush2.bf16.msra.mxu0 %v716
  %818 = vmatprep.subr.bf16.mxu0 %v715
  %819 = vmatpush2.bf16.msra.mxu0 %v714
  %820 = vmatprep.subr.bf16.mxu0 %v713
  %821 = vmatpush2.bf16.msra.mxu0 %v712
  %822 = vmatprep.subr.bf16.mxu0 %v711
  %823 = vmatpush2.bf16.msra.mxu0 %v710
  %824 = vmatprep.subr.bf16.mxu0 %v709
  %825 = vmatpush2.bf16.msra.mxu0 %v708
  %826 = vmatprep.subr.bf16.mxu0 %v707
  %827 = vmatpush2.bf16.msra.mxu0 %v706
  %828 = vmatprep.mubr.bf16.mxu0 %v781
  %829 = vmatmul.mubr.bf16.gmra.mxu0 %v780
  %v830 = vpop.f32.mrf.mxu0
  %v831 = vadd.f32 %v743, %v830
  %v832 = vpop.f32.mrf.mxu0
  %v833 = vadd.f32 %v743, %v832
  %v834 = vpop.f32.mrf.mxu0
  %v835 = vadd.f32 %v748, %v834
  %v836 = vpop.f32.mrf.mxu0
  %v837 = vadd.f32 %v748, %v836
  %838 = vmatprep.mubr.bf16.mxu0 %v784
  %839 = vmatmul.mubr.bf16.gmra.mxu0 %v783
  %v840 = vpop.f32.mrf.mxu0
  %v841 = vadd.f32 %v753, %v840
  %v842 = vpop.f32.mrf.mxu0
  %v843 = vadd.f32 %v753, %v842
  %v844 = vpop.f32.mrf.mxu0
  %v845 = vadd.f32 %v758, %v844
  %v846 = vpop.f32.mrf.mxu0
  %v847 = vadd.f32 %v758, %v846
  %848 = vdwg.mxu0
  %849 = vmatprep.subr.bf16.mxu0 0
  %850 = vmatpush1.bf16.msra.mxu0 0
  %851 = vmatprep.subr.bf16.mxu0 0
  %852 = vmatpush1.bf16.msra.mxu0 0
  %853 = vmatprep.subr.bf16.mxu0 0
  %854 = vmatpush1.bf16.msra.mxu0 0
  %855 = vmatprep.subr.bf16.mxu0 0
  %856 = vmatpush1.bf16.msra.mxu0 0
  %857 = vmatprep.subr.bf16.mxu0 0
  %858 = vmatpush1.bf16.msra.mxu0 0
  %859 = vmatprep.subr.bf16.mxu0 0
  %860 = vmatpush1.bf16.msra.mxu0 0
  %861 = vmatprep.subr.bf16.mxu0 %v725
  %862 = vmatpush1.bf16.msra.mxu0 %v724
  %863 = vmatprep.subr.bf16.mxu0 %v723
  %864 = vmatpush1.bf16.msra.mxu0 %v722
  %865 = vmatprep.subr.bf16.mxu0 0
  %866 = vmatpush2.bf16.msra.mxu0 0
  %867 = vmatprep.subr.bf16.mxu0 0
  %868 = vmatpush2.bf16.msra.mxu0 0
  %869 = vmatprep.subr.bf16.mxu0 0
  %870 = vmatpush2.bf16.msra.mxu0 0
  %871 = vmatprep.subr.bf16.mxu0 0
  %872 = vmatpush2.bf16.msra.mxu0 0
  %873 = vmatprep.subr.bf16.mxu0 0
  %874 = vmatpush2.bf16.msra.mxu0 0
  %875 = vmatprep.subr.bf16.mxu0 0
  %876 = vmatpush2.bf16.msra.mxu0 0
  %877 = vmatprep.subr.bf16.mxu0 0
  %878 = vmatpush2.bf16.msra.mxu0 0
  %879 = vmatprep.subr.bf16.mxu0 0
  %880 = vmatpush2.bf16.msra.mxu0 0
  %881 = vmatprep.mubr.bf16.mxu0 0
  %882 = vmatmul.mubr.bf16.gmra.mxu0 %v791
  %v883 = vpop.f32.mrf.mxu0
  %v884 = vadd.f32 %v831, %v883
  %v885 = vpop.f32.mrf.mxu0
  %v886 = vadd.f32 %v833, %v885
  %v887 = vpop.f32.mrf.mxu0
  %v888 = vadd.f32 %v835, %v887
  %v889 = vpop.f32.mrf.mxu0
  %v890 = vadd.f32 %v837, %v889
  %891 = vmatprep.mubr.bf16.mxu0 0
  %892 = vmatmul.mubr.bf16.gmra.mxu0 %v794
  %v893 = vpop.f32.mrf.mxu0
  %v894 = vadd.f32 %v841, %v893
  %v895 = vpop.f32.mrf.mxu0
  %v896 = vadd.f32 %v843, %v895
  %v897 = vpop.f32.mrf.mxu0
  %v898 = vadd.f32 %v845, %v897
  %v899 = vpop.f32.mrf.mxu0
  %v900 = vadd.f32 %v847, %v899
  %901 = vdwg.mxu0
  %v902 = vadd.f32 %v884, %v50
  %v903 = vadd.f32 %v886, %v51
  %v904 = vadd.f32 %v888, %v52
  %v905 = vadd.f32 %v890, %v53
  %v906 = vadd.f32 %v894, %v54
  %v907 = vadd.f32 %v896, %v55
  %v908 = vadd.f32 %v898, %v56
  %v909 = vadd.f32 %v900, %v57
  %v910 = vmax.f32 %v902, 0.0
  %v911 = vmax.f32 %v903, 0.0
  %v912 = vmax.f32 %v904, 0.0
  %v913 = vmax.f32 %v905, 0.0
  %v914 = vmax.f32 %v906, 0.0
  %v915 = vmax.f32 %v907, 0.0
  %v916 = vmax.f32 %v908, 0.0
  %v917 = vmax.f32 %v909, 0.0
  %v918 = vmul.f32 %v910, %v483
  %v919 = vmul.f32 %v911, %v487
  %v920 = vmul.f32 %v912, %v483
  %v921 = vmul.f32 %v913, %v487
  %v922 = vmul.f32 %v914, %v483
  %v923 = vmul.f32 %v915, %v487
  %v924 = vmul.f32 %v916, %v483
  %v925 = vmul.f32 %v917, %v487
  %926 = vrot.lane.b32.xlu0 %v918, 11
  %v927 = vpop.permute.xlu0 %926
  %928 = vrot.lane.b32.xlu0 %v920, 11
  %v929 = vpop.permute.xlu0 %928
  %930 = vrot.lane.b32.xlu0 %v922, 11
  %v931 = vpop.permute.xlu0 %930
  %932 = vrot.lane.b32.xlu0 %v924, 11
  %v933 = vpop.permute.xlu0 %932
  %934 = vrot.lane.b32.xlu0 %v919, 11
  %v935 = vpop.permute.xlu0 %934
  %936 = vrot.lane.b32.xlu0 %v921, 11
  %v937 = vpop.permute.xlu0 %936
  %938 = vrot.lane.b32.xlu0 %v923, 11
  %v939 = vpop.permute.xlu0 %938
  %940 = vrot.lane.b32.xlu0 %v925, 11
  %v941 = vpop.permute.xlu0 %940
  %v942 = vsel %vm76, %v927, %v935
  %v943 = vsel %vm76, %v929, %v937
  %v944 = vsel %vm76, %v931, %v939
  %v945 = vsel %vm76, %v933, %v941
  %v946 = vsel %vm76, %v935, %v927
  %v947 = vsel %vm76, %v937, %v929
  %v948 = vsel %vm76, %v939, %v931
  %v949 = vsel %vm76, %v941, %v933
  %950 = vrot.lane.b32.xlu0 %v918, 10
  %v951 = vpop.permute.xlu0 %950
  %952 = vrot.lane.b32.xlu0 %v920, 10
  %v953 = vpop.permute.xlu0 %952
  %954 = vrot.lane.b32.xlu0 %v922, 10
  %v955 = vpop.permute.xlu0 %954
  %956 = vrot.lane.b32.xlu0 %v924, 10
  %v957 = vpop.permute.xlu0 %956
  %958 = vrot.lane.b32.xlu0 %v919, 10
  %v959 = vpop.permute.xlu0 %958
  %960 = vrot.lane.b32.xlu0 %v921, 10
  %v961 = vpop.permute.xlu0 %960
  %962 = vrot.lane.b32.xlu0 %v923, 10
  %v963 = vpop.permute.xlu0 %962
  %964 = vrot.lane.b32.xlu0 %v925, 10
  %v965 = vpop.permute.xlu0 %964
  %v966 = vsel %vm101, %v951, %v959
  %v967 = vsel %vm101, %v953, %v961
  %v968 = vsel %vm101, %v955, %v963
  %v969 = vsel %vm101, %v957, %v965
  %v970 = vsel %vm101, %v959, %v951
  %v971 = vsel %vm101, %v961, %v953
  %v972 = vsel %vm101, %v963, %v955
  %v973 = vsel %vm101, %v965, %v957
  %974 = vrot.lane.b32.xlu0 %v918, 9
  %v975 = vpop.permute.xlu0 %974
  %976 = vrot.lane.b32.xlu0 %v920, 9
  %v977 = vpop.permute.xlu0 %976
  %978 = vrot.lane.b32.xlu0 %v922, 9
  %v979 = vpop.permute.xlu0 %978
  %980 = vrot.lane.b32.xlu0 %v924, 9
  %v981 = vpop.permute.xlu0 %980
  %982 = vrot.lane.b32.xlu0 %v919, 9
  %v983 = vpop.permute.xlu0 %982
  %984 = vrot.lane.b32.xlu0 %v921, 9
  %v985 = vpop.permute.xlu0 %984
  %986 = vrot.lane.b32.xlu0 %v923, 9
  %v987 = vpop.permute.xlu0 %986
  %988 = vrot.lane.b32.xlu0 %v925, 9
  %v989 = vpop.permute.xlu0 %988
  %v990 = vsel %vm126, %v975, %v983
  %v991 = vsel %vm126, %v977, %v985
  %v992 = vsel %vm126, %v979, %v987
  %v993 = vsel %vm126, %v981, %v989
  %v994 = vsel %vm126, %v983, %v975
  %v995 = vsel %vm126, %v985, %v977
  %v996 = vsel %vm126, %v987, %v979
  %v997 = vsel %vm126, %v989, %v981
  %998 = vrot.lane.b32.xlu0 %v918, 1
  %v999 = vpop.permute.xlu0 %998
  %1000 = vrot.lane.b32.xlu0 %v920, 1
  %v1001 = vpop.permute.xlu0 %1000
  %1002 = vrot.lane.b32.xlu0 %v922, 1
  %v1003 = vpop.permute.xlu0 %1002
  %1004 = vrot.lane.b32.xlu0 %v924, 1
  %v1005 = vpop.permute.xlu0 %1004
  %1006 = vrot.lane.b32.xlu0 %v919, 1
  %v1007 = vpop.permute.xlu0 %1006
  %1008 = vrot.lane.b32.xlu0 %v921, 1
  %v1009 = vpop.permute.xlu0 %1008
  %1010 = vrot.lane.b32.xlu0 %v923, 1
  %v1011 = vpop.permute.xlu0 %1010
  %1012 = vrot.lane.b32.xlu0 %v925, 1
  %v1013 = vpop.permute.xlu0 %1012
  %v1014 = vsel %vm151, %v999, %v1007
  %v1015 = vsel %vm151, %v1001, %v1009
  %v1016 = vsel %vm151, %v1003, %v1011
  %v1017 = vsel %vm151, %v1005, %v1013
  %v1018 = vsel %vm151, %v1007, %v999
  %v1019 = vsel %vm151, %v1009, %v1001
  %v1020 = vsel %vm151, %v1011, %v1003
  %v1021 = vsel %vm151, %v1013, %v1005
  %1022 = vrot.lane.b32.xlu0 %v918, 127
  %v1023 = vpop.permute.xlu0 %1022
  %1024 = vrot.lane.b32.xlu0 %v920, 127
  %v1025 = vpop.permute.xlu0 %1024
  %1026 = vrot.lane.b32.xlu0 %v922, 127
  %v1027 = vpop.permute.xlu0 %1026
  %1028 = vrot.lane.b32.xlu0 %v924, 127
  %v1029 = vpop.permute.xlu0 %1028
  %1030 = vrot.lane.b32.xlu0 %v919, 127
  %v1031 = vpop.permute.xlu0 %1030
  %1032 = vrot.lane.b32.xlu0 %v921, 127
  %v1033 = vpop.permute.xlu0 %1032
  %1034 = vrot.lane.b32.xlu0 %v923, 127
  %v1035 = vpop.permute.xlu0 %1034
  %1036 = vrot.lane.b32.xlu0 %v925, 127
  %v1037 = vpop.permute.xlu0 %1036
  %v1038 = vsel %vm176, %v1023, %v1031
  %v1039 = vsel %vm176, %v1025, %v1033
  %v1040 = vsel %vm176, %v1027, %v1035
  %v1041 = vsel %vm176, %v1029, %v1037
  %v1042 = vsel %vm176, %v1031, %v1023
  %v1043 = vsel %vm176, %v1033, %v1025
  %v1044 = vsel %vm176, %v1035, %v1027
  %v1045 = vsel %vm176, %v1037, %v1029
  %1046 = vrot.lane.b32.xlu0 %v918, 119
  %v1047 = vpop.permute.xlu0 %1046
  %1048 = vrot.lane.b32.xlu0 %v920, 119
  %v1049 = vpop.permute.xlu0 %1048
  %1050 = vrot.lane.b32.xlu0 %v922, 119
  %v1051 = vpop.permute.xlu0 %1050
  %1052 = vrot.lane.b32.xlu0 %v924, 119
  %v1053 = vpop.permute.xlu0 %1052
  %1054 = vrot.lane.b32.xlu0 %v919, 119
  %v1055 = vpop.permute.xlu0 %1054
  %1056 = vrot.lane.b32.xlu0 %v921, 119
  %v1057 = vpop.permute.xlu0 %1056
  %1058 = vrot.lane.b32.xlu0 %v923, 119
  %v1059 = vpop.permute.xlu0 %1058
  %1060 = vrot.lane.b32.xlu0 %v925, 119
  %v1061 = vpop.permute.xlu0 %1060
  %v1062 = vsel %vm201, %v1047, %v1055
  %v1063 = vsel %vm201, %v1049, %v1057
  %v1064 = vsel %vm201, %v1051, %v1059
  %v1065 = vsel %vm201, %v1053, %v1061
  %v1066 = vsel %vm201, %v1055, %v1047
  %v1067 = vsel %vm201, %v1057, %v1049
  %v1068 = vsel %vm201, %v1059, %v1051
  %v1069 = vsel %vm201, %v1061, %v1053
  %1070 = vrot.lane.b32.xlu0 %v918, 118
  %v1071 = vpop.permute.xlu0 %1070
  %1072 = vrot.lane.b32.xlu0 %v920, 118
  %v1073 = vpop.permute.xlu0 %1072
  %1074 = vrot.lane.b32.xlu0 %v922, 118
  %v1075 = vpop.permute.xlu0 %1074
  %1076 = vrot.lane.b32.xlu0 %v924, 118
  %v1077 = vpop.permute.xlu0 %1076
  %1078 = vrot.lane.b32.xlu0 %v919, 118
  %v1079 = vpop.permute.xlu0 %1078
  %1080 = vrot.lane.b32.xlu0 %v921, 118
  %v1081 = vpop.permute.xlu0 %1080
  %1082 = vrot.lane.b32.xlu0 %v923, 118
  %v1083 = vpop.permute.xlu0 %1082
  %1084 = vrot.lane.b32.xlu0 %v925, 118
  %v1085 = vpop.permute.xlu0 %1084
  %v1086 = vsel %vm226, %v1071, %v1079
  %v1087 = vsel %vm226, %v1073, %v1081
  %v1088 = vsel %vm226, %v1075, %v1083
  %v1089 = vsel %vm226, %v1077, %v1085
  %v1090 = vsel %vm226, %v1079, %v1071
  %v1091 = vsel %vm226, %v1081, %v1073
  %v1092 = vsel %vm226, %v1083, %v1075
  %v1093 = vsel %vm226, %v1085, %v1077
  %1094 = vrot.lane.b32.xlu0 %v918, 117
  %v1095 = vpop.permute.xlu0 %1094
  %1096 = vrot.lane.b32.xlu0 %v920, 117
  %v1097 = vpop.permute.xlu0 %1096
  %1098 = vrot.lane.b32.xlu0 %v922, 117
  %v1099 = vpop.permute.xlu0 %1098
  %1100 = vrot.lane.b32.xlu0 %v924, 117
  %v1101 = vpop.permute.xlu0 %1100
  %1102 = vrot.lane.b32.xlu0 %v919, 117
  %v1103 = vpop.permute.xlu0 %1102
  %1104 = vrot.lane.b32.xlu0 %v921, 117
  %v1105 = vpop.permute.xlu0 %1104
  %1106 = vrot.lane.b32.xlu0 %v923, 117
  %v1107 = vpop.permute.xlu0 %1106
  %1108 = vrot.lane.b32.xlu0 %v925, 117
  %v1109 = vpop.permute.xlu0 %1108
  %v1110 = vsel %vm251, %v1095, %v1103
  %v1111 = vsel %vm251, %v1097, %v1105
  %v1112 = vsel %vm251, %v1099, %v1107
  %v1113 = vsel %vm251, %v1101, %v1109
  %v1114 = vsel %vm251, %v1103, %v1095
  %v1115 = vsel %vm251, %v1105, %v1097
  %v1116 = vsel %vm251, %v1107, %v1099
  %v1117 = vsel %vm251, %v1109, %v1101
  %v1118 = vpack.c.bf16 %v947, %v946
  %v1119 = vpack.c.bf16 %v943, %v942
  %v1120 = vpack.c.bf16 %v949, %v948
  %v1121 = vpack.c.bf16 %v945, %v944
  %v1122 = vpack.c.bf16 %v971, %v970
  %v1123 = vpack.c.bf16 %v967, %v966
  %v1124 = vpack.c.bf16 %v973, %v972
  %v1125 = vpack.c.bf16 %v969, %v968
  %v1126 = vpack.c.bf16 %v995, %v994
  %v1127 = vpack.c.bf16 %v991, %v990
  %v1128 = vpack.c.bf16 %v997, %v996
  %v1129 = vpack.c.bf16 %v993, %v992
  %v1130 = vpack.c.bf16 %v1019, %v1018
  %v1131 = vpack.c.bf16 %v1015, %v1014
  %v1132 = vpack.c.bf16 %v1021, %v1020
  %v1133 = vpack.c.bf16 %v1017, %v1016
  %v1134 = vpack.c.bf16 %v920, %v918
  %v1135 = vpack.c.bf16 %v921, %v919
  %v1136 = vpack.c.bf16 %v924, %v922
  %v1137 = vpack.c.bf16 %v925, %v923
  %v1138 = vpack.c.bf16 %v1039, %v1038
  %v1139 = vpack.c.bf16 %v1043, %v1042
  %v1140 = vpack.c.bf16 %v1041, %v1040
  %v1141 = vpack.c.bf16 %v1045, %v1044
  %v1142 = vpack.c.bf16 %v1063, %v1062
  %v1143 = vpack.c.bf16 %v1067, %v1066
  %v1144 = vpack.c.bf16 %v1065, %v1064
  %v1145 = vpack.c.bf16 %v1069, %v1068
  %v1146 = vpack.c.bf16 %v1087, %v1086
  %v1147 = vpack.c.bf16 %v1091, %v1090
  %v1148 = vpack.c.bf16 %v1089, %v1088
  %v1149 = vpack.c.bf16 %v1093, %v1092
  %v1150 = vpack.c.bf16 %v1111, %v1110
  %v1151 = vpack.c.bf16 %v1115, %v1114
  %v1152 = vpack.c.bf16 %v1113, %v1112
  %v1153 = vpack.c.bf16 %v1117, %v1116
  %s1154 = scalar_lea.vmem %s3, 96
  %v1155 = vld [vmem:[%s1154] sm:$0xff]
  %v1156 = vld [vmem:[%s1154 + $0x8] sm:$0xf]
  %v1157 = vld [vmem:[%s1154 + $0xc] sm:$0xff]
  %v1158 = vld [vmem:[%s1154 + $0x14] sm:$0xf]
  %v1159 = vld [vmem:[%s1154 + $0x18] sm:$0xff]
  %v1160 = vld [vmem:[%s1154 + $0x20] sm:$0xf]
  %v1161 = vld [vmem:[%s1154 + $0x24] sm:$0xff]
  %v1162 = vld [vmem:[%s1154 + $0x2c] sm:$0xf]
  %s1163 = scalar_lea.vmem %s4, 64
  %v1164 = vld [vmem:[%s1163] sm:$0xff]
  %v1165 = vld [vmem:[%s1163 + $0x8] sm:$0xff]
  %v1166 = vld [vmem:[%s1163 + $0x10] sm:$0xff]
  %v1167 = vld [vmem:[%s1163 + $0x18] sm:$0xff]
  %1169 = vset.pattern.permute.xlu0 0
  %1170 = vperm.xlu0 %1169, %v1164
  %v1171 = vpop.permute.xlu0 %1170
  %1174 = vset.pattern.permute.xlu0 0
  %1175 = vperm.xlu0 %1174, %v1165
  %v1176 = vpop.permute.xlu0 %1175
  %1179 = vset.pattern.permute.xlu0 0
  %1180 = vperm.xlu0 %1179, %v1166
  %v1181 = vpop.permute.xlu0 %1180
  %1184 = vset.pattern.permute.xlu0 0
  %1185 = vperm.xlu0 %1184, %v1167
  %v1186 = vpop.permute.xlu0 %1185
  %v1196 = vunpack.c.l.b16 %v1155
  %v1197 = vunpack.c.h.b16 %v1155
  %v1198 = vunpack.c.l.b16 %v1156
  %v1199 = vunpack.c.l.b16 %v1157
  %v1200 = vunpack.c.h.b16 %v1157
  %v1201 = vunpack.c.l.b16 %v1158
  %v1202 = vunpack.c.l.b16 %v1159
  %v1203 = vunpack.c.h.b16 %v1159
  %v1204 = vunpack.c.l.b16 %v1160
  %v1205 = vunpack.c.l.b16 %v1161
  %v1206 = vunpack.c.h.b16 %v1161
  %v1207 = vunpack.c.l.b16 %v1162
  %v1208 = vpack.c.b16 %v1199, %v1196
  %v1209 = vpack.c.b16 %v1200, %v1197
  %v1210 = vpack.c.b16 %v1201, %v1198
  %v1211 = vpack.c.b16 %v1205, %v1202
  %v1212 = vpack.c.b16 %v1206, %v1203
  %v1213 = vpack.c.b16 %v1207, %v1204
  %v1219 = vsel %vm358, %v1210, 0
  %v1222 = vsel %vm358, %v1213, 0
  %1224 = vmatprep.subr.bf16.mxu0 %v1133
  %1225 = vmatpush1.bf16.msra.mxu0 %v1132
  %1226 = vmatprep.subr.bf16.mxu0 %v1131
  %1227 = vmatpush1.bf16.msra.mxu0 %v1130
  %1228 = vmatprep.subr.bf16.mxu0 %v1129
  %1229 = vmatpush1.bf16.msra.mxu0 %v1128
  %1230 = vmatprep.subr.bf16.mxu0 %v1127
  %1231 = vmatpush1.bf16.msra.mxu0 %v1126
  %1232 = vmatprep.subr.bf16.mxu0 %v1125
  %1233 = vmatpush1.bf16.msra.mxu0 %v1124
  %1234 = vmatprep.subr.bf16.mxu0 %v1123
  %1235 = vmatpush1.bf16.msra.mxu0 %v1122
  %1236 = vmatprep.subr.bf16.mxu0 %v1121
  %1237 = vmatpush1.bf16.msra.mxu0 %v1120
  %1238 = vmatprep.subr.bf16.mxu0 %v1119
  %1239 = vmatpush1.bf16.msra.mxu0 %v1118
  %1240 = vmatprep.subr.bf16.mxu0 %v1149
  %1241 = vmatpush2.bf16.msra.mxu0 %v1148
  %1242 = vmatprep.subr.bf16.mxu0 %v1147
  %1243 = vmatpush2.bf16.msra.mxu0 %v1146
  %1244 = vmatprep.subr.bf16.mxu0 %v1145
  %1245 = vmatpush2.bf16.msra.mxu0 %v1144
  %1246 = vmatprep.subr.bf16.mxu0 %v1143
  %1247 = vmatpush2.bf16.msra.mxu0 %v1142
  %1248 = vmatprep.subr.bf16.mxu0 %v1141
  %1249 = vmatpush2.bf16.msra.mxu0 %v1140
  %1250 = vmatprep.subr.bf16.mxu0 %v1139
  %1251 = vmatpush2.bf16.msra.mxu0 %v1138
  %1252 = vmatprep.subr.bf16.mxu0 %v1137
  %1253 = vmatpush2.bf16.msra.mxu0 %v1136
  %1254 = vmatprep.subr.bf16.mxu0 %v1135
  %1255 = vmatpush2.bf16.msra.mxu0 %v1134
  %1256 = vmatprep.mubr.bf16.mxu0 %v1209
  %1257 = vmatmul.mubr.bf16.gmra.mxu0 %v1208
  %v1258 = vpop.f32.mrf.mxu0
  %v1259 = vadd.f32 %v1171, %v1258
  %v1260 = vpop.f32.mrf.mxu0
  %v1261 = vadd.f32 %v1171, %v1260
  %v1262 = vpop.f32.mrf.mxu0
  %v1263 = vadd.f32 %v1176, %v1262
  %v1264 = vpop.f32.mrf.mxu0
  %v1265 = vadd.f32 %v1176, %v1264
  %1266 = vmatprep.mubr.bf16.mxu0 %v1212
  %1267 = vmatmul.mubr.bf16.gmra.mxu0 %v1211
  %v1268 = vpop.f32.mrf.mxu0
  %v1269 = vadd.f32 %v1181, %v1268
  %v1270 = vpop.f32.mrf.mxu0
  %v1271 = vadd.f32 %v1181, %v1270
  %v1272 = vpop.f32.mrf.mxu0
  %v1273 = vadd.f32 %v1186, %v1272
  %v1274 = vpop.f32.mrf.mxu0
  %v1275 = vadd.f32 %v1186, %v1274
  %1276 = vdwg.mxu0
  %1277 = vmatprep.subr.bf16.mxu0 0
  %1278 = vmatpush1.bf16.msra.mxu0 0
  %1279 = vmatprep.subr.bf16.mxu0 0
  %1280 = vmatpush1.bf16.msra.mxu0 0
  %1281 = vmatprep.subr.bf16.mxu0 0
  %1282 = vmatpush1.bf16.msra.mxu0 0
  %1283 = vmatprep.subr.bf16.mxu0 0
  %1284 = vmatpush1.bf16.msra.mxu0 0
  %1285 = vmatprep.subr.bf16.mxu0 0
  %1286 = vmatpush1.bf16.msra.mxu0 0
  %1287 = vmatprep.subr.bf16.mxu0 0
  %1288 = vmatpush1.bf16.msra.mxu0 0
  %1289 = vmatprep.subr.bf16.mxu0 %v1153
  %1290 = vmatpush1.bf16.msra.mxu0 %v1152
  %1291 = vmatprep.subr.bf16.mxu0 %v1151
  %1292 = vmatpush1.bf16.msra.mxu0 %v1150
  %1293 = vmatprep.subr.bf16.mxu0 0
  %1294 = vmatpush2.bf16.msra.mxu0 0
  %1295 = vmatprep.subr.bf16.mxu0 0
  %1296 = vmatpush2.bf16.msra.mxu0 0
  %1297 = vmatprep.subr.bf16.mxu0 0
  %1298 = vmatpush2.bf16.msra.mxu0 0
  %1299 = vmatprep.subr.bf16.mxu0 0
  %1300 = vmatpush2.bf16.msra.mxu0 0
  %1301 = vmatprep.subr.bf16.mxu0 0
  %1302 = vmatpush2.bf16.msra.mxu0 0
  %1303 = vmatprep.subr.bf16.mxu0 0
  %1304 = vmatpush2.bf16.msra.mxu0 0
  %1305 = vmatprep.subr.bf16.mxu0 0
  %1306 = vmatpush2.bf16.msra.mxu0 0
  %1307 = vmatprep.subr.bf16.mxu0 0
  %1308 = vmatpush2.bf16.msra.mxu0 0
  %1309 = vmatprep.mubr.bf16.mxu0 0
  %1310 = vmatmul.mubr.bf16.gmra.mxu0 %v1219
  %v1311 = vpop.f32.mrf.mxu0
  %v1312 = vadd.f32 %v1259, %v1311
  %v1313 = vpop.f32.mrf.mxu0
  %v1314 = vadd.f32 %v1261, %v1313
  %v1315 = vpop.f32.mrf.mxu0
  %v1316 = vadd.f32 %v1263, %v1315
  %v1317 = vpop.f32.mrf.mxu0
  %v1318 = vadd.f32 %v1265, %v1317
  %1319 = vmatprep.mubr.bf16.mxu0 0
  %1320 = vmatmul.mubr.bf16.gmra.mxu0 %v1222
  %v1321 = vpop.f32.mrf.mxu0
  %v1322 = vadd.f32 %v1269, %v1321
  %v1323 = vpop.f32.mrf.mxu0
  %v1324 = vadd.f32 %v1271, %v1323
  %v1325 = vpop.f32.mrf.mxu0
  %v1326 = vadd.f32 %v1273, %v1325
  %v1327 = vpop.f32.mrf.mxu0
  %v1328 = vadd.f32 %v1275, %v1327
  %1329 = vdwg.mxu0
  %v1330 = vmax.f32 %v1312, 0.0
  %v1331 = vmax.f32 %v1314, 0.0
  %v1332 = vmax.f32 %v1316, 0.0
  %v1333 = vmax.f32 %v1318, 0.0
  %v1334 = vmax.f32 %v1322, 0.0
  %v1335 = vmax.f32 %v1324, 0.0
  %v1336 = vmax.f32 %v1326, 0.0
  %v1337 = vmax.f32 %v1328, 0.0
  %v1338 = vmul.f32 %v1330, %v483
  %v1339 = vmul.f32 %v1331, %v487
  %v1340 = vmul.f32 %v1332, %v483
  %v1341 = vmul.f32 %v1333, %v487
  %v1342 = vmul.f32 %v1334, %v483
  %v1343 = vmul.f32 %v1335, %v487
  %v1344 = vmul.f32 %v1336, %v483
  %v1345 = vmul.f32 %v1337, %v487
  %1346 = vrot.lane.b32.xlu0 %v1338, 11
  %v1347 = vpop.permute.xlu0 %1346
  %1348 = vrot.lane.b32.xlu0 %v1340, 11
  %v1349 = vpop.permute.xlu0 %1348
  %1350 = vrot.lane.b32.xlu0 %v1342, 11
  %v1351 = vpop.permute.xlu0 %1350
  %1352 = vrot.lane.b32.xlu0 %v1344, 11
  %v1353 = vpop.permute.xlu0 %1352
  %1354 = vrot.lane.b32.xlu0 %v1339, 11
  %v1355 = vpop.permute.xlu0 %1354
  %1356 = vrot.lane.b32.xlu0 %v1341, 11
  %v1357 = vpop.permute.xlu0 %1356
  %1358 = vrot.lane.b32.xlu0 %v1343, 11
  %v1359 = vpop.permute.xlu0 %1358
  %1360 = vrot.lane.b32.xlu0 %v1345, 11
  %v1361 = vpop.permute.xlu0 %1360
  %v1362 = vsel %vm76, %v1347, %v1355
  %v1363 = vsel %vm76, %v1349, %v1357
  %v1364 = vsel %vm76, %v1351, %v1359
  %v1365 = vsel %vm76, %v1353, %v1361
  %v1366 = vsel %vm76, %v1355, %v1347
  %v1367 = vsel %vm76, %v1357, %v1349
  %v1368 = vsel %vm76, %v1359, %v1351
  %v1369 = vsel %vm76, %v1361, %v1353
  %1370 = vrot.lane.b32.xlu0 %v1338, 10
  %v1371 = vpop.permute.xlu0 %1370
  %1372 = vrot.lane.b32.xlu0 %v1340, 10
  %v1373 = vpop.permute.xlu0 %1372
  %1374 = vrot.lane.b32.xlu0 %v1342, 10
  %v1375 = vpop.permute.xlu0 %1374
  %1376 = vrot.lane.b32.xlu0 %v1344, 10
  %v1377 = vpop.permute.xlu0 %1376
  %1378 = vrot.lane.b32.xlu0 %v1339, 10
  %v1379 = vpop.permute.xlu0 %1378
  %1380 = vrot.lane.b32.xlu0 %v1341, 10
  %v1381 = vpop.permute.xlu0 %1380
  %1382 = vrot.lane.b32.xlu0 %v1343, 10
  %v1383 = vpop.permute.xlu0 %1382
  %1384 = vrot.lane.b32.xlu0 %v1345, 10
  %v1385 = vpop.permute.xlu0 %1384
  %v1386 = vsel %vm101, %v1371, %v1379
  %v1387 = vsel %vm101, %v1373, %v1381
  %v1388 = vsel %vm101, %v1375, %v1383
  %v1389 = vsel %vm101, %v1377, %v1385
  %v1390 = vsel %vm101, %v1379, %v1371
  %v1391 = vsel %vm101, %v1381, %v1373
  %v1392 = vsel %vm101, %v1383, %v1375
  %v1393 = vsel %vm101, %v1385, %v1377
  %1394 = vrot.lane.b32.xlu0 %v1338, 9
  %v1395 = vpop.permute.xlu0 %1394
  %1396 = vrot.lane.b32.xlu0 %v1340, 9
  %v1397 = vpop.permute.xlu0 %1396
  %1398 = vrot.lane.b32.xlu0 %v1342, 9
  %v1399 = vpop.permute.xlu0 %1398
  %1400 = vrot.lane.b32.xlu0 %v1344, 9
  %v1401 = vpop.permute.xlu0 %1400
  %1402 = vrot.lane.b32.xlu0 %v1339, 9
  %v1403 = vpop.permute.xlu0 %1402
  %1404 = vrot.lane.b32.xlu0 %v1341, 9
  %v1405 = vpop.permute.xlu0 %1404
  %1406 = vrot.lane.b32.xlu0 %v1343, 9
  %v1407 = vpop.permute.xlu0 %1406
  %1408 = vrot.lane.b32.xlu0 %v1345, 9
  %v1409 = vpop.permute.xlu0 %1408
  %v1410 = vsel %vm126, %v1395, %v1403
  %v1411 = vsel %vm126, %v1397, %v1405
  %v1412 = vsel %vm126, %v1399, %v1407
  %v1413 = vsel %vm126, %v1401, %v1409
  %v1414 = vsel %vm126, %v1403, %v1395
  %v1415 = vsel %vm126, %v1405, %v1397
  %v1416 = vsel %vm126, %v1407, %v1399
  %v1417 = vsel %vm126, %v1409, %v1401
  %1418 = vrot.lane.b32.xlu0 %v1338, 1
  %v1419 = vpop.permute.xlu0 %1418
  %1420 = vrot.lane.b32.xlu0 %v1340, 1
  %v1421 = vpop.permute.xlu0 %1420
  %1422 = vrot.lane.b32.xlu0 %v1342, 1
  %v1423 = vpop.permute.xlu0 %1422
  %1424 = vrot.lane.b32.xlu0 %v1344, 1
  %v1425 = vpop.permute.xlu0 %1424
  %1426 = vrot.lane.b32.xlu0 %v1339, 1
  %v1427 = vpop.permute.xlu0 %1426
  %1428 = vrot.lane.b32.xlu0 %v1341, 1
  %v1429 = vpop.permute.xlu0 %1428
  %1430 = vrot.lane.b32.xlu0 %v1343, 1
  %v1431 = vpop.permute.xlu0 %1430
  %1432 = vrot.lane.b32.xlu0 %v1345, 1
  %v1433 = vpop.permute.xlu0 %1432
  %v1434 = vsel %vm151, %v1419, %v1427
  %v1435 = vsel %vm151, %v1421, %v1429
  %v1436 = vsel %vm151, %v1423, %v1431
  %v1437 = vsel %vm151, %v1425, %v1433
  %v1438 = vsel %vm151, %v1427, %v1419
  %v1439 = vsel %vm151, %v1429, %v1421
  %v1440 = vsel %vm151, %v1431, %v1423
  %v1441 = vsel %vm151, %v1433, %v1425
  %1442 = vrot.lane.b32.xlu0 %v1338, 127
  %v1443 = vpop.permute.xlu0 %1442
  %1444 = vrot.lane.b32.xlu0 %v1340, 127
  %v1445 = vpop.permute.xlu0 %1444
  %1446 = vrot.lane.b32.xlu0 %v1342, 127
  %v1447 = vpop.permute.xlu0 %1446
  %1448 = vrot.lane.b32.xlu0 %v1344, 127
  %v1449 = vpop.permute.xlu0 %1448
  %1450 = vrot.lane.b32.xlu0 %v1339, 127
  %v1451 = vpop.permute.xlu0 %1450
  %1452 = vrot.lane.b32.xlu0 %v1341, 127
  %v1453 = vpop.permute.xlu0 %1452
  %1454 = vrot.lane.b32.xlu0 %v1343, 127
  %v1455 = vpop.permute.xlu0 %1454
  %1456 = vrot.lane.b32.xlu0 %v1345, 127
  %v1457 = vpop.permute.xlu0 %1456
  %v1458 = vsel %vm176, %v1443, %v1451
  %v1459 = vsel %vm176, %v1445, %v1453
  %v1460 = vsel %vm176, %v1447, %v1455
  %v1461 = vsel %vm176, %v1449, %v1457
  %v1462 = vsel %vm176, %v1451, %v1443
  %v1463 = vsel %vm176, %v1453, %v1445
  %v1464 = vsel %vm176, %v1455, %v1447
  %v1465 = vsel %vm176, %v1457, %v1449
  %1466 = vrot.lane.b32.xlu0 %v1338, 119
  %v1467 = vpop.permute.xlu0 %1466
  %1468 = vrot.lane.b32.xlu0 %v1340, 119
  %v1469 = vpop.permute.xlu0 %1468
  %1470 = vrot.lane.b32.xlu0 %v1342, 119
  %v1471 = vpop.permute.xlu0 %1470
  %1472 = vrot.lane.b32.xlu0 %v1344, 119
  %v1473 = vpop.permute.xlu0 %1472
  %1474 = vrot.lane.b32.xlu0 %v1339, 119
  %v1475 = vpop.permute.xlu0 %1474
  %1476 = vrot.lane.b32.xlu0 %v1341, 119
  %v1477 = vpop.permute.xlu0 %1476
  %1478 = vrot.lane.b32.xlu0 %v1343, 119
  %v1479 = vpop.permute.xlu0 %1478
  %1480 = vrot.lane.b32.xlu0 %v1345, 119
  %v1481 = vpop.permute.xlu0 %1480
  %v1482 = vsel %vm201, %v1467, %v1475
  %v1483 = vsel %vm201, %v1469, %v1477
  %v1484 = vsel %vm201, %v1471, %v1479
  %v1485 = vsel %vm201, %v1473, %v1481
  %v1486 = vsel %vm201, %v1475, %v1467
  %v1487 = vsel %vm201, %v1477, %v1469
  %v1488 = vsel %vm201, %v1479, %v1471
  %v1489 = vsel %vm201, %v1481, %v1473
  %1490 = vrot.lane.b32.xlu0 %v1338, 118
  %v1491 = vpop.permute.xlu0 %1490
  %1492 = vrot.lane.b32.xlu0 %v1340, 118
  %v1493 = vpop.permute.xlu0 %1492
  %1494 = vrot.lane.b32.xlu0 %v1342, 118
  %v1495 = vpop.permute.xlu0 %1494
  %1496 = vrot.lane.b32.xlu0 %v1344, 118
  %v1497 = vpop.permute.xlu0 %1496
  %1498 = vrot.lane.b32.xlu0 %v1339, 118
  %v1499 = vpop.permute.xlu0 %1498
  %1500 = vrot.lane.b32.xlu0 %v1341, 118
  %v1501 = vpop.permute.xlu0 %1500
  %1502 = vrot.lane.b32.xlu0 %v1343, 118
  %v1503 = vpop.permute.xlu0 %1502
  %1504 = vrot.lane.b32.xlu0 %v1345, 118
  %v1505 = vpop.permute.xlu0 %1504
  %v1506 = vsel %vm226, %v1491, %v1499
  %v1507 = vsel %vm226, %v1493, %v1501
  %v1508 = vsel %vm226, %v1495, %v1503
  %v1509 = vsel %vm226, %v1497, %v1505
  %v1510 = vsel %vm226, %v1499, %v1491
  %v1511 = vsel %vm226, %v1501, %v1493
  %v1512 = vsel %vm226, %v1503, %v1495
  %v1513 = vsel %vm226, %v1505, %v1497
  %1514 = vrot.lane.b32.xlu0 %v1338, 117
  %v1515 = vpop.permute.xlu0 %1514
  %1516 = vrot.lane.b32.xlu0 %v1340, 117
  %v1517 = vpop.permute.xlu0 %1516
  %1518 = vrot.lane.b32.xlu0 %v1342, 117
  %v1519 = vpop.permute.xlu0 %1518
  %1520 = vrot.lane.b32.xlu0 %v1344, 117
  %v1521 = vpop.permute.xlu0 %1520
  %1522 = vrot.lane.b32.xlu0 %v1339, 117
  %v1523 = vpop.permute.xlu0 %1522
  %1524 = vrot.lane.b32.xlu0 %v1341, 117
  %v1525 = vpop.permute.xlu0 %1524
  %1526 = vrot.lane.b32.xlu0 %v1343, 117
  %v1527 = vpop.permute.xlu0 %1526
  %1528 = vrot.lane.b32.xlu0 %v1345, 117
  %v1529 = vpop.permute.xlu0 %1528
  %v1530 = vsel %vm251, %v1515, %v1523
  %v1531 = vsel %vm251, %v1517, %v1525
  %v1532 = vsel %vm251, %v1519, %v1527
  %v1533 = vsel %vm251, %v1521, %v1529
  %v1534 = vsel %vm251, %v1523, %v1515
  %v1535 = vsel %vm251, %v1525, %v1517
  %v1536 = vsel %vm251, %v1527, %v1519
  %v1537 = vsel %vm251, %v1529, %v1521
  %v1538 = vpack.c.bf16 %v1367, %v1366
  %v1539 = vpack.c.bf16 %v1363, %v1362
  %v1540 = vpack.c.bf16 %v1369, %v1368
  %v1541 = vpack.c.bf16 %v1365, %v1364
  %v1542 = vpack.c.bf16 %v1391, %v1390
  %v1543 = vpack.c.bf16 %v1387, %v1386
  %v1544 = vpack.c.bf16 %v1393, %v1392
  %v1545 = vpack.c.bf16 %v1389, %v1388
  %v1546 = vpack.c.bf16 %v1415, %v1414
  %v1547 = vpack.c.bf16 %v1411, %v1410
  %v1548 = vpack.c.bf16 %v1417, %v1416
  %v1549 = vpack.c.bf16 %v1413, %v1412
  %v1550 = vpack.c.bf16 %v1439, %v1438
  %v1551 = vpack.c.bf16 %v1435, %v1434
  %v1552 = vpack.c.bf16 %v1441, %v1440
  %v1553 = vpack.c.bf16 %v1437, %v1436
  %v1554 = vpack.c.bf16 %v1340, %v1338
  %v1555 = vpack.c.bf16 %v1341, %v1339
  %v1556 = vpack.c.bf16 %v1344, %v1342
  %v1557 = vpack.c.bf16 %v1345, %v1343
  %v1558 = vpack.c.bf16 %v1459, %v1458
  %v1559 = vpack.c.bf16 %v1463, %v1462
  %v1560 = vpack.c.bf16 %v1461, %v1460
  %v1561 = vpack.c.bf16 %v1465, %v1464
  %v1562 = vpack.c.bf16 %v1483, %v1482
  %v1563 = vpack.c.bf16 %v1487, %v1486
  %v1564 = vpack.c.bf16 %v1485, %v1484
  %v1565 = vpack.c.bf16 %v1489, %v1488
  %v1566 = vpack.c.bf16 %v1507, %v1506
  %v1567 = vpack.c.bf16 %v1511, %v1510
  %v1568 = vpack.c.bf16 %v1509, %v1508
  %v1569 = vpack.c.bf16 %v1513, %v1512
  %v1570 = vpack.c.bf16 %v1531, %v1530
  %v1571 = vpack.c.bf16 %v1535, %v1534
  %v1572 = vpack.c.bf16 %v1533, %v1532
  %v1573 = vpack.c.bf16 %v1537, %v1536
  %s1574 = scalar_lea.vmem %s3, 144
  %v1575 = vld [vmem:[%s1574] sm:$0xff]
  %v1576 = vld [vmem:[%s1574 + $0x8] sm:$0xf]
  %v1577 = vld [vmem:[%s1574 + $0xc] sm:$0xff]
  %v1578 = vld [vmem:[%s1574 + $0x14] sm:$0xf]
  %v1579 = vld [vmem:[%s1574 + $0x18] sm:$0xff]
  %v1580 = vld [vmem:[%s1574 + $0x20] sm:$0xf]
  %v1581 = vld [vmem:[%s1574 + $0x24] sm:$0xff]
  %v1582 = vld [vmem:[%s1574 + $0x2c] sm:$0xf]
  %s1583 = scalar_lea.vmem %s4, 96
  %v1584 = vld [vmem:[%s1583] sm:$0xff]
  %v1585 = vld [vmem:[%s1583 + $0x8] sm:$0xff]
  %v1586 = vld [vmem:[%s1583 + $0x10] sm:$0xff]
  %v1587 = vld [vmem:[%s1583 + $0x18] sm:$0xff]
  %1589 = vset.pattern.permute.xlu0 0
  %1590 = vperm.xlu0 %1589, %v1584
  %v1591 = vpop.permute.xlu0 %1590
  %1594 = vset.pattern.permute.xlu0 0
  %1595 = vperm.xlu0 %1594, %v1585
  %v1596 = vpop.permute.xlu0 %1595
  %1599 = vset.pattern.permute.xlu0 0
  %1600 = vperm.xlu0 %1599, %v1586
  %v1601 = vpop.permute.xlu0 %1600
  %1604 = vset.pattern.permute.xlu0 0
  %1605 = vperm.xlu0 %1604, %v1587
  %v1606 = vpop.permute.xlu0 %1605
  %v1616 = vunpack.c.l.b16 %v1575
  %v1617 = vunpack.c.h.b16 %v1575
  %v1618 = vunpack.c.l.b16 %v1576
  %v1619 = vunpack.c.l.b16 %v1577
  %v1620 = vunpack.c.h.b16 %v1577
  %v1621 = vunpack.c.l.b16 %v1578
  %v1622 = vunpack.c.l.b16 %v1579
  %v1623 = vunpack.c.h.b16 %v1579
  %v1624 = vunpack.c.l.b16 %v1580
  %v1625 = vunpack.c.l.b16 %v1581
  %v1626 = vunpack.c.h.b16 %v1581
  %v1627 = vunpack.c.l.b16 %v1582
  %v1628 = vpack.c.b16 %v1619, %v1616
  %v1629 = vpack.c.b16 %v1620, %v1617
  %v1630 = vpack.c.b16 %v1621, %v1618
  %v1631 = vpack.c.b16 %v1625, %v1622
  %v1632 = vpack.c.b16 %v1626, %v1623
  %v1633 = vpack.c.b16 %v1627, %v1624
  %v1639 = vsel %vm358, %v1630, 0
  %v1642 = vsel %vm358, %v1633, 0
  %1644 = vmatprep.subr.bf16.mxu0 %v1553
  %1645 = vmatpush1.bf16.msra.mxu0 %v1552
  %1646 = vmatprep.subr.bf16.mxu0 %v1551
  %1647 = vmatpush1.bf16.msra.mxu0 %v1550
  %1648 = vmatprep.subr.bf16.mxu0 %v1549
  %1649 = vmatpush1.bf16.msra.mxu0 %v1548
  %1650 = vmatprep.subr.bf16.mxu0 %v1547
  %1651 = vmatpush1.bf16.msra.mxu0 %v1546
  %1652 = vmatprep.subr.bf16.mxu0 %v1545
  %1653 = vmatpush1.bf16.msra.mxu0 %v1544
  %1654 = vmatprep.subr.bf16.mxu0 %v1543
  %1655 = vmatpush1.bf16.msra.mxu0 %v1542
  %1656 = vmatprep.subr.bf16.mxu0 %v1541
  %1657 = vmatpush1.bf16.msra.mxu0 %v1540
  %1658 = vmatprep.subr.bf16.mxu0 %v1539
  %1659 = vmatpush1.bf16.msra.mxu0 %v1538
  %1660 = vmatprep.subr.bf16.mxu0 %v1569
  %1661 = vmatpush2.bf16.msra.mxu0 %v1568
  %1662 = vmatprep.subr.bf16.mxu0 %v1567
  %1663 = vmatpush2.bf16.msra.mxu0 %v1566
  %1664 = vmatprep.subr.bf16.mxu0 %v1565
  %1665 = vmatpush2.bf16.msra.mxu0 %v1564
  %1666 = vmatprep.subr.bf16.mxu0 %v1563
  %1667 = vmatpush2.bf16.msra.mxu0 %v1562
  %1668 = vmatprep.subr.bf16.mxu0 %v1561
  %1669 = vmatpush2.bf16.msra.mxu0 %v1560
  %1670 = vmatprep.subr.bf16.mxu0 %v1559
  %1671 = vmatpush2.bf16.msra.mxu0 %v1558
  %1672 = vmatprep.subr.bf16.mxu0 %v1557
  %1673 = vmatpush2.bf16.msra.mxu0 %v1556
  %1674 = vmatprep.subr.bf16.mxu0 %v1555
  %1675 = vmatpush2.bf16.msra.mxu0 %v1554
  %1676 = vmatprep.mubr.bf16.mxu0 %v1629
  %1677 = vmatmul.mubr.bf16.gmra.mxu0 %v1628
  %v1678 = vpop.f32.mrf.mxu0
  %v1679 = vadd.f32 %v1591, %v1678
  %v1680 = vpop.f32.mrf.mxu0
  %v1681 = vadd.f32 %v1591, %v1680
  %v1682 = vpop.f32.mrf.mxu0
  %v1683 = vadd.f32 %v1596, %v1682
  %v1684 = vpop.f32.mrf.mxu0
  %v1685 = vadd.f32 %v1596, %v1684
  %1686 = vmatprep.mubr.bf16.mxu0 %v1632
  %1687 = vmatmul.mubr.bf16.gmra.mxu0 %v1631
  %v1688 = vpop.f32.mrf.mxu0
  %v1689 = vadd.f32 %v1601, %v1688
  %v1690 = vpop.f32.mrf.mxu0
  %v1691 = vadd.f32 %v1601, %v1690
  %v1692 = vpop.f32.mrf.mxu0
  %v1693 = vadd.f32 %v1606, %v1692
  %v1694 = vpop.f32.mrf.mxu0
  %v1695 = vadd.f32 %v1606, %v1694
  %1696 = vdwg.mxu0
  %1697 = vmatprep.subr.bf16.mxu0 0
  %1698 = vmatpush1.bf16.msra.mxu0 0
  %1699 = vmatprep.subr.bf16.mxu0 0
  %1700 = vmatpush1.bf16.msra.mxu0 0
  %1701 = vmatprep.subr.bf16.mxu0 0
  %1702 = vmatpush1.bf16.msra.mxu0 0
  %1703 = vmatprep.subr.bf16.mxu0 0
  %1704 = vmatpush1.bf16.msra.mxu0 0
  %1705 = vmatprep.subr.bf16.mxu0 0
  %1706 = vmatpush1.bf16.msra.mxu0 0
  %1707 = vmatprep.subr.bf16.mxu0 0
  %1708 = vmatpush1.bf16.msra.mxu0 0
  %1709 = vmatprep.subr.bf16.mxu0 %v1573
  %1710 = vmatpush1.bf16.msra.mxu0 %v1572
  %1711 = vmatprep.subr.bf16.mxu0 %v1571
  %1712 = vmatpush1.bf16.msra.mxu0 %v1570
  %1713 = vmatprep.subr.bf16.mxu0 0
  %1714 = vmatpush2.bf16.msra.mxu0 0
  %1715 = vmatprep.subr.bf16.mxu0 0
  %1716 = vmatpush2.bf16.msra.mxu0 0
  %1717 = vmatprep.subr.bf16.mxu0 0
  %1718 = vmatpush2.bf16.msra.mxu0 0
  %1719 = vmatprep.subr.bf16.mxu0 0
  %1720 = vmatpush2.bf16.msra.mxu0 0
  %1721 = vmatprep.subr.bf16.mxu0 0
  %1722 = vmatpush2.bf16.msra.mxu0 0
  %1723 = vmatprep.subr.bf16.mxu0 0
  %1724 = vmatpush2.bf16.msra.mxu0 0
  %1725 = vmatprep.subr.bf16.mxu0 0
  %1726 = vmatpush2.bf16.msra.mxu0 0
  %1727 = vmatprep.subr.bf16.mxu0 0
  %1728 = vmatpush2.bf16.msra.mxu0 0
  %1729 = vmatprep.mubr.bf16.mxu0 0
  %1730 = vmatmul.mubr.bf16.gmra.mxu0 %v1639
  %v1731 = vpop.f32.mrf.mxu0
  %v1732 = vadd.f32 %v1679, %v1731
  %v1733 = vpop.f32.mrf.mxu0
  %v1734 = vadd.f32 %v1681, %v1733
  %v1735 = vpop.f32.mrf.mxu0
  %v1736 = vadd.f32 %v1683, %v1735
  %v1737 = vpop.f32.mrf.mxu0
  %v1738 = vadd.f32 %v1685, %v1737
  %1739 = vmatprep.mubr.bf16.mxu0 0
  %1740 = vmatmul.mubr.bf16.gmra.mxu0 %v1642
  %v1741 = vpop.f32.mrf.mxu0
  %v1742 = vadd.f32 %v1689, %v1741
  %v1743 = vpop.f32.mrf.mxu0
  %v1744 = vadd.f32 %v1691, %v1743
  %v1745 = vpop.f32.mrf.mxu0
  %v1746 = vadd.f32 %v1693, %v1745
  %v1747 = vpop.f32.mrf.mxu0
  %v1748 = vadd.f32 %v1695, %v1747
  %1749 = vdwg.mxu0
  %v1750 = vadd.f32 %v1732, %v918
  %v1751 = vadd.f32 %v1734, %v919
  %v1752 = vadd.f32 %v1736, %v920
  %v1753 = vadd.f32 %v1738, %v921
  %v1754 = vadd.f32 %v1742, %v922
  %v1755 = vadd.f32 %v1744, %v923
  %v1756 = vadd.f32 %v1746, %v924
  %v1757 = vadd.f32 %v1748, %v925
  %v1758 = vmax.f32 %v1750, 0.0
  %v1759 = vmax.f32 %v1751, 0.0
  %v1760 = vmax.f32 %v1752, 0.0
  %v1761 = vmax.f32 %v1753, 0.0
  %v1762 = vmax.f32 %v1754, 0.0
  %v1763 = vmax.f32 %v1755, 0.0
  %v1764 = vmax.f32 %v1756, 0.0
  %v1765 = vmax.f32 %v1757, 0.0
  %v1766 = vmul.f32 %v1758, %v483
  %v1767 = vmul.f32 %v1759, %v487
  %v1768 = vmul.f32 %v1760, %v483
  %v1769 = vmul.f32 %v1761, %v487
  %v1770 = vmul.f32 %v1762, %v483
  %v1771 = vmul.f32 %v1763, %v487
  %v1772 = vmul.f32 %v1764, %v483
  %v1773 = vmul.f32 %v1765, %v487
  %1774 = vrot.lane.b32.xlu0 %v1766, 11
  %v1775 = vpop.permute.xlu0 %1774
  %1776 = vrot.lane.b32.xlu0 %v1768, 11
  %v1777 = vpop.permute.xlu0 %1776
  %1778 = vrot.lane.b32.xlu0 %v1770, 11
  %v1779 = vpop.permute.xlu0 %1778
  %1780 = vrot.lane.b32.xlu0 %v1772, 11
  %v1781 = vpop.permute.xlu0 %1780
  %1782 = vrot.lane.b32.xlu0 %v1767, 11
  %v1783 = vpop.permute.xlu0 %1782
  %1784 = vrot.lane.b32.xlu0 %v1769, 11
  %v1785 = vpop.permute.xlu0 %1784
  %1786 = vrot.lane.b32.xlu0 %v1771, 11
  %v1787 = vpop.permute.xlu0 %1786
  %1788 = vrot.lane.b32.xlu0 %v1773, 11
  %v1789 = vpop.permute.xlu0 %1788
  %v1790 = vsel %vm76, %v1775, %v1783
  %v1791 = vsel %vm76, %v1777, %v1785
  %v1792 = vsel %vm76, %v1779, %v1787
  %v1793 = vsel %vm76, %v1781, %v1789
  %v1794 = vsel %vm76, %v1783, %v1775
  %v1795 = vsel %vm76, %v1785, %v1777
  %v1796 = vsel %vm76, %v1787, %v1779
  %v1797 = vsel %vm76, %v1789, %v1781
  %1798 = vrot.lane.b32.xlu0 %v1766, 10
  %v1799 = vpop.permute.xlu0 %1798
  %1800 = vrot.lane.b32.xlu0 %v1768, 10
  %v1801 = vpop.permute.xlu0 %1800
  %1802 = vrot.lane.b32.xlu0 %v1770, 10
  %v1803 = vpop.permute.xlu0 %1802
  %1804 = vrot.lane.b32.xlu0 %v1772, 10
  %v1805 = vpop.permute.xlu0 %1804
  %1806 = vrot.lane.b32.xlu0 %v1767, 10
  %v1807 = vpop.permute.xlu0 %1806
  %1808 = vrot.lane.b32.xlu0 %v1769, 10
  %v1809 = vpop.permute.xlu0 %1808
  %1810 = vrot.lane.b32.xlu0 %v1771, 10
  %v1811 = vpop.permute.xlu0 %1810
  %1812 = vrot.lane.b32.xlu0 %v1773, 10
  %v1813 = vpop.permute.xlu0 %1812
  %v1814 = vsel %vm101, %v1799, %v1807
  %v1815 = vsel %vm101, %v1801, %v1809
  %v1816 = vsel %vm101, %v1803, %v1811
  %v1817 = vsel %vm101, %v1805, %v1813
  %v1818 = vsel %vm101, %v1807, %v1799
  %v1819 = vsel %vm101, %v1809, %v1801
  %v1820 = vsel %vm101, %v1811, %v1803
  %v1821 = vsel %vm101, %v1813, %v1805
  %1822 = vrot.lane.b32.xlu0 %v1766, 9
  %v1823 = vpop.permute.xlu0 %1822
  %1824 = vrot.lane.b32.xlu0 %v1768, 9
  %v1825 = vpop.permute.xlu0 %1824
  %1826 = vrot.lane.b32.xlu0 %v1770, 9
  %v1827 = vpop.permute.xlu0 %1826
  %1828 = vrot.lane.b32.xlu0 %v1772, 9
  %v1829 = vpop.permute.xlu0 %1828
  %1830 = vrot.lane.b32.xlu0 %v1767, 9
  %v1831 = vpop.permute.xlu0 %1830
  %1832 = vrot.lane.b32.xlu0 %v1769, 9
  %v1833 = vpop.permute.xlu0 %1832
  %1834 = vrot.lane.b32.xlu0 %v1771, 9
  %v1835 = vpop.permute.xlu0 %1834
  %1836 = vrot.lane.b32.xlu0 %v1773, 9
  %v1837 = vpop.permute.xlu0 %1836
  %v1838 = vsel %vm126, %v1823, %v1831
  %v1839 = vsel %vm126, %v1825, %v1833
  %v1840 = vsel %vm126, %v1827, %v1835
  %v1841 = vsel %vm126, %v1829, %v1837
  %v1842 = vsel %vm126, %v1831, %v1823
  %v1843 = vsel %vm126, %v1833, %v1825
  %v1844 = vsel %vm126, %v1835, %v1827
  %v1845 = vsel %vm126, %v1837, %v1829
  %1846 = vrot.lane.b32.xlu0 %v1766, 1
  %v1847 = vpop.permute.xlu0 %1846
  %1848 = vrot.lane.b32.xlu0 %v1768, 1
  %v1849 = vpop.permute.xlu0 %1848
  %1850 = vrot.lane.b32.xlu0 %v1770, 1
  %v1851 = vpop.permute.xlu0 %1850
  %1852 = vrot.lane.b32.xlu0 %v1772, 1
  %v1853 = vpop.permute.xlu0 %1852
  %1854 = vrot.lane.b32.xlu0 %v1767, 1
  %v1855 = vpop.permute.xlu0 %1854
  %1856 = vrot.lane.b32.xlu0 %v1769, 1
  %v1857 = vpop.permute.xlu0 %1856
  %1858 = vrot.lane.b32.xlu0 %v1771, 1
  %v1859 = vpop.permute.xlu0 %1858
  %1860 = vrot.lane.b32.xlu0 %v1773, 1
  %v1861 = vpop.permute.xlu0 %1860
  %v1862 = vsel %vm151, %v1847, %v1855
  %v1863 = vsel %vm151, %v1849, %v1857
  %v1864 = vsel %vm151, %v1851, %v1859
  %v1865 = vsel %vm151, %v1853, %v1861
  %v1866 = vsel %vm151, %v1855, %v1847
  %v1867 = vsel %vm151, %v1857, %v1849
  %v1868 = vsel %vm151, %v1859, %v1851
  %v1869 = vsel %vm151, %v1861, %v1853
  %1870 = vrot.lane.b32.xlu0 %v1766, 127
  %v1871 = vpop.permute.xlu0 %1870
  %1872 = vrot.lane.b32.xlu0 %v1768, 127
  %v1873 = vpop.permute.xlu0 %1872
  %1874 = vrot.lane.b32.xlu0 %v1770, 127
  %v1875 = vpop.permute.xlu0 %1874
  %1876 = vrot.lane.b32.xlu0 %v1772, 127
  %v1877 = vpop.permute.xlu0 %1876
  %1878 = vrot.lane.b32.xlu0 %v1767, 127
  %v1879 = vpop.permute.xlu0 %1878
  %1880 = vrot.lane.b32.xlu0 %v1769, 127
  %v1881 = vpop.permute.xlu0 %1880
  %1882 = vrot.lane.b32.xlu0 %v1771, 127
  %v1883 = vpop.permute.xlu0 %1882
  %1884 = vrot.lane.b32.xlu0 %v1773, 127
  %v1885 = vpop.permute.xlu0 %1884
  %v1886 = vsel %vm176, %v1871, %v1879
  %v1887 = vsel %vm176, %v1873, %v1881
  %v1888 = vsel %vm176, %v1875, %v1883
  %v1889 = vsel %vm176, %v1877, %v1885
  %v1890 = vsel %vm176, %v1879, %v1871
  %v1891 = vsel %vm176, %v1881, %v1873
  %v1892 = vsel %vm176, %v1883, %v1875
  %v1893 = vsel %vm176, %v1885, %v1877
  %1894 = vrot.lane.b32.xlu0 %v1766, 119
  %v1895 = vpop.permute.xlu0 %1894
  %1896 = vrot.lane.b32.xlu0 %v1768, 119
  %v1897 = vpop.permute.xlu0 %1896
  %1898 = vrot.lane.b32.xlu0 %v1770, 119
  %v1899 = vpop.permute.xlu0 %1898
  %1900 = vrot.lane.b32.xlu0 %v1772, 119
  %v1901 = vpop.permute.xlu0 %1900
  %1902 = vrot.lane.b32.xlu0 %v1767, 119
  %v1903 = vpop.permute.xlu0 %1902
  %1904 = vrot.lane.b32.xlu0 %v1769, 119
  %v1905 = vpop.permute.xlu0 %1904
  %1906 = vrot.lane.b32.xlu0 %v1771, 119
  %v1907 = vpop.permute.xlu0 %1906
  %1908 = vrot.lane.b32.xlu0 %v1773, 119
  %v1909 = vpop.permute.xlu0 %1908
  %v1910 = vsel %vm201, %v1895, %v1903
  %v1911 = vsel %vm201, %v1897, %v1905
  %v1912 = vsel %vm201, %v1899, %v1907
  %v1913 = vsel %vm201, %v1901, %v1909
  %v1914 = vsel %vm201, %v1903, %v1895
  %v1915 = vsel %vm201, %v1905, %v1897
  %v1916 = vsel %vm201, %v1907, %v1899
  %v1917 = vsel %vm201, %v1909, %v1901
  %1918 = vrot.lane.b32.xlu0 %v1766, 118
  %v1919 = vpop.permute.xlu0 %1918
  %1920 = vrot.lane.b32.xlu0 %v1768, 118
  %v1921 = vpop.permute.xlu0 %1920
  %1922 = vrot.lane.b32.xlu0 %v1770, 118
  %v1923 = vpop.permute.xlu0 %1922
  %1924 = vrot.lane.b32.xlu0 %v1772, 118
  %v1925 = vpop.permute.xlu0 %1924
  %1926 = vrot.lane.b32.xlu0 %v1767, 118
  %v1927 = vpop.permute.xlu0 %1926
  %1928 = vrot.lane.b32.xlu0 %v1769, 118
  %v1929 = vpop.permute.xlu0 %1928
  %1930 = vrot.lane.b32.xlu0 %v1771, 118
  %v1931 = vpop.permute.xlu0 %1930
  %1932 = vrot.lane.b32.xlu0 %v1773, 118
  %v1933 = vpop.permute.xlu0 %1932
  %v1934 = vsel %vm226, %v1919, %v1927
  %v1935 = vsel %vm226, %v1921, %v1929
  %v1936 = vsel %vm226, %v1923, %v1931
  %v1937 = vsel %vm226, %v1925, %v1933
  %v1938 = vsel %vm226, %v1927, %v1919
  %v1939 = vsel %vm226, %v1929, %v1921
  %v1940 = vsel %vm226, %v1931, %v1923
  %v1941 = vsel %vm226, %v1933, %v1925
  %1942 = vrot.lane.b32.xlu0 %v1766, 117
  %v1943 = vpop.permute.xlu0 %1942
  %1944 = vrot.lane.b32.xlu0 %v1768, 117
  %v1945 = vpop.permute.xlu0 %1944
  %1946 = vrot.lane.b32.xlu0 %v1770, 117
  %v1947 = vpop.permute.xlu0 %1946
  %1948 = vrot.lane.b32.xlu0 %v1772, 117
  %v1949 = vpop.permute.xlu0 %1948
  %1950 = vrot.lane.b32.xlu0 %v1767, 117
  %v1951 = vpop.permute.xlu0 %1950
  %1952 = vrot.lane.b32.xlu0 %v1769, 117
  %v1953 = vpop.permute.xlu0 %1952
  %1954 = vrot.lane.b32.xlu0 %v1771, 117
  %v1955 = vpop.permute.xlu0 %1954
  %1956 = vrot.lane.b32.xlu0 %v1773, 117
  %v1957 = vpop.permute.xlu0 %1956
  %v1958 = vsel %vm251, %v1943, %v1951
  %v1959 = vsel %vm251, %v1945, %v1953
  %v1960 = vsel %vm251, %v1947, %v1955
  %v1961 = vsel %vm251, %v1949, %v1957
  %v1962 = vsel %vm251, %v1951, %v1943
  %v1963 = vsel %vm251, %v1953, %v1945
  %v1964 = vsel %vm251, %v1955, %v1947
  %v1965 = vsel %vm251, %v1957, %v1949
  %v1966 = vpack.c.bf16 %v1795, %v1794
  %v1967 = vpack.c.bf16 %v1791, %v1790
  %v1968 = vpack.c.bf16 %v1797, %v1796
  %v1969 = vpack.c.bf16 %v1793, %v1792
  %v1970 = vpack.c.bf16 %v1819, %v1818
  %v1971 = vpack.c.bf16 %v1815, %v1814
  %v1972 = vpack.c.bf16 %v1821, %v1820
  %v1973 = vpack.c.bf16 %v1817, %v1816
  %v1974 = vpack.c.bf16 %v1843, %v1842
  %v1975 = vpack.c.bf16 %v1839, %v1838
  %v1976 = vpack.c.bf16 %v1845, %v1844
  %v1977 = vpack.c.bf16 %v1841, %v1840
  %v1978 = vpack.c.bf16 %v1867, %v1866
  %v1979 = vpack.c.bf16 %v1863, %v1862
  %v1980 = vpack.c.bf16 %v1869, %v1868
  %v1981 = vpack.c.bf16 %v1865, %v1864
  %v1982 = vpack.c.bf16 %v1768, %v1766
  %v1983 = vpack.c.bf16 %v1769, %v1767
  %v1984 = vpack.c.bf16 %v1772, %v1770
  %v1985 = vpack.c.bf16 %v1773, %v1771
  %v1986 = vpack.c.bf16 %v1887, %v1886
  %v1987 = vpack.c.bf16 %v1891, %v1890
  %v1988 = vpack.c.bf16 %v1889, %v1888
  %v1989 = vpack.c.bf16 %v1893, %v1892
  %v1990 = vpack.c.bf16 %v1911, %v1910
  %v1991 = vpack.c.bf16 %v1915, %v1914
  %v1992 = vpack.c.bf16 %v1913, %v1912
  %v1993 = vpack.c.bf16 %v1917, %v1916
  %v1994 = vpack.c.bf16 %v1935, %v1934
  %v1995 = vpack.c.bf16 %v1939, %v1938
  %v1996 = vpack.c.bf16 %v1937, %v1936
  %v1997 = vpack.c.bf16 %v1941, %v1940
  %v1998 = vpack.c.bf16 %v1959, %v1958
  %v1999 = vpack.c.bf16 %v1963, %v1962
  %v2000 = vpack.c.bf16 %v1961, %v1960
  %v2001 = vpack.c.bf16 %v1965, %v1964
  %s2002 = scalar_lea.vmem %s3, 192
  %v2003 = vld [vmem:[%s2002] sm:$0xff]
  %v2004 = vld [vmem:[%s2002 + $0x8] sm:$0xf]
  %v2005 = vld [vmem:[%s2002 + $0xc] sm:$0xff]
  %v2006 = vld [vmem:[%s2002 + $0x14] sm:$0xf]
  %v2007 = vld [vmem:[%s2002 + $0x18] sm:$0xff]
  %v2008 = vld [vmem:[%s2002 + $0x20] sm:$0xf]
  %v2009 = vld [vmem:[%s2002 + $0x24] sm:$0xff]
  %v2010 = vld [vmem:[%s2002 + $0x2c] sm:$0xf]
  %s2011 = scalar_lea.vmem %s4, 128
  %v2012 = vld [vmem:[%s2011] sm:$0xff]
  %v2013 = vld [vmem:[%s2011 + $0x8] sm:$0xff]
  %v2014 = vld [vmem:[%s2011 + $0x10] sm:$0xff]
  %v2015 = vld [vmem:[%s2011 + $0x18] sm:$0xff]
  %2017 = vset.pattern.permute.xlu0 0
  %2018 = vperm.xlu0 %2017, %v2012
  %v2019 = vpop.permute.xlu0 %2018
  %2022 = vset.pattern.permute.xlu0 0
  %2023 = vperm.xlu0 %2022, %v2013
  %v2024 = vpop.permute.xlu0 %2023
  %2027 = vset.pattern.permute.xlu0 0
  %2028 = vperm.xlu0 %2027, %v2014
  %v2029 = vpop.permute.xlu0 %2028
  %2032 = vset.pattern.permute.xlu0 0
  %2033 = vperm.xlu0 %2032, %v2015
  %v2034 = vpop.permute.xlu0 %2033
  %v2044 = vunpack.c.l.b16 %v2003
  %v2045 = vunpack.c.h.b16 %v2003
  %v2046 = vunpack.c.l.b16 %v2004
  %v2047 = vunpack.c.l.b16 %v2005
  %v2048 = vunpack.c.h.b16 %v2005
  %v2049 = vunpack.c.l.b16 %v2006
  %v2050 = vunpack.c.l.b16 %v2007
  %v2051 = vunpack.c.h.b16 %v2007
  %v2052 = vunpack.c.l.b16 %v2008
  %v2053 = vunpack.c.l.b16 %v2009
  %v2054 = vunpack.c.h.b16 %v2009
  %v2055 = vunpack.c.l.b16 %v2010
  %v2056 = vpack.c.b16 %v2047, %v2044
  %v2057 = vpack.c.b16 %v2048, %v2045
  %v2058 = vpack.c.b16 %v2049, %v2046
  %v2059 = vpack.c.b16 %v2053, %v2050
  %v2060 = vpack.c.b16 %v2054, %v2051
  %v2061 = vpack.c.b16 %v2055, %v2052
  %v2067 = vsel %vm358, %v2058, 0
  %v2070 = vsel %vm358, %v2061, 0
  %2072 = vmatprep.subr.bf16.mxu0 %v1981
  %2073 = vmatpush1.bf16.msra.mxu0 %v1980
  %2074 = vmatprep.subr.bf16.mxu0 %v1979
  %2075 = vmatpush1.bf16.msra.mxu0 %v1978
  %2076 = vmatprep.subr.bf16.mxu0 %v1977
  %2077 = vmatpush1.bf16.msra.mxu0 %v1976
  %2078 = vmatprep.subr.bf16.mxu0 %v1975
  %2079 = vmatpush1.bf16.msra.mxu0 %v1974
  %2080 = vmatprep.subr.bf16.mxu0 %v1973
  %2081 = vmatpush1.bf16.msra.mxu0 %v1972
  %2082 = vmatprep.subr.bf16.mxu0 %v1971
  %2083 = vmatpush1.bf16.msra.mxu0 %v1970
  %2084 = vmatprep.subr.bf16.mxu0 %v1969
  %2085 = vmatpush1.bf16.msra.mxu0 %v1968
  %2086 = vmatprep.subr.bf16.mxu0 %v1967
  %2087 = vmatpush1.bf16.msra.mxu0 %v1966
  %2088 = vmatprep.subr.bf16.mxu0 %v1997
  %2089 = vmatpush2.bf16.msra.mxu0 %v1996
  %2090 = vmatprep.subr.bf16.mxu0 %v1995
  %2091 = vmatpush2.bf16.msra.mxu0 %v1994
  %2092 = vmatprep.subr.bf16.mxu0 %v1993
  %2093 = vmatpush2.bf16.msra.mxu0 %v1992
  %2094 = vmatprep.subr.bf16.mxu0 %v1991
  %2095 = vmatpush2.bf16.msra.mxu0 %v1990
  %2096 = vmatprep.subr.bf16.mxu0 %v1989
  %2097 = vmatpush2.bf16.msra.mxu0 %v1988
  %2098 = vmatprep.subr.bf16.mxu0 %v1987
  %2099 = vmatpush2.bf16.msra.mxu0 %v1986
  %2100 = vmatprep.subr.bf16.mxu0 %v1985
  %2101 = vmatpush2.bf16.msra.mxu0 %v1984
  %2102 = vmatprep.subr.bf16.mxu0 %v1983
  %2103 = vmatpush2.bf16.msra.mxu0 %v1982
  %2104 = vmatprep.mubr.bf16.mxu0 %v2057
  %2105 = vmatmul.mubr.bf16.gmra.mxu0 %v2056
  %v2106 = vpop.f32.mrf.mxu0
  %v2107 = vadd.f32 %v2019, %v2106
  %v2108 = vpop.f32.mrf.mxu0
  %v2109 = vadd.f32 %v2019, %v2108
  %v2110 = vpop.f32.mrf.mxu0
  %v2111 = vadd.f32 %v2024, %v2110
  %v2112 = vpop.f32.mrf.mxu0
  %v2113 = vadd.f32 %v2024, %v2112
  %2114 = vmatprep.mubr.bf16.mxu0 %v2060
  %2115 = vmatmul.mubr.bf16.gmra.mxu0 %v2059
  %v2116 = vpop.f32.mrf.mxu0
  %v2117 = vadd.f32 %v2029, %v2116
  %v2118 = vpop.f32.mrf.mxu0
  %v2119 = vadd.f32 %v2029, %v2118
  %v2120 = vpop.f32.mrf.mxu0
  %v2121 = vadd.f32 %v2034, %v2120
  %v2122 = vpop.f32.mrf.mxu0
  %v2123 = vadd.f32 %v2034, %v2122
  %2124 = vdwg.mxu0
  %2125 = vmatprep.subr.bf16.mxu0 0
  %2126 = vmatpush1.bf16.msra.mxu0 0
  %2127 = vmatprep.subr.bf16.mxu0 0
  %2128 = vmatpush1.bf16.msra.mxu0 0
  %2129 = vmatprep.subr.bf16.mxu0 0
  %2130 = vmatpush1.bf16.msra.mxu0 0
  %2131 = vmatprep.subr.bf16.mxu0 0
  %2132 = vmatpush1.bf16.msra.mxu0 0
  %2133 = vmatprep.subr.bf16.mxu0 0
  %2134 = vmatpush1.bf16.msra.mxu0 0
  %2135 = vmatprep.subr.bf16.mxu0 0
  %2136 = vmatpush1.bf16.msra.mxu0 0
  %2137 = vmatprep.subr.bf16.mxu0 %v2001
  %2138 = vmatpush1.bf16.msra.mxu0 %v2000
  %2139 = vmatprep.subr.bf16.mxu0 %v1999
  %2140 = vmatpush1.bf16.msra.mxu0 %v1998
  %2141 = vmatprep.subr.bf16.mxu0 0
  %2142 = vmatpush2.bf16.msra.mxu0 0
  %2143 = vmatprep.subr.bf16.mxu0 0
  %2144 = vmatpush2.bf16.msra.mxu0 0
  %2145 = vmatprep.subr.bf16.mxu0 0
  %2146 = vmatpush2.bf16.msra.mxu0 0
  %2147 = vmatprep.subr.bf16.mxu0 0
  %2148 = vmatpush2.bf16.msra.mxu0 0
  %2149 = vmatprep.subr.bf16.mxu0 0
  %2150 = vmatpush2.bf16.msra.mxu0 0
  %2151 = vmatprep.subr.bf16.mxu0 0
  %2152 = vmatpush2.bf16.msra.mxu0 0
  %2153 = vmatprep.subr.bf16.mxu0 0
  %2154 = vmatpush2.bf16.msra.mxu0 0
  %2155 = vmatprep.subr.bf16.mxu0 0
  %2156 = vmatpush2.bf16.msra.mxu0 0
  %2157 = vmatprep.mubr.bf16.mxu0 0
  %2158 = vmatmul.mubr.bf16.gmra.mxu0 %v2067
  %v2159 = vpop.f32.mrf.mxu0
  %v2160 = vadd.f32 %v2107, %v2159
  %v2161 = vpop.f32.mrf.mxu0
  %v2162 = vadd.f32 %v2109, %v2161
  %v2163 = vpop.f32.mrf.mxu0
  %v2164 = vadd.f32 %v2111, %v2163
  %v2165 = vpop.f32.mrf.mxu0
  %v2166 = vadd.f32 %v2113, %v2165
  %2167 = vmatprep.mubr.bf16.mxu0 0
  %2168 = vmatmul.mubr.bf16.gmra.mxu0 %v2070
  %v2169 = vpop.f32.mrf.mxu0
  %v2170 = vadd.f32 %v2117, %v2169
  %v2171 = vpop.f32.mrf.mxu0
  %v2172 = vadd.f32 %v2119, %v2171
  %v2173 = vpop.f32.mrf.mxu0
  %v2174 = vadd.f32 %v2121, %v2173
  %v2175 = vpop.f32.mrf.mxu0
  %v2176 = vadd.f32 %v2123, %v2175
  %2177 = vdwg.mxu0
  %v2178 = vmax.f32 %v2160, 0.0
  %v2179 = vmax.f32 %v2162, 0.0
  %v2180 = vmax.f32 %v2164, 0.0
  %v2181 = vmax.f32 %v2166, 0.0
  %v2182 = vmax.f32 %v2170, 0.0
  %v2183 = vmax.f32 %v2172, 0.0
  %v2184 = vmax.f32 %v2174, 0.0
  %v2185 = vmax.f32 %v2176, 0.0
  %v2186 = vmul.f32 %v2178, %v483
  %v2187 = vmul.f32 %v2179, %v487
  %v2188 = vmul.f32 %v2180, %v483
  %v2189 = vmul.f32 %v2181, %v487
  %v2190 = vmul.f32 %v2182, %v483
  %v2191 = vmul.f32 %v2183, %v487
  %v2192 = vmul.f32 %v2184, %v483
  %v2193 = vmul.f32 %v2185, %v487
  %2194 = vrot.lane.b32.xlu0 %v2186, 11
  %v2195 = vpop.permute.xlu0 %2194
  %2196 = vrot.lane.b32.xlu0 %v2188, 11
  %v2197 = vpop.permute.xlu0 %2196
  %2198 = vrot.lane.b32.xlu0 %v2190, 11
  %v2199 = vpop.permute.xlu0 %2198
  %2200 = vrot.lane.b32.xlu0 %v2192, 11
  %v2201 = vpop.permute.xlu0 %2200
  %2202 = vrot.lane.b32.xlu0 %v2187, 11
  %v2203 = vpop.permute.xlu0 %2202
  %2204 = vrot.lane.b32.xlu0 %v2189, 11
  %v2205 = vpop.permute.xlu0 %2204
  %2206 = vrot.lane.b32.xlu0 %v2191, 11
  %v2207 = vpop.permute.xlu0 %2206
  %2208 = vrot.lane.b32.xlu0 %v2193, 11
  %v2209 = vpop.permute.xlu0 %2208
  %v2210 = vsel %vm76, %v2195, %v2203
  %v2211 = vsel %vm76, %v2197, %v2205
  %v2212 = vsel %vm76, %v2199, %v2207
  %v2213 = vsel %vm76, %v2201, %v2209
  %v2214 = vsel %vm76, %v2203, %v2195
  %v2215 = vsel %vm76, %v2205, %v2197
  %v2216 = vsel %vm76, %v2207, %v2199
  %v2217 = vsel %vm76, %v2209, %v2201
  %2218 = vrot.lane.b32.xlu0 %v2186, 10
  %v2219 = vpop.permute.xlu0 %2218
  %2220 = vrot.lane.b32.xlu0 %v2188, 10
  %v2221 = vpop.permute.xlu0 %2220
  %2222 = vrot.lane.b32.xlu0 %v2190, 10
  %v2223 = vpop.permute.xlu0 %2222
  %2224 = vrot.lane.b32.xlu0 %v2192, 10
  %v2225 = vpop.permute.xlu0 %2224
  %2226 = vrot.lane.b32.xlu0 %v2187, 10
  %v2227 = vpop.permute.xlu0 %2226
  %2228 = vrot.lane.b32.xlu0 %v2189, 10
  %v2229 = vpop.permute.xlu0 %2228
  %2230 = vrot.lane.b32.xlu0 %v2191, 10
  %v2231 = vpop.permute.xlu0 %2230
  %2232 = vrot.lane.b32.xlu0 %v2193, 10
  %v2233 = vpop.permute.xlu0 %2232
  %v2234 = vsel %vm101, %v2219, %v2227
  %v2235 = vsel %vm101, %v2221, %v2229
  %v2236 = vsel %vm101, %v2223, %v2231
  %v2237 = vsel %vm101, %v2225, %v2233
  %v2238 = vsel %vm101, %v2227, %v2219
  %v2239 = vsel %vm101, %v2229, %v2221
  %v2240 = vsel %vm101, %v2231, %v2223
  %v2241 = vsel %vm101, %v2233, %v2225
  %2242 = vrot.lane.b32.xlu0 %v2186, 9
  %v2243 = vpop.permute.xlu0 %2242
  %2244 = vrot.lane.b32.xlu0 %v2188, 9
  %v2245 = vpop.permute.xlu0 %2244
  %2246 = vrot.lane.b32.xlu0 %v2190, 9
  %v2247 = vpop.permute.xlu0 %2246
  %2248 = vrot.lane.b32.xlu0 %v2192, 9
  %v2249 = vpop.permute.xlu0 %2248
  %2250 = vrot.lane.b32.xlu0 %v2187, 9
  %v2251 = vpop.permute.xlu0 %2250
  %2252 = vrot.lane.b32.xlu0 %v2189, 9
  %v2253 = vpop.permute.xlu0 %2252
  %2254 = vrot.lane.b32.xlu0 %v2191, 9
  %v2255 = vpop.permute.xlu0 %2254
  %2256 = vrot.lane.b32.xlu0 %v2193, 9
  %v2257 = vpop.permute.xlu0 %2256
  %v2258 = vsel %vm126, %v2243, %v2251
  %v2259 = vsel %vm126, %v2245, %v2253
  %v2260 = vsel %vm126, %v2247, %v2255
  %v2261 = vsel %vm126, %v2249, %v2257
  %v2262 = vsel %vm126, %v2251, %v2243
  %v2263 = vsel %vm126, %v2253, %v2245
  %v2264 = vsel %vm126, %v2255, %v2247
  %v2265 = vsel %vm126, %v2257, %v2249
  %2266 = vrot.lane.b32.xlu0 %v2186, 1
  %v2267 = vpop.permute.xlu0 %2266
  %2268 = vrot.lane.b32.xlu0 %v2188, 1
  %v2269 = vpop.permute.xlu0 %2268
  %2270 = vrot.lane.b32.xlu0 %v2190, 1
  %v2271 = vpop.permute.xlu0 %2270
  %2272 = vrot.lane.b32.xlu0 %v2192, 1
  %v2273 = vpop.permute.xlu0 %2272
  %2274 = vrot.lane.b32.xlu0 %v2187, 1
  %v2275 = vpop.permute.xlu0 %2274
  %2276 = vrot.lane.b32.xlu0 %v2189, 1
  %v2277 = vpop.permute.xlu0 %2276
  %2278 = vrot.lane.b32.xlu0 %v2191, 1
  %v2279 = vpop.permute.xlu0 %2278
  %2280 = vrot.lane.b32.xlu0 %v2193, 1
  %v2281 = vpop.permute.xlu0 %2280
  %v2282 = vsel %vm151, %v2267, %v2275
  %v2283 = vsel %vm151, %v2269, %v2277
  %v2284 = vsel %vm151, %v2271, %v2279
  %v2285 = vsel %vm151, %v2273, %v2281
  %v2286 = vsel %vm151, %v2275, %v2267
  %v2287 = vsel %vm151, %v2277, %v2269
  %v2288 = vsel %vm151, %v2279, %v2271
  %v2289 = vsel %vm151, %v2281, %v2273
  %2290 = vrot.lane.b32.xlu0 %v2186, 127
  %v2291 = vpop.permute.xlu0 %2290
  %2292 = vrot.lane.b32.xlu0 %v2188, 127
  %v2293 = vpop.permute.xlu0 %2292
  %2294 = vrot.lane.b32.xlu0 %v2190, 127
  %v2295 = vpop.permute.xlu0 %2294
  %2296 = vrot.lane.b32.xlu0 %v2192, 127
  %v2297 = vpop.permute.xlu0 %2296
  %2298 = vrot.lane.b32.xlu0 %v2187, 127
  %v2299 = vpop.permute.xlu0 %2298
  %2300 = vrot.lane.b32.xlu0 %v2189, 127
  %v2301 = vpop.permute.xlu0 %2300
  %2302 = vrot.lane.b32.xlu0 %v2191, 127
  %v2303 = vpop.permute.xlu0 %2302
  %2304 = vrot.lane.b32.xlu0 %v2193, 127
  %v2305 = vpop.permute.xlu0 %2304
  %v2306 = vsel %vm176, %v2291, %v2299
  %v2307 = vsel %vm176, %v2293, %v2301
  %v2308 = vsel %vm176, %v2295, %v2303
  %v2309 = vsel %vm176, %v2297, %v2305
  %v2310 = vsel %vm176, %v2299, %v2291
  %v2311 = vsel %vm176, %v2301, %v2293
  %v2312 = vsel %vm176, %v2303, %v2295
  %v2313 = vsel %vm176, %v2305, %v2297
  %2314 = vrot.lane.b32.xlu0 %v2186, 119
  %v2315 = vpop.permute.xlu0 %2314
  %2316 = vrot.lane.b32.xlu0 %v2188, 119
  %v2317 = vpop.permute.xlu0 %2316
  %2318 = vrot.lane.b32.xlu0 %v2190, 119
  %v2319 = vpop.permute.xlu0 %2318
  %2320 = vrot.lane.b32.xlu0 %v2192, 119
  %v2321 = vpop.permute.xlu0 %2320
  %2322 = vrot.lane.b32.xlu0 %v2187, 119
  %v2323 = vpop.permute.xlu0 %2322
  %2324 = vrot.lane.b32.xlu0 %v2189, 119
  %v2325 = vpop.permute.xlu0 %2324
  %2326 = vrot.lane.b32.xlu0 %v2191, 119
  %v2327 = vpop.permute.xlu0 %2326
  %2328 = vrot.lane.b32.xlu0 %v2193, 119
  %v2329 = vpop.permute.xlu0 %2328
  %v2330 = vsel %vm201, %v2315, %v2323
  %v2331 = vsel %vm201, %v2317, %v2325
  %v2332 = vsel %vm201, %v2319, %v2327
  %v2333 = vsel %vm201, %v2321, %v2329
  %v2334 = vsel %vm201, %v2323, %v2315
  %v2335 = vsel %vm201, %v2325, %v2317
  %v2336 = vsel %vm201, %v2327, %v2319
  %v2337 = vsel %vm201, %v2329, %v2321
  %2338 = vrot.lane.b32.xlu0 %v2186, 118
  %v2339 = vpop.permute.xlu0 %2338
  %2340 = vrot.lane.b32.xlu0 %v2188, 118
  %v2341 = vpop.permute.xlu0 %2340
  %2342 = vrot.lane.b32.xlu0 %v2190, 118
  %v2343 = vpop.permute.xlu0 %2342
  %2344 = vrot.lane.b32.xlu0 %v2192, 118
  %v2345 = vpop.permute.xlu0 %2344
  %2346 = vrot.lane.b32.xlu0 %v2187, 118
  %v2347 = vpop.permute.xlu0 %2346
  %2348 = vrot.lane.b32.xlu0 %v2189, 118
  %v2349 = vpop.permute.xlu0 %2348
  %2350 = vrot.lane.b32.xlu0 %v2191, 118
  %v2351 = vpop.permute.xlu0 %2350
  %2352 = vrot.lane.b32.xlu0 %v2193, 118
  %v2353 = vpop.permute.xlu0 %2352
  %v2354 = vsel %vm226, %v2339, %v2347
  %v2355 = vsel %vm226, %v2341, %v2349
  %v2356 = vsel %vm226, %v2343, %v2351
  %v2357 = vsel %vm226, %v2345, %v2353
  %v2358 = vsel %vm226, %v2347, %v2339
  %v2359 = vsel %vm226, %v2349, %v2341
  %v2360 = vsel %vm226, %v2351, %v2343
  %v2361 = vsel %vm226, %v2353, %v2345
  %2362 = vrot.lane.b32.xlu0 %v2186, 117
  %v2363 = vpop.permute.xlu0 %2362
  %2364 = vrot.lane.b32.xlu0 %v2188, 117
  %v2365 = vpop.permute.xlu0 %2364
  %2366 = vrot.lane.b32.xlu0 %v2190, 117
  %v2367 = vpop.permute.xlu0 %2366
  %2368 = vrot.lane.b32.xlu0 %v2192, 117
  %v2369 = vpop.permute.xlu0 %2368
  %2370 = vrot.lane.b32.xlu0 %v2187, 117
  %v2371 = vpop.permute.xlu0 %2370
  %2372 = vrot.lane.b32.xlu0 %v2189, 117
  %v2373 = vpop.permute.xlu0 %2372
  %2374 = vrot.lane.b32.xlu0 %v2191, 117
  %v2375 = vpop.permute.xlu0 %2374
  %2376 = vrot.lane.b32.xlu0 %v2193, 117
  %v2377 = vpop.permute.xlu0 %2376
  %v2378 = vsel %vm251, %v2363, %v2371
  %v2379 = vsel %vm251, %v2365, %v2373
  %v2380 = vsel %vm251, %v2367, %v2375
  %v2381 = vsel %vm251, %v2369, %v2377
  %v2382 = vsel %vm251, %v2371, %v2363
  %v2383 = vsel %vm251, %v2373, %v2365
  %v2384 = vsel %vm251, %v2375, %v2367
  %v2385 = vsel %vm251, %v2377, %v2369
  %v2386 = vpack.c.bf16 %v2215, %v2214
  %v2387 = vpack.c.bf16 %v2211, %v2210
  %v2388 = vpack.c.bf16 %v2217, %v2216
  %v2389 = vpack.c.bf16 %v2213, %v2212
  %v2390 = vpack.c.bf16 %v2239, %v2238
  %v2391 = vpack.c.bf16 %v2235, %v2234
  %v2392 = vpack.c.bf16 %v2241, %v2240
  %v2393 = vpack.c.bf16 %v2237, %v2236
  %v2394 = vpack.c.bf16 %v2263, %v2262
  %v2395 = vpack.c.bf16 %v2259, %v2258
  %v2396 = vpack.c.bf16 %v2265, %v2264
  %v2397 = vpack.c.bf16 %v2261, %v2260
  %v2398 = vpack.c.bf16 %v2287, %v2286
  %v2399 = vpack.c.bf16 %v2283, %v2282
  %v2400 = vpack.c.bf16 %v2289, %v2288
  %v2401 = vpack.c.bf16 %v2285, %v2284
  %v2402 = vpack.c.bf16 %v2188, %v2186
  %v2403 = vpack.c.bf16 %v2189, %v2187
  %v2404 = vpack.c.bf16 %v2192, %v2190
  %v2405 = vpack.c.bf16 %v2193, %v2191
  %v2406 = vpack.c.bf16 %v2307, %v2306
  %v2407 = vpack.c.bf16 %v2311, %v2310
  %v2408 = vpack.c.bf16 %v2309, %v2308
  %v2409 = vpack.c.bf16 %v2313, %v2312
  %v2410 = vpack.c.bf16 %v2331, %v2330
  %v2411 = vpack.c.bf16 %v2335, %v2334
  %v2412 = vpack.c.bf16 %v2333, %v2332
  %v2413 = vpack.c.bf16 %v2337, %v2336
  %v2414 = vpack.c.bf16 %v2355, %v2354
  %v2415 = vpack.c.bf16 %v2359, %v2358
  %v2416 = vpack.c.bf16 %v2357, %v2356
  %v2417 = vpack.c.bf16 %v2361, %v2360
  %v2418 = vpack.c.bf16 %v2379, %v2378
  %v2419 = vpack.c.bf16 %v2383, %v2382
  %v2420 = vpack.c.bf16 %v2381, %v2380
  %v2421 = vpack.c.bf16 %v2385, %v2384
  %s2422 = scalar_lea.vmem %s3, 240
  %v2423 = vld [vmem:[%s2422] sm:$0xff]
  %v2424 = vld [vmem:[%s2422 + $0x8] sm:$0xf]
  %v2425 = vld [vmem:[%s2422 + $0xc] sm:$0xff]
  %v2426 = vld [vmem:[%s2422 + $0x14] sm:$0xf]
  %v2427 = vld [vmem:[%s2422 + $0x18] sm:$0xff]
  %v2428 = vld [vmem:[%s2422 + $0x20] sm:$0xf]
  %v2429 = vld [vmem:[%s2422 + $0x24] sm:$0xff]
  %v2430 = vld [vmem:[%s2422 + $0x2c] sm:$0xf]
  %s2431 = scalar_lea.vmem %s4, 160
  %v2432 = vld [vmem:[%s2431] sm:$0xff]
  %v2433 = vld [vmem:[%s2431 + $0x8] sm:$0xff]
  %v2434 = vld [vmem:[%s2431 + $0x10] sm:$0xff]
  %v2435 = vld [vmem:[%s2431 + $0x18] sm:$0xff]
  %2437 = vset.pattern.permute.xlu0 0
  %2438 = vperm.xlu0 %2437, %v2432
  %v2439 = vpop.permute.xlu0 %2438
  %2442 = vset.pattern.permute.xlu0 0
  %2443 = vperm.xlu0 %2442, %v2433
  %v2444 = vpop.permute.xlu0 %2443
  %2447 = vset.pattern.permute.xlu0 0
  %2448 = vperm.xlu0 %2447, %v2434
  %v2449 = vpop.permute.xlu0 %2448
  %2452 = vset.pattern.permute.xlu0 0
  %2453 = vperm.xlu0 %2452, %v2435
  %v2454 = vpop.permute.xlu0 %2453
  %v2464 = vunpack.c.l.b16 %v2423
  %v2465 = vunpack.c.h.b16 %v2423
  %v2466 = vunpack.c.l.b16 %v2424
  %v2467 = vunpack.c.l.b16 %v2425
  %v2468 = vunpack.c.h.b16 %v2425
  %v2469 = vunpack.c.l.b16 %v2426
  %v2470 = vunpack.c.l.b16 %v2427
  %v2471 = vunpack.c.h.b16 %v2427
  %v2472 = vunpack.c.l.b16 %v2428
  %v2473 = vunpack.c.l.b16 %v2429
  %v2474 = vunpack.c.h.b16 %v2429
  %v2475 = vunpack.c.l.b16 %v2430
  %v2476 = vpack.c.b16 %v2467, %v2464
  %v2477 = vpack.c.b16 %v2468, %v2465
  %v2478 = vpack.c.b16 %v2469, %v2466
  %v2479 = vpack.c.b16 %v2473, %v2470
  %v2480 = vpack.c.b16 %v2474, %v2471
  %v2481 = vpack.c.b16 %v2475, %v2472
  %v2487 = vsel %vm358, %v2478, 0
  %v2490 = vsel %vm358, %v2481, 0
  %2492 = vmatprep.subr.bf16.mxu0 %v2401
  %2493 = vmatpush1.bf16.msra.mxu0 %v2400
  %2494 = vmatprep.subr.bf16.mxu0 %v2399
  %2495 = vmatpush1.bf16.msra.mxu0 %v2398
  %2496 = vmatprep.subr.bf16.mxu0 %v2397
  %2497 = vmatpush1.bf16.msra.mxu0 %v2396
  %2498 = vmatprep.subr.bf16.mxu0 %v2395
  %2499 = vmatpush1.bf16.msra.mxu0 %v2394
  %2500 = vmatprep.subr.bf16.mxu0 %v2393
  %2501 = vmatpush1.bf16.msra.mxu0 %v2392
  %2502 = vmatprep.subr.bf16.mxu0 %v2391
  %2503 = vmatpush1.bf16.msra.mxu0 %v2390
  %2504 = vmatprep.subr.bf16.mxu0 %v2389
  %2505 = vmatpush1.bf16.msra.mxu0 %v2388
  %2506 = vmatprep.subr.bf16.mxu0 %v2387
  %2507 = vmatpush1.bf16.msra.mxu0 %v2386
  %2508 = vmatprep.subr.bf16.mxu0 %v2417
  %2509 = vmatpush2.bf16.msra.mxu0 %v2416
  %2510 = vmatprep.subr.bf16.mxu0 %v2415
  %2511 = vmatpush2.bf16.msra.mxu0 %v2414
  %2512 = vmatprep.subr.bf16.mxu0 %v2413
  %2513 = vmatpush2.bf16.msra.mxu0 %v2412
  %2514 = vmatprep.subr.bf16.mxu0 %v2411
  %2515 = vmatpush2.bf16.msra.mxu0 %v2410
  %2516 = vmatprep.subr.bf16.mxu0 %v2409
  %2517 = vmatpush2.bf16.msra.mxu0 %v2408
  %2518 = vmatprep.subr.bf16.mxu0 %v2407
  %2519 = vmatpush2.bf16.msra.mxu0 %v2406
  %2520 = vmatprep.subr.bf16.mxu0 %v2405
  %2521 = vmatpush2.bf16.msra.mxu0 %v2404
  %2522 = vmatprep.subr.bf16.mxu0 %v2403
  %2523 = vmatpush2.bf16.msra.mxu0 %v2402
  %2524 = vmatprep.mubr.bf16.mxu0 %v2477
  %2525 = vmatmul.mubr.bf16.gmra.mxu0 %v2476
  %v2526 = vpop.f32.mrf.mxu0
  %v2527 = vadd.f32 %v2439, %v2526
  %v2528 = vpop.f32.mrf.mxu0
  %v2529 = vadd.f32 %v2439, %v2528
  %v2530 = vpop.f32.mrf.mxu0
  %v2531 = vadd.f32 %v2444, %v2530
  %v2532 = vpop.f32.mrf.mxu0
  %v2533 = vadd.f32 %v2444, %v2532
  %2534 = vmatprep.mubr.bf16.mxu0 %v2480
  %2535 = vmatmul.mubr.bf16.gmra.mxu0 %v2479
  %v2536 = vpop.f32.mrf.mxu0
  %v2537 = vadd.f32 %v2449, %v2536
  %v2538 = vpop.f32.mrf.mxu0
  %v2539 = vadd.f32 %v2449, %v2538
  %v2540 = vpop.f32.mrf.mxu0
  %v2541 = vadd.f32 %v2454, %v2540
  %v2542 = vpop.f32.mrf.mxu0
  %v2543 = vadd.f32 %v2454, %v2542
  %2544 = vdwg.mxu0
  %2545 = vmatprep.subr.bf16.mxu0 0
  %2546 = vmatpush1.bf16.msra.mxu0 0
  %2547 = vmatprep.subr.bf16.mxu0 0
  %2548 = vmatpush1.bf16.msra.mxu0 0
  %2549 = vmatprep.subr.bf16.mxu0 0
  %2550 = vmatpush1.bf16.msra.mxu0 0
  %2551 = vmatprep.subr.bf16.mxu0 0
  %2552 = vmatpush1.bf16.msra.mxu0 0
  %2553 = vmatprep.subr.bf16.mxu0 0
  %2554 = vmatpush1.bf16.msra.mxu0 0
  %2555 = vmatprep.subr.bf16.mxu0 0
  %2556 = vmatpush1.bf16.msra.mxu0 0
  %2557 = vmatprep.subr.bf16.mxu0 %v2421
  %2558 = vmatpush1.bf16.msra.mxu0 %v2420
  %2559 = vmatprep.subr.bf16.mxu0 %v2419
  %2560 = vmatpush1.bf16.msra.mxu0 %v2418
  %2561 = vmatprep.subr.bf16.mxu0 0
  %2562 = vmatpush2.bf16.msra.mxu0 0
  %2563 = vmatprep.subr.bf16.mxu0 0
  %2564 = vmatpush2.bf16.msra.mxu0 0
  %2565 = vmatprep.subr.bf16.mxu0 0
  %2566 = vmatpush2.bf16.msra.mxu0 0
  %2567 = vmatprep.subr.bf16.mxu0 0
  %2568 = vmatpush2.bf16.msra.mxu0 0
  %2569 = vmatprep.subr.bf16.mxu0 0
  %2570 = vmatpush2.bf16.msra.mxu0 0
  %2571 = vmatprep.subr.bf16.mxu0 0
  %2572 = vmatpush2.bf16.msra.mxu0 0
  %2573 = vmatprep.subr.bf16.mxu0 0
  %2574 = vmatpush2.bf16.msra.mxu0 0
  %2575 = vmatprep.subr.bf16.mxu0 0
  %2576 = vmatpush2.bf16.msra.mxu0 0
  %2577 = vmatprep.mubr.bf16.mxu0 0
  %2578 = vmatmul.mubr.bf16.gmra.mxu0 %v2487
  %v2579 = vpop.f32.mrf.mxu0
  %v2580 = vadd.f32 %v2527, %v2579
  %v2581 = vpop.f32.mrf.mxu0
  %v2582 = vadd.f32 %v2529, %v2581
  %v2583 = vpop.f32.mrf.mxu0
  %v2584 = vadd.f32 %v2531, %v2583
  %v2585 = vpop.f32.mrf.mxu0
  %v2586 = vadd.f32 %v2533, %v2585
  %2587 = vmatprep.mubr.bf16.mxu0 0
  %2588 = vmatmul.mubr.bf16.gmra.mxu0 %v2490
  %v2589 = vpop.f32.mrf.mxu0
  %v2590 = vadd.f32 %v2537, %v2589
  %v2591 = vpop.f32.mrf.mxu0
  %v2592 = vadd.f32 %v2539, %v2591
  %v2593 = vpop.f32.mrf.mxu0
  %v2594 = vadd.f32 %v2541, %v2593
  %v2595 = vpop.f32.mrf.mxu0
  %v2596 = vadd.f32 %v2543, %v2595
  %2597 = vdwg.mxu0
  %v2598 = vadd.f32 %v2580, %v1766
  %v2599 = vadd.f32 %v2582, %v1767
  %v2600 = vadd.f32 %v2584, %v1768
  %v2601 = vadd.f32 %v2586, %v1769
  %v2602 = vadd.f32 %v2590, %v1770
  %v2603 = vadd.f32 %v2592, %v1771
  %v2604 = vadd.f32 %v2594, %v1772
  %v2605 = vadd.f32 %v2596, %v1773
  %v2606 = vmax.f32 %v2598, 0.0
  %v2607 = vmax.f32 %v2599, 0.0
  %v2608 = vmax.f32 %v2600, 0.0
  %v2609 = vmax.f32 %v2601, 0.0
  %v2610 = vmax.f32 %v2602, 0.0
  %v2611 = vmax.f32 %v2603, 0.0
  %v2612 = vmax.f32 %v2604, 0.0
  %v2613 = vmax.f32 %v2605, 0.0
  %v2614 = vmul.f32 %v2606, %v483
  %v2615 = vmul.f32 %v2607, %v487
  %v2616 = vmul.f32 %v2608, %v483
  %v2617 = vmul.f32 %v2609, %v487
  %v2618 = vmul.f32 %v2610, %v483
  %v2619 = vmul.f32 %v2611, %v487
  %v2620 = vmul.f32 %v2612, %v483
  %v2621 = vmul.f32 %v2613, %v487
  %2622 = vrot.lane.b32.xlu0 %v2614, 11
  %v2623 = vpop.permute.xlu0 %2622
  %2624 = vrot.lane.b32.xlu0 %v2616, 11
  %v2625 = vpop.permute.xlu0 %2624
  %2626 = vrot.lane.b32.xlu0 %v2618, 11
  %v2627 = vpop.permute.xlu0 %2626
  %2628 = vrot.lane.b32.xlu0 %v2620, 11
  %v2629 = vpop.permute.xlu0 %2628
  %2630 = vrot.lane.b32.xlu0 %v2615, 11
  %v2631 = vpop.permute.xlu0 %2630
  %2632 = vrot.lane.b32.xlu0 %v2617, 11
  %v2633 = vpop.permute.xlu0 %2632
  %2634 = vrot.lane.b32.xlu0 %v2619, 11
  %v2635 = vpop.permute.xlu0 %2634
  %2636 = vrot.lane.b32.xlu0 %v2621, 11
  %v2637 = vpop.permute.xlu0 %2636
  %v2638 = vsel %vm76, %v2623, %v2631
  %v2639 = vsel %vm76, %v2625, %v2633
  %v2640 = vsel %vm76, %v2627, %v2635
  %v2641 = vsel %vm76, %v2629, %v2637
  %v2642 = vsel %vm76, %v2631, %v2623
  %v2643 = vsel %vm76, %v2633, %v2625
  %v2644 = vsel %vm76, %v2635, %v2627
  %v2645 = vsel %vm76, %v2637, %v2629
  %2646 = vrot.lane.b32.xlu0 %v2614, 10
  %v2647 = vpop.permute.xlu0 %2646
  %2648 = vrot.lane.b32.xlu0 %v2616, 10
  %v2649 = vpop.permute.xlu0 %2648
  %2650 = vrot.lane.b32.xlu0 %v2618, 10
  %v2651 = vpop.permute.xlu0 %2650
  %2652 = vrot.lane.b32.xlu0 %v2620, 10
  %v2653 = vpop.permute.xlu0 %2652
  %2654 = vrot.lane.b32.xlu0 %v2615, 10
  %v2655 = vpop.permute.xlu0 %2654
  %2656 = vrot.lane.b32.xlu0 %v2617, 10
  %v2657 = vpop.permute.xlu0 %2656
  %2658 = vrot.lane.b32.xlu0 %v2619, 10
  %v2659 = vpop.permute.xlu0 %2658
  %2660 = vrot.lane.b32.xlu0 %v2621, 10
  %v2661 = vpop.permute.xlu0 %2660
  %v2662 = vsel %vm101, %v2647, %v2655
  %v2663 = vsel %vm101, %v2649, %v2657
  %v2664 = vsel %vm101, %v2651, %v2659
  %v2665 = vsel %vm101, %v2653, %v2661
  %v2666 = vsel %vm101, %v2655, %v2647
  %v2667 = vsel %vm101, %v2657, %v2649
  %v2668 = vsel %vm101, %v2659, %v2651
  %v2669 = vsel %vm101, %v2661, %v2653
  %2670 = vrot.lane.b32.xlu0 %v2614, 9
  %v2671 = vpop.permute.xlu0 %2670
  %2672 = vrot.lane.b32.xlu0 %v2616, 9
  %v2673 = vpop.permute.xlu0 %2672
  %2674 = vrot.lane.b32.xlu0 %v2618, 9
  %v2675 = vpop.permute.xlu0 %2674
  %2676 = vrot.lane.b32.xlu0 %v2620, 9
  %v2677 = vpop.permute.xlu0 %2676
  %2678 = vrot.lane.b32.xlu0 %v2615, 9
  %v2679 = vpop.permute.xlu0 %2678
  %2680 = vrot.lane.b32.xlu0 %v2617, 9
  %v2681 = vpop.permute.xlu0 %2680
  %2682 = vrot.lane.b32.xlu0 %v2619, 9
  %v2683 = vpop.permute.xlu0 %2682
  %2684 = vrot.lane.b32.xlu0 %v2621, 9
  %v2685 = vpop.permute.xlu0 %2684
  %v2686 = vsel %vm126, %v2671, %v2679
  %v2687 = vsel %vm126, %v2673, %v2681
  %v2688 = vsel %vm126, %v2675, %v2683
  %v2689 = vsel %vm126, %v2677, %v2685
  %v2690 = vsel %vm126, %v2679, %v2671
  %v2691 = vsel %vm126, %v2681, %v2673
  %v2692 = vsel %vm126, %v2683, %v2675
  %v2693 = vsel %vm126, %v2685, %v2677
  %2694 = vrot.lane.b32.xlu0 %v2614, 1
  %v2695 = vpop.permute.xlu0 %2694
  %2696 = vrot.lane.b32.xlu0 %v2616, 1
  %v2697 = vpop.permute.xlu0 %2696
  %2698 = vrot.lane.b32.xlu0 %v2618, 1
  %v2699 = vpop.permute.xlu0 %2698
  %2700 = vrot.lane.b32.xlu0 %v2620, 1
  %v2701 = vpop.permute.xlu0 %2700
  %2702 = vrot.lane.b32.xlu0 %v2615, 1
  %v2703 = vpop.permute.xlu0 %2702
  %2704 = vrot.lane.b32.xlu0 %v2617, 1
  %v2705 = vpop.permute.xlu0 %2704
  %2706 = vrot.lane.b32.xlu0 %v2619, 1
  %v2707 = vpop.permute.xlu0 %2706
  %2708 = vrot.lane.b32.xlu0 %v2621, 1
  %v2709 = vpop.permute.xlu0 %2708
  %v2710 = vsel %vm151, %v2695, %v2703
  %v2711 = vsel %vm151, %v2697, %v2705
  %v2712 = vsel %vm151, %v2699, %v2707
  %v2713 = vsel %vm151, %v2701, %v2709
  %v2714 = vsel %vm151, %v2703, %v2695
  %v2715 = vsel %vm151, %v2705, %v2697
  %v2716 = vsel %vm151, %v2707, %v2699
  %v2717 = vsel %vm151, %v2709, %v2701
  %2718 = vrot.lane.b32.xlu0 %v2614, 127
  %v2719 = vpop.permute.xlu0 %2718
  %2720 = vrot.lane.b32.xlu0 %v2616, 127
  %v2721 = vpop.permute.xlu0 %2720
  %2722 = vrot.lane.b32.xlu0 %v2618, 127
  %v2723 = vpop.permute.xlu0 %2722
  %2724 = vrot.lane.b32.xlu0 %v2620, 127
  %v2725 = vpop.permute.xlu0 %2724
  %2726 = vrot.lane.b32.xlu0 %v2615, 127
  %v2727 = vpop.permute.xlu0 %2726
  %2728 = vrot.lane.b32.xlu0 %v2617, 127
  %v2729 = vpop.permute.xlu0 %2728
  %2730 = vrot.lane.b32.xlu0 %v2619, 127
  %v2731 = vpop.permute.xlu0 %2730
  %2732 = vrot.lane.b32.xlu0 %v2621, 127
  %v2733 = vpop.permute.xlu0 %2732
  %v2734 = vsel %vm176, %v2719, %v2727
  %v2735 = vsel %vm176, %v2721, %v2729
  %v2736 = vsel %vm176, %v2723, %v2731
  %v2737 = vsel %vm176, %v2725, %v2733
  %v2738 = vsel %vm176, %v2727, %v2719
  %v2739 = vsel %vm176, %v2729, %v2721
  %v2740 = vsel %vm176, %v2731, %v2723
  %v2741 = vsel %vm176, %v2733, %v2725
  %2742 = vrot.lane.b32.xlu0 %v2614, 119
  %v2743 = vpop.permute.xlu0 %2742
  %2744 = vrot.lane.b32.xlu0 %v2616, 119
  %v2745 = vpop.permute.xlu0 %2744
  %2746 = vrot.lane.b32.xlu0 %v2618, 119
  %v2747 = vpop.permute.xlu0 %2746
  %2748 = vrot.lane.b32.xlu0 %v2620, 119
  %v2749 = vpop.permute.xlu0 %2748
  %2750 = vrot.lane.b32.xlu0 %v2615, 119
  %v2751 = vpop.permute.xlu0 %2750
  %2752 = vrot.lane.b32.xlu0 %v2617, 119
  %v2753 = vpop.permute.xlu0 %2752
  %2754 = vrot.lane.b32.xlu0 %v2619, 119
  %v2755 = vpop.permute.xlu0 %2754
  %2756 = vrot.lane.b32.xlu0 %v2621, 119
  %v2757 = vpop.permute.xlu0 %2756
  %v2758 = vsel %vm201, %v2743, %v2751
  %v2759 = vsel %vm201, %v2745, %v2753
  %v2760 = vsel %vm201, %v2747, %v2755
  %v2761 = vsel %vm201, %v2749, %v2757
  %v2762 = vsel %vm201, %v2751, %v2743
  %v2763 = vsel %vm201, %v2753, %v2745
  %v2764 = vsel %vm201, %v2755, %v2747
  %v2765 = vsel %vm201, %v2757, %v2749
  %2766 = vrot.lane.b32.xlu0 %v2614, 118
  %v2767 = vpop.permute.xlu0 %2766
  %2768 = vrot.lane.b32.xlu0 %v2616, 118
  %v2769 = vpop.permute.xlu0 %2768
  %2770 = vrot.lane.b32.xlu0 %v2618, 118
  %v2771 = vpop.permute.xlu0 %2770
  %2772 = vrot.lane.b32.xlu0 %v2620, 118
  %v2773 = vpop.permute.xlu0 %2772
  %2774 = vrot.lane.b32.xlu0 %v2615, 118
  %v2775 = vpop.permute.xlu0 %2774
  %2776 = vrot.lane.b32.xlu0 %v2617, 118
  %v2777 = vpop.permute.xlu0 %2776
  %2778 = vrot.lane.b32.xlu0 %v2619, 118
  %v2779 = vpop.permute.xlu0 %2778
  %2780 = vrot.lane.b32.xlu0 %v2621, 118
  %v2781 = vpop.permute.xlu0 %2780
  %v2782 = vsel %vm226, %v2767, %v2775
  %v2783 = vsel %vm226, %v2769, %v2777
  %v2784 = vsel %vm226, %v2771, %v2779
  %v2785 = vsel %vm226, %v2773, %v2781
  %v2786 = vsel %vm226, %v2775, %v2767
  %v2787 = vsel %vm226, %v2777, %v2769
  %v2788 = vsel %vm226, %v2779, %v2771
  %v2789 = vsel %vm226, %v2781, %v2773
  %2790 = vrot.lane.b32.xlu0 %v2614, 117
  %v2791 = vpop.permute.xlu0 %2790
  %2792 = vrot.lane.b32.xlu0 %v2616, 117
  %v2793 = vpop.permute.xlu0 %2792
  %2794 = vrot.lane.b32.xlu0 %v2618, 117
  %v2795 = vpop.permute.xlu0 %2794
  %2796 = vrot.lane.b32.xlu0 %v2620, 117
  %v2797 = vpop.permute.xlu0 %2796
  %2798 = vrot.lane.b32.xlu0 %v2615, 117
  %v2799 = vpop.permute.xlu0 %2798
  %2800 = vrot.lane.b32.xlu0 %v2617, 117
  %v2801 = vpop.permute.xlu0 %2800
  %2802 = vrot.lane.b32.xlu0 %v2619, 117
  %v2803 = vpop.permute.xlu0 %2802
  %2804 = vrot.lane.b32.xlu0 %v2621, 117
  %v2805 = vpop.permute.xlu0 %2804
  %v2806 = vsel %vm251, %v2791, %v2799
  %v2807 = vsel %vm251, %v2793, %v2801
  %v2808 = vsel %vm251, %v2795, %v2803
  %v2809 = vsel %vm251, %v2797, %v2805
  %v2810 = vsel %vm251, %v2799, %v2791
  %v2811 = vsel %vm251, %v2801, %v2793
  %v2812 = vsel %vm251, %v2803, %v2795
  %v2813 = vsel %vm251, %v2805, %v2797
  %v2814 = vpack.c.bf16 %v2643, %v2642
  %v2815 = vpack.c.bf16 %v2639, %v2638
  %v2816 = vpack.c.bf16 %v2645, %v2644
  %v2817 = vpack.c.bf16 %v2641, %v2640
  %v2818 = vpack.c.bf16 %v2667, %v2666
  %v2819 = vpack.c.bf16 %v2663, %v2662
  %v2820 = vpack.c.bf16 %v2669, %v2668
  %v2821 = vpack.c.bf16 %v2665, %v2664
  %v2822 = vpack.c.bf16 %v2691, %v2690
  %v2823 = vpack.c.bf16 %v2687, %v2686
  %v2824 = vpack.c.bf16 %v2693, %v2692
  %v2825 = vpack.c.bf16 %v2689, %v2688
  %v2826 = vpack.c.bf16 %v2715, %v2714
  %v2827 = vpack.c.bf16 %v2711, %v2710
  %v2828 = vpack.c.bf16 %v2717, %v2716
  %v2829 = vpack.c.bf16 %v2713, %v2712
  %v2830 = vpack.c.bf16 %v2616, %v2614
  %v2831 = vpack.c.bf16 %v2617, %v2615
  %v2832 = vpack.c.bf16 %v2620, %v2618
  %v2833 = vpack.c.bf16 %v2621, %v2619
  %v2834 = vpack.c.bf16 %v2735, %v2734
  %v2835 = vpack.c.bf16 %v2739, %v2738
  %v2836 = vpack.c.bf16 %v2737, %v2736
  %v2837 = vpack.c.bf16 %v2741, %v2740
  %v2838 = vpack.c.bf16 %v2759, %v2758
  %v2839 = vpack.c.bf16 %v2763, %v2762
  %v2840 = vpack.c.bf16 %v2761, %v2760
  %v2841 = vpack.c.bf16 %v2765, %v2764
  %v2842 = vpack.c.bf16 %v2783, %v2782
  %v2843 = vpack.c.bf16 %v2787, %v2786
  %v2844 = vpack.c.bf16 %v2785, %v2784
  %v2845 = vpack.c.bf16 %v2789, %v2788
  %v2846 = vpack.c.bf16 %v2807, %v2806
  %v2847 = vpack.c.bf16 %v2811, %v2810
  %v2848 = vpack.c.bf16 %v2809, %v2808
  %v2849 = vpack.c.bf16 %v2813, %v2812
  %s2850 = scalar_lea.vmem %s3, 288
  %v2851 = vld [vmem:[%s2850] sm:$0xff]
  %v2852 = vld [vmem:[%s2850 + $0x8] sm:$0xf]
  %v2853 = vld [vmem:[%s2850 + $0xc] sm:$0xff]
  %v2854 = vld [vmem:[%s2850 + $0x14] sm:$0xf]
  %v2855 = vld [vmem:[%s2850 + $0x18] sm:$0xff]
  %v2856 = vld [vmem:[%s2850 + $0x20] sm:$0xf]
  %v2857 = vld [vmem:[%s2850 + $0x24] sm:$0xff]
  %v2858 = vld [vmem:[%s2850 + $0x2c] sm:$0xf]
  %s2859 = scalar_lea.vmem %s4, 192
  %v2860 = vld [vmem:[%s2859] sm:$0xff]
  %v2861 = vld [vmem:[%s2859 + $0x8] sm:$0xff]
  %v2862 = vld [vmem:[%s2859 + $0x10] sm:$0xff]
  %v2863 = vld [vmem:[%s2859 + $0x18] sm:$0xff]
  %2865 = vset.pattern.permute.xlu0 0
  %2866 = vperm.xlu0 %2865, %v2860
  %v2867 = vpop.permute.xlu0 %2866
  %2870 = vset.pattern.permute.xlu0 0
  %2871 = vperm.xlu0 %2870, %v2861
  %v2872 = vpop.permute.xlu0 %2871
  %2875 = vset.pattern.permute.xlu0 0
  %2876 = vperm.xlu0 %2875, %v2862
  %v2877 = vpop.permute.xlu0 %2876
  %2880 = vset.pattern.permute.xlu0 0
  %2881 = vperm.xlu0 %2880, %v2863
  %v2882 = vpop.permute.xlu0 %2881
  %v2892 = vunpack.c.l.b16 %v2851
  %v2893 = vunpack.c.h.b16 %v2851
  %v2894 = vunpack.c.l.b16 %v2852
  %v2895 = vunpack.c.l.b16 %v2853
  %v2896 = vunpack.c.h.b16 %v2853
  %v2897 = vunpack.c.l.b16 %v2854
  %v2898 = vunpack.c.l.b16 %v2855
  %v2899 = vunpack.c.h.b16 %v2855
  %v2900 = vunpack.c.l.b16 %v2856
  %v2901 = vunpack.c.l.b16 %v2857
  %v2902 = vunpack.c.h.b16 %v2857
  %v2903 = vunpack.c.l.b16 %v2858
  %v2904 = vpack.c.b16 %v2895, %v2892
  %v2905 = vpack.c.b16 %v2896, %v2893
  %v2906 = vpack.c.b16 %v2897, %v2894
  %v2907 = vpack.c.b16 %v2901, %v2898
  %v2908 = vpack.c.b16 %v2902, %v2899
  %v2909 = vpack.c.b16 %v2903, %v2900
  %v2915 = vsel %vm358, %v2906, 0
  %v2918 = vsel %vm358, %v2909, 0
  %2920 = vmatprep.subr.bf16.mxu0 %v2829
  %2921 = vmatpush1.bf16.msra.mxu0 %v2828
  %2922 = vmatprep.subr.bf16.mxu0 %v2827
  %2923 = vmatpush1.bf16.msra.mxu0 %v2826
  %2924 = vmatprep.subr.bf16.mxu0 %v2825
  %2925 = vmatpush1.bf16.msra.mxu0 %v2824
  %2926 = vmatprep.subr.bf16.mxu0 %v2823
  %2927 = vmatpush1.bf16.msra.mxu0 %v2822
  %2928 = vmatprep.subr.bf16.mxu0 %v2821
  %2929 = vmatpush1.bf16.msra.mxu0 %v2820
  %2930 = vmatprep.subr.bf16.mxu0 %v2819
  %2931 = vmatpush1.bf16.msra.mxu0 %v2818
  %2932 = vmatprep.subr.bf16.mxu0 %v2817
  %2933 = vmatpush1.bf16.msra.mxu0 %v2816
  %2934 = vmatprep.subr.bf16.mxu0 %v2815
  %2935 = vmatpush1.bf16.msra.mxu0 %v2814
  %2936 = vmatprep.subr.bf16.mxu0 %v2845
  %2937 = vmatpush2.bf16.msra.mxu0 %v2844
  %2938 = vmatprep.subr.bf16.mxu0 %v2843
  %2939 = vmatpush2.bf16.msra.mxu0 %v2842
  %2940 = vmatprep.subr.bf16.mxu0 %v2841
  %2941 = vmatpush2.bf16.msra.mxu0 %v2840
  %2942 = vmatprep.subr.bf16.mxu0 %v2839
  %2943 = vmatpush2.bf16.msra.mxu0 %v2838
  %2944 = vmatprep.subr.bf16.mxu0 %v2837
  %2945 = vmatpush2.bf16.msra.mxu0 %v2836
  %2946 = vmatprep.subr.bf16.mxu0 %v2835
  %2947 = vmatpush2.bf16.msra.mxu0 %v2834
  %2948 = vmatprep.subr.bf16.mxu0 %v2833
  %2949 = vmatpush2.bf16.msra.mxu0 %v2832
  %2950 = vmatprep.subr.bf16.mxu0 %v2831
  %2951 = vmatpush2.bf16.msra.mxu0 %v2830
  %2952 = vmatprep.mubr.bf16.mxu0 %v2905
  %2953 = vmatmul.mubr.bf16.gmra.mxu0 %v2904
  %v2954 = vpop.f32.mrf.mxu0
  %v2955 = vadd.f32 %v2867, %v2954
  %v2956 = vpop.f32.mrf.mxu0
  %v2957 = vadd.f32 %v2867, %v2956
  %v2958 = vpop.f32.mrf.mxu0
  %v2959 = vadd.f32 %v2872, %v2958
  %v2960 = vpop.f32.mrf.mxu0
  %v2961 = vadd.f32 %v2872, %v2960
  %2962 = vmatprep.mubr.bf16.mxu0 %v2908
  %2963 = vmatmul.mubr.bf16.gmra.mxu0 %v2907
  %v2964 = vpop.f32.mrf.mxu0
  %v2965 = vadd.f32 %v2877, %v2964
  %v2966 = vpop.f32.mrf.mxu0
  %v2967 = vadd.f32 %v2877, %v2966
  %v2968 = vpop.f32.mrf.mxu0
  %v2969 = vadd.f32 %v2882, %v2968
  %v2970 = vpop.f32.mrf.mxu0
  %v2971 = vadd.f32 %v2882, %v2970
  %2972 = vdwg.mxu0
  %2973 = vmatprep.subr.bf16.mxu0 0
  %2974 = vmatpush1.bf16.msra.mxu0 0
  %2975 = vmatprep.subr.bf16.mxu0 0
  %2976 = vmatpush1.bf16.msra.mxu0 0
  %2977 = vmatprep.subr.bf16.mxu0 0
  %2978 = vmatpush1.bf16.msra.mxu0 0
  %2979 = vmatprep.subr.bf16.mxu0 0
  %2980 = vmatpush1.bf16.msra.mxu0 0
  %2981 = vmatprep.subr.bf16.mxu0 0
  %2982 = vmatpush1.bf16.msra.mxu0 0
  %2983 = vmatprep.subr.bf16.mxu0 0
  %2984 = vmatpush1.bf16.msra.mxu0 0
  %2985 = vmatprep.subr.bf16.mxu0 %v2849
  %2986 = vmatpush1.bf16.msra.mxu0 %v2848
  %2987 = vmatprep.subr.bf16.mxu0 %v2847
  %2988 = vmatpush1.bf16.msra.mxu0 %v2846
  %2989 = vmatprep.subr.bf16.mxu0 0
  %2990 = vmatpush2.bf16.msra.mxu0 0
  %2991 = vmatprep.subr.bf16.mxu0 0
  %2992 = vmatpush2.bf16.msra.mxu0 0
  %2993 = vmatprep.subr.bf16.mxu0 0
  %2994 = vmatpush2.bf16.msra.mxu0 0
  %2995 = vmatprep.subr.bf16.mxu0 0
  %2996 = vmatpush2.bf16.msra.mxu0 0
  %2997 = vmatprep.subr.bf16.mxu0 0
  %2998 = vmatpush2.bf16.msra.mxu0 0
  %2999 = vmatprep.subr.bf16.mxu0 0
  %3000 = vmatpush2.bf16.msra.mxu0 0
  %3001 = vmatprep.subr.bf16.mxu0 0
  %3002 = vmatpush2.bf16.msra.mxu0 0
  %3003 = vmatprep.subr.bf16.mxu0 0
  %3004 = vmatpush2.bf16.msra.mxu0 0
  %3005 = vmatprep.mubr.bf16.mxu0 0
  %3006 = vmatmul.mubr.bf16.gmra.mxu0 %v2915
  %v3007 = vpop.f32.mrf.mxu0
  %v3008 = vadd.f32 %v2955, %v3007
  %v3009 = vpop.f32.mrf.mxu0
  %v3010 = vadd.f32 %v2957, %v3009
  %v3011 = vpop.f32.mrf.mxu0
  %v3012 = vadd.f32 %v2959, %v3011
  %v3013 = vpop.f32.mrf.mxu0
  %v3014 = vadd.f32 %v2961, %v3013
  %3015 = vmatprep.mubr.bf16.mxu0 0
  %3016 = vmatmul.mubr.bf16.gmra.mxu0 %v2918
  %v3017 = vpop.f32.mrf.mxu0
  %v3018 = vadd.f32 %v2965, %v3017
  %v3019 = vpop.f32.mrf.mxu0
  %v3020 = vadd.f32 %v2967, %v3019
  %v3021 = vpop.f32.mrf.mxu0
  %v3022 = vadd.f32 %v2969, %v3021
  %v3023 = vpop.f32.mrf.mxu0
  %v3024 = vadd.f32 %v2971, %v3023
  %3025 = vdwg.mxu0
  %v3026 = vmax.f32 %v3008, 0.0
  %v3027 = vmax.f32 %v3010, 0.0
  %v3028 = vmax.f32 %v3012, 0.0
  %v3029 = vmax.f32 %v3014, 0.0
  %v3030 = vmax.f32 %v3018, 0.0
  %v3031 = vmax.f32 %v3020, 0.0
  %v3032 = vmax.f32 %v3022, 0.0
  %v3033 = vmax.f32 %v3024, 0.0
  %v3034 = vmul.f32 %v3026, %v483
  %v3035 = vmul.f32 %v3027, %v487
  %v3036 = vmul.f32 %v3028, %v483
  %v3037 = vmul.f32 %v3029, %v487
  %v3038 = vmul.f32 %v3030, %v483
  %v3039 = vmul.f32 %v3031, %v487
  %v3040 = vmul.f32 %v3032, %v483
  %v3041 = vmul.f32 %v3033, %v487
  %3042 = vrot.lane.b32.xlu0 %v3034, 11
  %v3043 = vpop.permute.xlu0 %3042
  %3044 = vrot.lane.b32.xlu0 %v3036, 11
  %v3045 = vpop.permute.xlu0 %3044
  %3046 = vrot.lane.b32.xlu0 %v3038, 11
  %v3047 = vpop.permute.xlu0 %3046
  %3048 = vrot.lane.b32.xlu0 %v3040, 11
  %v3049 = vpop.permute.xlu0 %3048
  %3050 = vrot.lane.b32.xlu0 %v3035, 11
  %v3051 = vpop.permute.xlu0 %3050
  %3052 = vrot.lane.b32.xlu0 %v3037, 11
  %v3053 = vpop.permute.xlu0 %3052
  %3054 = vrot.lane.b32.xlu0 %v3039, 11
  %v3055 = vpop.permute.xlu0 %3054
  %3056 = vrot.lane.b32.xlu0 %v3041, 11
  %v3057 = vpop.permute.xlu0 %3056
  %v3058 = vsel %vm76, %v3043, %v3051
  %v3059 = vsel %vm76, %v3045, %v3053
  %v3060 = vsel %vm76, %v3047, %v3055
  %v3061 = vsel %vm76, %v3049, %v3057
  %v3062 = vsel %vm76, %v3051, %v3043
  %v3063 = vsel %vm76, %v3053, %v3045
  %v3064 = vsel %vm76, %v3055, %v3047
  %v3065 = vsel %vm76, %v3057, %v3049
  %3066 = vrot.lane.b32.xlu0 %v3034, 10
  %v3067 = vpop.permute.xlu0 %3066
  %3068 = vrot.lane.b32.xlu0 %v3036, 10
  %v3069 = vpop.permute.xlu0 %3068
  %3070 = vrot.lane.b32.xlu0 %v3038, 10
  %v3071 = vpop.permute.xlu0 %3070
  %3072 = vrot.lane.b32.xlu0 %v3040, 10
  %v3073 = vpop.permute.xlu0 %3072
  %3074 = vrot.lane.b32.xlu0 %v3035, 10
  %v3075 = vpop.permute.xlu0 %3074
  %3076 = vrot.lane.b32.xlu0 %v3037, 10
  %v3077 = vpop.permute.xlu0 %3076
  %3078 = vrot.lane.b32.xlu0 %v3039, 10
  %v3079 = vpop.permute.xlu0 %3078
  %3080 = vrot.lane.b32.xlu0 %v3041, 10
  %v3081 = vpop.permute.xlu0 %3080
  %v3082 = vsel %vm101, %v3067, %v3075
  %v3083 = vsel %vm101, %v3069, %v3077
  %v3084 = vsel %vm101, %v3071, %v3079
  %v3085 = vsel %vm101, %v3073, %v3081
  %v3086 = vsel %vm101, %v3075, %v3067
  %v3087 = vsel %vm101, %v3077, %v3069
  %v3088 = vsel %vm101, %v3079, %v3071
  %v3089 = vsel %vm101, %v3081, %v3073
  %3090 = vrot.lane.b32.xlu0 %v3034, 9
  %v3091 = vpop.permute.xlu0 %3090
  %3092 = vrot.lane.b32.xlu0 %v3036, 9
  %v3093 = vpop.permute.xlu0 %3092
  %3094 = vrot.lane.b32.xlu0 %v3038, 9
  %v3095 = vpop.permute.xlu0 %3094
  %3096 = vrot.lane.b32.xlu0 %v3040, 9
  %v3097 = vpop.permute.xlu0 %3096
  %3098 = vrot.lane.b32.xlu0 %v3035, 9
  %v3099 = vpop.permute.xlu0 %3098
  %3100 = vrot.lane.b32.xlu0 %v3037, 9
  %v3101 = vpop.permute.xlu0 %3100
  %3102 = vrot.lane.b32.xlu0 %v3039, 9
  %v3103 = vpop.permute.xlu0 %3102
  %3104 = vrot.lane.b32.xlu0 %v3041, 9
  %v3105 = vpop.permute.xlu0 %3104
  %v3106 = vsel %vm126, %v3091, %v3099
  %v3107 = vsel %vm126, %v3093, %v3101
  %v3108 = vsel %vm126, %v3095, %v3103
  %v3109 = vsel %vm126, %v3097, %v3105
  %v3110 = vsel %vm126, %v3099, %v3091
  %v3111 = vsel %vm126, %v3101, %v3093
  %v3112 = vsel %vm126, %v3103, %v3095
  %v3113 = vsel %vm126, %v3105, %v3097
  %3114 = vrot.lane.b32.xlu0 %v3034, 1
  %v3115 = vpop.permute.xlu0 %3114
  %3116 = vrot.lane.b32.xlu0 %v3036, 1
  %v3117 = vpop.permute.xlu0 %3116
  %3118 = vrot.lane.b32.xlu0 %v3038, 1
  %v3119 = vpop.permute.xlu0 %3118
  %3120 = vrot.lane.b32.xlu0 %v3040, 1
  %v3121 = vpop.permute.xlu0 %3120
  %3122 = vrot.lane.b32.xlu0 %v3035, 1
  %v3123 = vpop.permute.xlu0 %3122
  %3124 = vrot.lane.b32.xlu0 %v3037, 1
  %v3125 = vpop.permute.xlu0 %3124
  %3126 = vrot.lane.b32.xlu0 %v3039, 1
  %v3127 = vpop.permute.xlu0 %3126
  %3128 = vrot.lane.b32.xlu0 %v3041, 1
  %v3129 = vpop.permute.xlu0 %3128
  %v3130 = vsel %vm151, %v3115, %v3123
  %v3131 = vsel %vm151, %v3117, %v3125
  %v3132 = vsel %vm151, %v3119, %v3127
  %v3133 = vsel %vm151, %v3121, %v3129
  %v3134 = vsel %vm151, %v3123, %v3115
  %v3135 = vsel %vm151, %v3125, %v3117
  %v3136 = vsel %vm151, %v3127, %v3119
  %v3137 = vsel %vm151, %v3129, %v3121
  %3138 = vrot.lane.b32.xlu0 %v3034, 127
  %v3139 = vpop.permute.xlu0 %3138
  %3140 = vrot.lane.b32.xlu0 %v3036, 127
  %v3141 = vpop.permute.xlu0 %3140
  %3142 = vrot.lane.b32.xlu0 %v3038, 127
  %v3143 = vpop.permute.xlu0 %3142
  %3144 = vrot.lane.b32.xlu0 %v3040, 127
  %v3145 = vpop.permute.xlu0 %3144
  %3146 = vrot.lane.b32.xlu0 %v3035, 127
  %v3147 = vpop.permute.xlu0 %3146
  %3148 = vrot.lane.b32.xlu0 %v3037, 127
  %v3149 = vpop.permute.xlu0 %3148
  %3150 = vrot.lane.b32.xlu0 %v3039, 127
  %v3151 = vpop.permute.xlu0 %3150
  %3152 = vrot.lane.b32.xlu0 %v3041, 127
  %v3153 = vpop.permute.xlu0 %3152
  %v3154 = vsel %vm176, %v3139, %v3147
  %v3155 = vsel %vm176, %v3141, %v3149
  %v3156 = vsel %vm176, %v3143, %v3151
  %v3157 = vsel %vm176, %v3145, %v3153
  %v3158 = vsel %vm176, %v3147, %v3139
  %v3159 = vsel %vm176, %v3149, %v3141
  %v3160 = vsel %vm176, %v3151, %v3143
  %v3161 = vsel %vm176, %v3153, %v3145
  %3162 = vrot.lane.b32.xlu0 %v3034, 119
  %v3163 = vpop.permute.xlu0 %3162
  %3164 = vrot.lane.b32.xlu0 %v3036, 119
  %v3165 = vpop.permute.xlu0 %3164
  %3166 = vrot.lane.b32.xlu0 %v3038, 119
  %v3167 = vpop.permute.xlu0 %3166
  %3168 = vrot.lane.b32.xlu0 %v3040, 119
  %v3169 = vpop.permute.xlu0 %3168
  %3170 = vrot.lane.b32.xlu0 %v3035, 119
  %v3171 = vpop.permute.xlu0 %3170
  %3172 = vrot.lane.b32.xlu0 %v3037, 119
  %v3173 = vpop.permute.xlu0 %3172
  %3174 = vrot.lane.b32.xlu0 %v3039, 119
  %v3175 = vpop.permute.xlu0 %3174
  %3176 = vrot.lane.b32.xlu0 %v3041, 119
  %v3177 = vpop.permute.xlu0 %3176
  %v3178 = vsel %vm201, %v3163, %v3171
  %v3179 = vsel %vm201, %v3165, %v3173
  %v3180 = vsel %vm201, %v3167, %v3175
  %v3181 = vsel %vm201, %v3169, %v3177
  %v3182 = vsel %vm201, %v3171, %v3163
  %v3183 = vsel %vm201, %v3173, %v3165
  %v3184 = vsel %vm201, %v3175, %v3167
  %v3185 = vsel %vm201, %v3177, %v3169
  %3186 = vrot.lane.b32.xlu0 %v3034, 118
  %v3187 = vpop.permute.xlu0 %3186
  %3188 = vrot.lane.b32.xlu0 %v3036, 118
  %v3189 = vpop.permute.xlu0 %3188
  %3190 = vrot.lane.b32.xlu0 %v3038, 118
  %v3191 = vpop.permute.xlu0 %3190
  %3192 = vrot.lane.b32.xlu0 %v3040, 118
  %v3193 = vpop.permute.xlu0 %3192
  %3194 = vrot.lane.b32.xlu0 %v3035, 118
  %v3195 = vpop.permute.xlu0 %3194
  %3196 = vrot.lane.b32.xlu0 %v3037, 118
  %v3197 = vpop.permute.xlu0 %3196
  %3198 = vrot.lane.b32.xlu0 %v3039, 118
  %v3199 = vpop.permute.xlu0 %3198
  %3200 = vrot.lane.b32.xlu0 %v3041, 118
  %v3201 = vpop.permute.xlu0 %3200
  %v3202 = vsel %vm226, %v3187, %v3195
  %v3203 = vsel %vm226, %v3189, %v3197
  %v3204 = vsel %vm226, %v3191, %v3199
  %v3205 = vsel %vm226, %v3193, %v3201
  %v3206 = vsel %vm226, %v3195, %v3187
  %v3207 = vsel %vm226, %v3197, %v3189
  %v3208 = vsel %vm226, %v3199, %v3191
  %v3209 = vsel %vm226, %v3201, %v3193
  %3210 = vrot.lane.b32.xlu0 %v3034, 117
  %v3211 = vpop.permute.xlu0 %3210
  %3212 = vrot.lane.b32.xlu0 %v3036, 117
  %v3213 = vpop.permute.xlu0 %3212
  %3214 = vrot.lane.b32.xlu0 %v3038, 117
  %v3215 = vpop.permute.xlu0 %3214
  %3216 = vrot.lane.b32.xlu0 %v3040, 117
  %v3217 = vpop.permute.xlu0 %3216
  %3218 = vrot.lane.b32.xlu0 %v3035, 117
  %v3219 = vpop.permute.xlu0 %3218
  %3220 = vrot.lane.b32.xlu0 %v3037, 117
  %v3221 = vpop.permute.xlu0 %3220
  %3222 = vrot.lane.b32.xlu0 %v3039, 117
  %v3223 = vpop.permute.xlu0 %3222
  %3224 = vrot.lane.b32.xlu0 %v3041, 117
  %v3225 = vpop.permute.xlu0 %3224
  %v3226 = vsel %vm251, %v3211, %v3219
  %v3227 = vsel %vm251, %v3213, %v3221
  %v3228 = vsel %vm251, %v3215, %v3223
  %v3229 = vsel %vm251, %v3217, %v3225
  %v3230 = vsel %vm251, %v3219, %v3211
  %v3231 = vsel %vm251, %v3221, %v3213
  %v3232 = vsel %vm251, %v3223, %v3215
  %v3233 = vsel %vm251, %v3225, %v3217
  %v3234 = vpack.c.bf16 %v3063, %v3062
  %v3235 = vpack.c.bf16 %v3059, %v3058
  %v3236 = vpack.c.bf16 %v3065, %v3064
  %v3237 = vpack.c.bf16 %v3061, %v3060
  %v3238 = vpack.c.bf16 %v3087, %v3086
  %v3239 = vpack.c.bf16 %v3083, %v3082
  %v3240 = vpack.c.bf16 %v3089, %v3088
  %v3241 = vpack.c.bf16 %v3085, %v3084
  %v3242 = vpack.c.bf16 %v3111, %v3110
  %v3243 = vpack.c.bf16 %v3107, %v3106
  %v3244 = vpack.c.bf16 %v3113, %v3112
  %v3245 = vpack.c.bf16 %v3109, %v3108
  %v3246 = vpack.c.bf16 %v3135, %v3134
  %v3247 = vpack.c.bf16 %v3131, %v3130
  %v3248 = vpack.c.bf16 %v3137, %v3136
  %v3249 = vpack.c.bf16 %v3133, %v3132
  %v3250 = vpack.c.bf16 %v3036, %v3034
  %v3251 = vpack.c.bf16 %v3037, %v3035
  %v3252 = vpack.c.bf16 %v3040, %v3038
  %v3253 = vpack.c.bf16 %v3041, %v3039
  %v3254 = vpack.c.bf16 %v3155, %v3154
  %v3255 = vpack.c.bf16 %v3159, %v3158
  %v3256 = vpack.c.bf16 %v3157, %v3156
  %v3257 = vpack.c.bf16 %v3161, %v3160
  %v3258 = vpack.c.bf16 %v3179, %v3178
  %v3259 = vpack.c.bf16 %v3183, %v3182
  %v3260 = vpack.c.bf16 %v3181, %v3180
  %v3261 = vpack.c.bf16 %v3185, %v3184
  %v3262 = vpack.c.bf16 %v3203, %v3202
  %v3263 = vpack.c.bf16 %v3207, %v3206
  %v3264 = vpack.c.bf16 %v3205, %v3204
  %v3265 = vpack.c.bf16 %v3209, %v3208
  %v3266 = vpack.c.bf16 %v3227, %v3226
  %v3267 = vpack.c.bf16 %v3231, %v3230
  %v3268 = vpack.c.bf16 %v3229, %v3228
  %v3269 = vpack.c.bf16 %v3233, %v3232
  %s3270 = scalar_lea.vmem %s3, 336
  %v3271 = vld [vmem:[%s3270] sm:$0xff]
  %v3272 = vld [vmem:[%s3270 + $0x8] sm:$0xf]
  %v3273 = vld [vmem:[%s3270 + $0xc] sm:$0xff]
  %v3274 = vld [vmem:[%s3270 + $0x14] sm:$0xf]
  %v3275 = vld [vmem:[%s3270 + $0x18] sm:$0xff]
  %v3276 = vld [vmem:[%s3270 + $0x20] sm:$0xf]
  %v3277 = vld [vmem:[%s3270 + $0x24] sm:$0xff]
  %v3278 = vld [vmem:[%s3270 + $0x2c] sm:$0xf]
  %s3279 = scalar_lea.vmem %s4, 224
  %v3280 = vld [vmem:[%s3279] sm:$0xff]
  %v3281 = vld [vmem:[%s3279 + $0x8] sm:$0xff]
  %v3282 = vld [vmem:[%s3279 + $0x10] sm:$0xff]
  %v3283 = vld [vmem:[%s3279 + $0x18] sm:$0xff]
  %3285 = vset.pattern.permute.xlu0 0
  %3286 = vperm.xlu0 %3285, %v3280
  %v3287 = vpop.permute.xlu0 %3286
  %3290 = vset.pattern.permute.xlu0 0
  %3291 = vperm.xlu0 %3290, %v3281
  %v3292 = vpop.permute.xlu0 %3291
  %3295 = vset.pattern.permute.xlu0 0
  %3296 = vperm.xlu0 %3295, %v3282
  %v3297 = vpop.permute.xlu0 %3296
  %3300 = vset.pattern.permute.xlu0 0
  %3301 = vperm.xlu0 %3300, %v3283
  %v3302 = vpop.permute.xlu0 %3301
  %v3312 = vunpack.c.l.b16 %v3271
  %v3313 = vunpack.c.h.b16 %v3271
  %v3314 = vunpack.c.l.b16 %v3272
  %v3315 = vunpack.c.l.b16 %v3273
  %v3316 = vunpack.c.h.b16 %v3273
  %v3317 = vunpack.c.l.b16 %v3274
  %v3318 = vunpack.c.l.b16 %v3275
  %v3319 = vunpack.c.h.b16 %v3275
  %v3320 = vunpack.c.l.b16 %v3276
  %v3321 = vunpack.c.l.b16 %v3277
  %v3322 = vunpack.c.h.b16 %v3277
  %v3323 = vunpack.c.l.b16 %v3278
  %v3324 = vpack.c.b16 %v3315, %v3312
  %v3325 = vpack.c.b16 %v3316, %v3313
  %v3326 = vpack.c.b16 %v3317, %v3314
  %v3327 = vpack.c.b16 %v3321, %v3318
  %v3328 = vpack.c.b16 %v3322, %v3319
  %v3329 = vpack.c.b16 %v3323, %v3320
  %v3335 = vsel %vm358, %v3326, 0
  %v3338 = vsel %vm358, %v3329, 0
  %3340 = vmatprep.subr.bf16.mxu0 %v3249
  %3341 = vmatpush1.bf16.msra.mxu0 %v3248
  %3342 = vmatprep.subr.bf16.mxu0 %v3247
  %3343 = vmatpush1.bf16.msra.mxu0 %v3246
  %3344 = vmatprep.subr.bf16.mxu0 %v3245
  %3345 = vmatpush1.bf16.msra.mxu0 %v3244
  %3346 = vmatprep.subr.bf16.mxu0 %v3243
  %3347 = vmatpush1.bf16.msra.mxu0 %v3242
  %3348 = vmatprep.subr.bf16.mxu0 %v3241
  %3349 = vmatpush1.bf16.msra.mxu0 %v3240
  %3350 = vmatprep.subr.bf16.mxu0 %v3239
  %3351 = vmatpush1.bf16.msra.mxu0 %v3238
  %3352 = vmatprep.subr.bf16.mxu0 %v3237
  %3353 = vmatpush1.bf16.msra.mxu0 %v3236
  %3354 = vmatprep.subr.bf16.mxu0 %v3235
  %3355 = vmatpush1.bf16.msra.mxu0 %v3234
  %3356 = vmatprep.subr.bf16.mxu0 %v3265
  %3357 = vmatpush2.bf16.msra.mxu0 %v3264
  %3358 = vmatprep.subr.bf16.mxu0 %v3263
  %3359 = vmatpush2.bf16.msra.mxu0 %v3262
  %3360 = vmatprep.subr.bf16.mxu0 %v3261
  %3361 = vmatpush2.bf16.msra.mxu0 %v3260
  %3362 = vmatprep.subr.bf16.mxu0 %v3259
  %3363 = vmatpush2.bf16.msra.mxu0 %v3258
  %3364 = vmatprep.subr.bf16.mxu0 %v3257
  %3365 = vmatpush2.bf16.msra.mxu0 %v3256
  %3366 = vmatprep.subr.bf16.mxu0 %v3255
  %3367 = vmatpush2.bf16.msra.mxu0 %v3254
  %3368 = vmatprep.subr.bf16.mxu0 %v3253
  %3369 = vmatpush2.bf16.msra.mxu0 %v3252
  %3370 = vmatprep.subr.bf16.mxu0 %v3251
  %3371 = vmatpush2.bf16.msra.mxu0 %v3250
  %3372 = vmatprep.mubr.bf16.mxu0 %v3325
  %3373 = vmatmul.mubr.bf16.gmra.mxu0 %v3324
  %v3374 = vpop.f32.mrf.mxu0
  %v3375 = vadd.f32 %v3287, %v3374
  %v3376 = vpop.f32.mrf.mxu0
  %v3377 = vadd.f32 %v3287, %v3376
  %v3378 = vpop.f32.mrf.mxu0
  %v3379 = vadd.f32 %v3292, %v3378
  %v3380 = vpop.f32.mrf.mxu0
  %v3381 = vadd.f32 %v3292, %v3380
  %3382 = vmatprep.mubr.bf16.mxu0 %v3328
  %3383 = vmatmul.mubr.bf16.gmra.mxu0 %v3327
  %v3384 = vpop.f32.mrf.mxu0
  %v3385 = vadd.f32 %v3297, %v3384
  %v3386 = vpop.f32.mrf.mxu0
  %v3387 = vadd.f32 %v3297, %v3386
  %v3388 = vpop.f32.mrf.mxu0
  %v3389 = vadd.f32 %v3302, %v3388
  %v3390 = vpop.f32.mrf.mxu0
  %v3391 = vadd.f32 %v3302, %v3390
  %3392 = vdwg.mxu0
  %3393 = vmatprep.subr.bf16.mxu0 0
  %3394 = vmatpush1.bf16.msra.mxu0 0
  %3395 = vmatprep.subr.bf16.mxu0 0
  %3396 = vmatpush1.bf16.msra.mxu0 0
  %3397 = vmatprep.subr.bf16.mxu0 0
  %3398 = vmatpush1.bf16.msra.mxu0 0
  %3399 = vmatprep.subr.bf16.mxu0 0
  %3400 = vmatpush1.bf16.msra.mxu0 0
  %3401 = vmatprep.subr.bf16.mxu0 0
  %3402 = vmatpush1.bf16.msra.mxu0 0
  %3403 = vmatprep.subr.bf16.mxu0 0
  %3404 = vmatpush1.bf16.msra.mxu0 0
  %3405 = vmatprep.subr.bf16.mxu0 %v3269
  %3406 = vmatpush1.bf16.msra.mxu0 %v3268
  %3407 = vmatprep.subr.bf16.mxu0 %v3267
  %3408 = vmatpush1.bf16.msra.mxu0 %v3266
  %3409 = vmatprep.subr.bf16.mxu0 0
  %3410 = vmatpush2.bf16.msra.mxu0 0
  %3411 = vmatprep.subr.bf16.mxu0 0
  %3412 = vmatpush2.bf16.msra.mxu0 0
  %3413 = vmatprep.subr.bf16.mxu0 0
  %3414 = vmatpush2.bf16.msra.mxu0 0
  %3415 = vmatprep.subr.bf16.mxu0 0
  %3416 = vmatpush2.bf16.msra.mxu0 0
  %3417 = vmatprep.subr.bf16.mxu0 0
  %3418 = vmatpush2.bf16.msra.mxu0 0
  %3419 = vmatprep.subr.bf16.mxu0 0
  %3420 = vmatpush2.bf16.msra.mxu0 0
  %3421 = vmatprep.subr.bf16.mxu0 0
  %3422 = vmatpush2.bf16.msra.mxu0 0
  %3423 = vmatprep.subr.bf16.mxu0 0
  %3424 = vmatpush2.bf16.msra.mxu0 0
  %3425 = vmatprep.mubr.bf16.mxu0 0
  %3426 = vmatmul.mubr.bf16.gmra.mxu0 %v3335
  %v3427 = vpop.f32.mrf.mxu0
  %v3428 = vadd.f32 %v3375, %v3427
  %v3429 = vpop.f32.mrf.mxu0
  %v3430 = vadd.f32 %v3377, %v3429
  %v3431 = vpop.f32.mrf.mxu0
  %v3432 = vadd.f32 %v3379, %v3431
  %v3433 = vpop.f32.mrf.mxu0
  %v3434 = vadd.f32 %v3381, %v3433
  %3435 = vmatprep.mubr.bf16.mxu0 0
  %3436 = vmatmul.mubr.bf16.gmra.mxu0 %v3338
  %v3437 = vpop.f32.mrf.mxu0
  %v3438 = vadd.f32 %v3385, %v3437
  %v3439 = vpop.f32.mrf.mxu0
  %v3440 = vadd.f32 %v3387, %v3439
  %v3441 = vpop.f32.mrf.mxu0
  %v3442 = vadd.f32 %v3389, %v3441
  %v3443 = vpop.f32.mrf.mxu0
  %v3444 = vadd.f32 %v3391, %v3443
  %3445 = vdwg.mxu0
  %v3446 = vadd.f32 %v3428, %v2614
  %v3447 = vadd.f32 %v3430, %v2615
  %v3448 = vadd.f32 %v3432, %v2616
  %v3449 = vadd.f32 %v3434, %v2617
  %v3450 = vadd.f32 %v3438, %v2618
  %v3451 = vadd.f32 %v3440, %v2619
  %v3452 = vadd.f32 %v3442, %v2620
  %v3453 = vadd.f32 %v3444, %v2621
  %v3454 = vmax.f32 %v3446, 0.0
  %v3455 = vmax.f32 %v3447, 0.0
  %v3456 = vmax.f32 %v3448, 0.0
  %v3457 = vmax.f32 %v3449, 0.0
  %v3458 = vmax.f32 %v3450, 0.0
  %v3459 = vmax.f32 %v3451, 0.0
  %v3460 = vmax.f32 %v3452, 0.0
  %v3461 = vmax.f32 %v3453, 0.0
  %v3462 = vmul.f32 %v3454, %v483
  %v3463 = vmul.f32 %v3455, %v487
  %v3464 = vmul.f32 %v3456, %v483
  %v3465 = vmul.f32 %v3457, %v487
  %v3466 = vmul.f32 %v3458, %v483
  %v3467 = vmul.f32 %v3459, %v487
  %v3468 = vmul.f32 %v3460, %v483
  %v3469 = vmul.f32 %v3461, %v487
  %3470 = vrot.lane.b32.xlu0 %v3462, 11
  %v3471 = vpop.permute.xlu0 %3470
  %3472 = vrot.lane.b32.xlu0 %v3464, 11
  %v3473 = vpop.permute.xlu0 %3472
  %3474 = vrot.lane.b32.xlu0 %v3466, 11
  %v3475 = vpop.permute.xlu0 %3474
  %3476 = vrot.lane.b32.xlu0 %v3468, 11
  %v3477 = vpop.permute.xlu0 %3476
  %3478 = vrot.lane.b32.xlu0 %v3463, 11
  %v3479 = vpop.permute.xlu0 %3478
  %3480 = vrot.lane.b32.xlu0 %v3465, 11
  %v3481 = vpop.permute.xlu0 %3480
  %3482 = vrot.lane.b32.xlu0 %v3467, 11
  %v3483 = vpop.permute.xlu0 %3482
  %3484 = vrot.lane.b32.xlu0 %v3469, 11
  %v3485 = vpop.permute.xlu0 %3484
  %v3486 = vsel %vm76, %v3471, %v3479
  %v3487 = vsel %vm76, %v3473, %v3481
  %v3488 = vsel %vm76, %v3475, %v3483
  %v3489 = vsel %vm76, %v3477, %v3485
  %v3490 = vsel %vm76, %v3479, %v3471
  %v3491 = vsel %vm76, %v3481, %v3473
  %v3492 = vsel %vm76, %v3483, %v3475
  %v3493 = vsel %vm76, %v3485, %v3477
  %3494 = vrot.lane.b32.xlu0 %v3462, 10
  %v3495 = vpop.permute.xlu0 %3494
  %3496 = vrot.lane.b32.xlu0 %v3464, 10
  %v3497 = vpop.permute.xlu0 %3496
  %3498 = vrot.lane.b32.xlu0 %v3466, 10
  %v3499 = vpop.permute.xlu0 %3498
  %3500 = vrot.lane.b32.xlu0 %v3468, 10
  %v3501 = vpop.permute.xlu0 %3500
  %3502 = vrot.lane.b32.xlu0 %v3463, 10
  %v3503 = vpop.permute.xlu0 %3502
  %3504 = vrot.lane.b32.xlu0 %v3465, 10
  %v3505 = vpop.permute.xlu0 %3504
  %3506 = vrot.lane.b32.xlu0 %v3467, 10
  %v3507 = vpop.permute.xlu0 %3506
  %3508 = vrot.lane.b32.xlu0 %v3469, 10
  %v3509 = vpop.permute.xlu0 %3508
  %v3510 = vsel %vm101, %v3495, %v3503
  %v3511 = vsel %vm101, %v3497, %v3505
  %v3512 = vsel %vm101, %v3499, %v3507
  %v3513 = vsel %vm101, %v3501, %v3509
  %v3514 = vsel %vm101, %v3503, %v3495
  %v3515 = vsel %vm101, %v3505, %v3497
  %v3516 = vsel %vm101, %v3507, %v3499
  %v3517 = vsel %vm101, %v3509, %v3501
  %3518 = vrot.lane.b32.xlu0 %v3462, 9
  %v3519 = vpop.permute.xlu0 %3518
  %3520 = vrot.lane.b32.xlu0 %v3464, 9
  %v3521 = vpop.permute.xlu0 %3520
  %3522 = vrot.lane.b32.xlu0 %v3466, 9
  %v3523 = vpop.permute.xlu0 %3522
  %3524 = vrot.lane.b32.xlu0 %v3468, 9
  %v3525 = vpop.permute.xlu0 %3524
  %3526 = vrot.lane.b32.xlu0 %v3463, 9
  %v3527 = vpop.permute.xlu0 %3526
  %3528 = vrot.lane.b32.xlu0 %v3465, 9
  %v3529 = vpop.permute.xlu0 %3528
  %3530 = vrot.lane.b32.xlu0 %v3467, 9
  %v3531 = vpop.permute.xlu0 %3530
  %3532 = vrot.lane.b32.xlu0 %v3469, 9
  %v3533 = vpop.permute.xlu0 %3532
  %v3534 = vsel %vm126, %v3519, %v3527
  %v3535 = vsel %vm126, %v3521, %v3529
  %v3536 = vsel %vm126, %v3523, %v3531
  %v3537 = vsel %vm126, %v3525, %v3533
  %v3538 = vsel %vm126, %v3527, %v3519
  %v3539 = vsel %vm126, %v3529, %v3521
  %v3540 = vsel %vm126, %v3531, %v3523
  %v3541 = vsel %vm126, %v3533, %v3525
  %3542 = vrot.lane.b32.xlu0 %v3462, 1
  %v3543 = vpop.permute.xlu0 %3542
  %3544 = vrot.lane.b32.xlu0 %v3464, 1
  %v3545 = vpop.permute.xlu0 %3544
  %3546 = vrot.lane.b32.xlu0 %v3466, 1
  %v3547 = vpop.permute.xlu0 %3546
  %3548 = vrot.lane.b32.xlu0 %v3468, 1
  %v3549 = vpop.permute.xlu0 %3548
  %3550 = vrot.lane.b32.xlu0 %v3463, 1
  %v3551 = vpop.permute.xlu0 %3550
  %3552 = vrot.lane.b32.xlu0 %v3465, 1
  %v3553 = vpop.permute.xlu0 %3552
  %3554 = vrot.lane.b32.xlu0 %v3467, 1
  %v3555 = vpop.permute.xlu0 %3554
  %3556 = vrot.lane.b32.xlu0 %v3469, 1
  %v3557 = vpop.permute.xlu0 %3556
  %v3558 = vsel %vm151, %v3543, %v3551
  %v3559 = vsel %vm151, %v3545, %v3553
  %v3560 = vsel %vm151, %v3547, %v3555
  %v3561 = vsel %vm151, %v3549, %v3557
  %v3562 = vsel %vm151, %v3551, %v3543
  %v3563 = vsel %vm151, %v3553, %v3545
  %v3564 = vsel %vm151, %v3555, %v3547
  %v3565 = vsel %vm151, %v3557, %v3549
  %3566 = vrot.lane.b32.xlu0 %v3462, 127
  %v3567 = vpop.permute.xlu0 %3566
  %3568 = vrot.lane.b32.xlu0 %v3464, 127
  %v3569 = vpop.permute.xlu0 %3568
  %3570 = vrot.lane.b32.xlu0 %v3466, 127
  %v3571 = vpop.permute.xlu0 %3570
  %3572 = vrot.lane.b32.xlu0 %v3468, 127
  %v3573 = vpop.permute.xlu0 %3572
  %3574 = vrot.lane.b32.xlu0 %v3463, 127
  %v3575 = vpop.permute.xlu0 %3574
  %3576 = vrot.lane.b32.xlu0 %v3465, 127
  %v3577 = vpop.permute.xlu0 %3576
  %3578 = vrot.lane.b32.xlu0 %v3467, 127
  %v3579 = vpop.permute.xlu0 %3578
  %3580 = vrot.lane.b32.xlu0 %v3469, 127
  %v3581 = vpop.permute.xlu0 %3580
  %v3582 = vsel %vm176, %v3567, %v3575
  %v3583 = vsel %vm176, %v3569, %v3577
  %v3584 = vsel %vm176, %v3571, %v3579
  %v3585 = vsel %vm176, %v3573, %v3581
  %v3586 = vsel %vm176, %v3575, %v3567
  %v3587 = vsel %vm176, %v3577, %v3569
  %v3588 = vsel %vm176, %v3579, %v3571
  %v3589 = vsel %vm176, %v3581, %v3573
  %3590 = vrot.lane.b32.xlu0 %v3462, 119
  %v3591 = vpop.permute.xlu0 %3590
  %3592 = vrot.lane.b32.xlu0 %v3464, 119
  %v3593 = vpop.permute.xlu0 %3592
  %3594 = vrot.lane.b32.xlu0 %v3466, 119
  %v3595 = vpop.permute.xlu0 %3594
  %3596 = vrot.lane.b32.xlu0 %v3468, 119
  %v3597 = vpop.permute.xlu0 %3596
  %3598 = vrot.lane.b32.xlu0 %v3463, 119
  %v3599 = vpop.permute.xlu0 %3598
  %3600 = vrot.lane.b32.xlu0 %v3465, 119
  %v3601 = vpop.permute.xlu0 %3600
  %3602 = vrot.lane.b32.xlu0 %v3467, 119
  %v3603 = vpop.permute.xlu0 %3602
  %3604 = vrot.lane.b32.xlu0 %v3469, 119
  %v3605 = vpop.permute.xlu0 %3604
  %v3606 = vsel %vm201, %v3591, %v3599
  %v3607 = vsel %vm201, %v3593, %v3601
  %v3608 = vsel %vm201, %v3595, %v3603
  %v3609 = vsel %vm201, %v3597, %v3605
  %v3610 = vsel %vm201, %v3599, %v3591
  %v3611 = vsel %vm201, %v3601, %v3593
  %v3612 = vsel %vm201, %v3603, %v3595
  %v3613 = vsel %vm201, %v3605, %v3597
  %3614 = vrot.lane.b32.xlu0 %v3462, 118
  %v3615 = vpop.permute.xlu0 %3614
  %3616 = vrot.lane.b32.xlu0 %v3464, 118
  %v3617 = vpop.permute.xlu0 %3616
  %3618 = vrot.lane.b32.xlu0 %v3466, 118
  %v3619 = vpop.permute.xlu0 %3618
  %3620 = vrot.lane.b32.xlu0 %v3468, 118
  %v3621 = vpop.permute.xlu0 %3620
  %3622 = vrot.lane.b32.xlu0 %v3463, 118
  %v3623 = vpop.permute.xlu0 %3622
  %3624 = vrot.lane.b32.xlu0 %v3465, 118
  %v3625 = vpop.permute.xlu0 %3624
  %3626 = vrot.lane.b32.xlu0 %v3467, 118
  %v3627 = vpop.permute.xlu0 %3626
  %3628 = vrot.lane.b32.xlu0 %v3469, 118
  %v3629 = vpop.permute.xlu0 %3628
  %v3630 = vsel %vm226, %v3615, %v3623
  %v3631 = vsel %vm226, %v3617, %v3625
  %v3632 = vsel %vm226, %v3619, %v3627
  %v3633 = vsel %vm226, %v3621, %v3629
  %v3634 = vsel %vm226, %v3623, %v3615
  %v3635 = vsel %vm226, %v3625, %v3617
  %v3636 = vsel %vm226, %v3627, %v3619
  %v3637 = vsel %vm226, %v3629, %v3621
  %3638 = vrot.lane.b32.xlu0 %v3462, 117
  %v3639 = vpop.permute.xlu0 %3638
  %3640 = vrot.lane.b32.xlu0 %v3464, 117
  %v3641 = vpop.permute.xlu0 %3640
  %3642 = vrot.lane.b32.xlu0 %v3466, 117
  %v3643 = vpop.permute.xlu0 %3642
  %3644 = vrot.lane.b32.xlu0 %v3468, 117
  %v3645 = vpop.permute.xlu0 %3644
  %3646 = vrot.lane.b32.xlu0 %v3463, 117
  %v3647 = vpop.permute.xlu0 %3646
  %3648 = vrot.lane.b32.xlu0 %v3465, 117
  %v3649 = vpop.permute.xlu0 %3648
  %3650 = vrot.lane.b32.xlu0 %v3467, 117
  %v3651 = vpop.permute.xlu0 %3650
  %3652 = vrot.lane.b32.xlu0 %v3469, 117
  %v3653 = vpop.permute.xlu0 %3652
  %v3654 = vsel %vm251, %v3639, %v3647
  %v3655 = vsel %vm251, %v3641, %v3649
  %v3656 = vsel %vm251, %v3643, %v3651
  %v3657 = vsel %vm251, %v3645, %v3653
  %v3658 = vsel %vm251, %v3647, %v3639
  %v3659 = vsel %vm251, %v3649, %v3641
  %v3660 = vsel %vm251, %v3651, %v3643
  %v3661 = vsel %vm251, %v3653, %v3645
  %v3662 = vpack.c.bf16 %v3491, %v3490
  %v3663 = vpack.c.bf16 %v3487, %v3486
  %v3664 = vpack.c.bf16 %v3493, %v3492
  %v3665 = vpack.c.bf16 %v3489, %v3488
  %v3666 = vpack.c.bf16 %v3515, %v3514
  %v3667 = vpack.c.bf16 %v3511, %v3510
  %v3668 = vpack.c.bf16 %v3517, %v3516
  %v3669 = vpack.c.bf16 %v3513, %v3512
  %v3670 = vpack.c.bf16 %v3539, %v3538
  %v3671 = vpack.c.bf16 %v3535, %v3534
  %v3672 = vpack.c.bf16 %v3541, %v3540
  %v3673 = vpack.c.bf16 %v3537, %v3536
  %v3674 = vpack.c.bf16 %v3563, %v3562
  %v3675 = vpack.c.bf16 %v3559, %v3558
  %v3676 = vpack.c.bf16 %v3565, %v3564
  %v3677 = vpack.c.bf16 %v3561, %v3560
  %v3678 = vpack.c.bf16 %v3464, %v3462
  %v3679 = vpack.c.bf16 %v3465, %v3463
  %v3680 = vpack.c.bf16 %v3468, %v3466
  %v3681 = vpack.c.bf16 %v3469, %v3467
  %v3682 = vpack.c.bf16 %v3583, %v3582
  %v3683 = vpack.c.bf16 %v3587, %v3586
  %v3684 = vpack.c.bf16 %v3585, %v3584
  %v3685 = vpack.c.bf16 %v3589, %v3588
  %v3686 = vpack.c.bf16 %v3607, %v3606
  %v3687 = vpack.c.bf16 %v3611, %v3610
  %v3688 = vpack.c.bf16 %v3609, %v3608
  %v3689 = vpack.c.bf16 %v3613, %v3612
  %v3690 = vpack.c.bf16 %v3631, %v3630
  %v3691 = vpack.c.bf16 %v3635, %v3634
  %v3692 = vpack.c.bf16 %v3633, %v3632
  %v3693 = vpack.c.bf16 %v3637, %v3636
  %v3694 = vpack.c.bf16 %v3655, %v3654
  %v3695 = vpack.c.bf16 %v3659, %v3658
  %v3696 = vpack.c.bf16 %v3657, %v3656
  %v3697 = vpack.c.bf16 %v3661, %v3660
  %s3698 = scalar_lea.vmem %s3, 384
  %v3699 = vld [vmem:[%s3698] sm:$0xff]
  %v3700 = vld [vmem:[%s3698 + $0x8] sm:$0xf]
  %v3701 = vld [vmem:[%s3698 + $0xc] sm:$0xff]
  %v3702 = vld [vmem:[%s3698 + $0x14] sm:$0xf]
  %v3703 = vld [vmem:[%s3698 + $0x18] sm:$0xff]
  %v3704 = vld [vmem:[%s3698 + $0x20] sm:$0xf]
  %v3705 = vld [vmem:[%s3698 + $0x24] sm:$0xff]
  %v3706 = vld [vmem:[%s3698 + $0x2c] sm:$0xf]
  %s3707 = scalar_lea.vmem %s4, 256
  %v3708 = vld [vmem:[%s3707] sm:$0xff]
  %v3709 = vld [vmem:[%s3707 + $0x8] sm:$0xff]
  %v3710 = vld [vmem:[%s3707 + $0x10] sm:$0xff]
  %v3711 = vld [vmem:[%s3707 + $0x18] sm:$0xff]
  %3713 = vset.pattern.permute.xlu0 0
  %3714 = vperm.xlu0 %3713, %v3708
  %v3715 = vpop.permute.xlu0 %3714
  %3718 = vset.pattern.permute.xlu0 0
  %3719 = vperm.xlu0 %3718, %v3709
  %v3720 = vpop.permute.xlu0 %3719
  %3723 = vset.pattern.permute.xlu0 0
  %3724 = vperm.xlu0 %3723, %v3710
  %v3725 = vpop.permute.xlu0 %3724
  %3728 = vset.pattern.permute.xlu0 0
  %3729 = vperm.xlu0 %3728, %v3711
  %v3730 = vpop.permute.xlu0 %3729
  %v3740 = vunpack.c.l.b16 %v3699
  %v3741 = vunpack.c.h.b16 %v3699
  %v3742 = vunpack.c.l.b16 %v3700
  %v3743 = vunpack.c.l.b16 %v3701
  %v3744 = vunpack.c.h.b16 %v3701
  %v3745 = vunpack.c.l.b16 %v3702
  %v3746 = vunpack.c.l.b16 %v3703
  %v3747 = vunpack.c.h.b16 %v3703
  %v3748 = vunpack.c.l.b16 %v3704
  %v3749 = vunpack.c.l.b16 %v3705
  %v3750 = vunpack.c.h.b16 %v3705
  %v3751 = vunpack.c.l.b16 %v3706
  %v3752 = vpack.c.b16 %v3743, %v3740
  %v3753 = vpack.c.b16 %v3744, %v3741
  %v3754 = vpack.c.b16 %v3745, %v3742
  %v3755 = vpack.c.b16 %v3749, %v3746
  %v3756 = vpack.c.b16 %v3750, %v3747
  %v3757 = vpack.c.b16 %v3751, %v3748
  %v3763 = vsel %vm358, %v3754, 0
  %v3766 = vsel %vm358, %v3757, 0
  %3768 = vmatprep.subr.bf16.mxu0 %v3677
  %3769 = vmatpush1.bf16.msra.mxu0 %v3676
  %3770 = vmatprep.subr.bf16.mxu0 %v3675
  %3771 = vmatpush1.bf16.msra.mxu0 %v3674
  %3772 = vmatprep.subr.bf16.mxu0 %v3673
  %3773 = vmatpush1.bf16.msra.mxu0 %v3672
  %3774 = vmatprep.subr.bf16.mxu0 %v3671
  %3775 = vmatpush1.bf16.msra.mxu0 %v3670
  %3776 = vmatprep.subr.bf16.mxu0 %v3669
  %3777 = vmatpush1.bf16.msra.mxu0 %v3668
  %3778 = vmatprep.subr.bf16.mxu0 %v3667
  %3779 = vmatpush1.bf16.msra.mxu0 %v3666
  %3780 = vmatprep.subr.bf16.mxu0 %v3665
  %3781 = vmatpush1.bf16.msra.mxu0 %v3664
  %3782 = vmatprep.subr.bf16.mxu0 %v3663
  %3783 = vmatpush1.bf16.msra.mxu0 %v3662
  %3784 = vmatprep.subr.bf16.mxu0 %v3693
  %3785 = vmatpush2.bf16.msra.mxu0 %v3692
  %3786 = vmatprep.subr.bf16.mxu0 %v3691
  %3787 = vmatpush2.bf16.msra.mxu0 %v3690
  %3788 = vmatprep.subr.bf16.mxu0 %v3689
  %3789 = vmatpush2.bf16.msra.mxu0 %v3688
  %3790 = vmatprep.subr.bf16.mxu0 %v3687
  %3791 = vmatpush2.bf16.msra.mxu0 %v3686
  %3792 = vmatprep.subr.bf16.mxu0 %v3685
  %3793 = vmatpush2.bf16.msra.mxu0 %v3684
  %3794 = vmatprep.subr.bf16.mxu0 %v3683
  %3795 = vmatpush2.bf16.msra.mxu0 %v3682
  %3796 = vmatprep.subr.bf16.mxu0 %v3681
  %3797 = vmatpush2.bf16.msra.mxu0 %v3680
  %3798 = vmatprep.subr.bf16.mxu0 %v3679
  %3799 = vmatpush2.bf16.msra.mxu0 %v3678
  %3800 = vmatprep.mubr.bf16.mxu0 %v3753
  %3801 = vmatmul.mubr.bf16.gmra.mxu0 %v3752
  %v3802 = vpop.f32.mrf.mxu0
  %v3803 = vadd.f32 %v3715, %v3802
  %v3804 = vpop.f32.mrf.mxu0
  %v3805 = vadd.f32 %v3715, %v3804
  %v3806 = vpop.f32.mrf.mxu0
  %v3807 = vadd.f32 %v3720, %v3806
  %v3808 = vpop.f32.mrf.mxu0
  %v3809 = vadd.f32 %v3720, %v3808
  %3810 = vmatprep.mubr.bf16.mxu0 %v3756
  %3811 = vmatmul.mubr.bf16.gmra.mxu0 %v3755
  %v3812 = vpop.f32.mrf.mxu0
  %v3813 = vadd.f32 %v3725, %v3812
  %v3814 = vpop.f32.mrf.mxu0
  %v3815 = vadd.f32 %v3725, %v3814
  %v3816 = vpop.f32.mrf.mxu0
  %v3817 = vadd.f32 %v3730, %v3816
  %v3818 = vpop.f32.mrf.mxu0
  %v3819 = vadd.f32 %v3730, %v3818
  %3820 = vdwg.mxu0
  %3821 = vmatprep.subr.bf16.mxu0 0
  %3822 = vmatpush1.bf16.msra.mxu0 0
  %3823 = vmatprep.subr.bf16.mxu0 0
  %3824 = vmatpush1.bf16.msra.mxu0 0
  %3825 = vmatprep.subr.bf16.mxu0 0
  %3826 = vmatpush1.bf16.msra.mxu0 0
  %3827 = vmatprep.subr.bf16.mxu0 0
  %3828 = vmatpush1.bf16.msra.mxu0 0
  %3829 = vmatprep.subr.bf16.mxu0 0
  %3830 = vmatpush1.bf16.msra.mxu0 0
  %3831 = vmatprep.subr.bf16.mxu0 0
  %3832 = vmatpush1.bf16.msra.mxu0 0
  %3833 = vmatprep.subr.bf16.mxu0 %v3697
  %3834 = vmatpush1.bf16.msra.mxu0 %v3696
  %3835 = vmatprep.subr.bf16.mxu0 %v3695
  %3836 = vmatpush1.bf16.msra.mxu0 %v3694
  %3837 = vmatprep.subr.bf16.mxu0 0
  %3838 = vmatpush2.bf16.msra.mxu0 0
  %3839 = vmatprep.subr.bf16.mxu0 0
  %3840 = vmatpush2.bf16.msra.mxu0 0
  %3841 = vmatprep.subr.bf16.mxu0 0
  %3842 = vmatpush2.bf16.msra.mxu0 0
  %3843 = vmatprep.subr.bf16.mxu0 0
  %3844 = vmatpush2.bf16.msra.mxu0 0
  %3845 = vmatprep.subr.bf16.mxu0 0
  %3846 = vmatpush2.bf16.msra.mxu0 0
  %3847 = vmatprep.subr.bf16.mxu0 0
  %3848 = vmatpush2.bf16.msra.mxu0 0
  %3849 = vmatprep.subr.bf16.mxu0 0
  %3850 = vmatpush2.bf16.msra.mxu0 0
  %3851 = vmatprep.subr.bf16.mxu0 0
  %3852 = vmatpush2.bf16.msra.mxu0 0
  %3853 = vmatprep.mubr.bf16.mxu0 0
  %3854 = vmatmul.mubr.bf16.gmra.mxu0 %v3763
  %v3855 = vpop.f32.mrf.mxu0
  %v3856 = vadd.f32 %v3803, %v3855
  %v3857 = vpop.f32.mrf.mxu0
  %v3858 = vadd.f32 %v3805, %v3857
  %v3859 = vpop.f32.mrf.mxu0
  %v3860 = vadd.f32 %v3807, %v3859
  %v3861 = vpop.f32.mrf.mxu0
  %v3862 = vadd.f32 %v3809, %v3861
  %3863 = vmatprep.mubr.bf16.mxu0 0
  %3864 = vmatmul.mubr.bf16.gmra.mxu0 %v3766
  %v3865 = vpop.f32.mrf.mxu0
  %v3866 = vadd.f32 %v3813, %v3865
  %v3867 = vpop.f32.mrf.mxu0
  %v3868 = vadd.f32 %v3815, %v3867
  %v3869 = vpop.f32.mrf.mxu0
  %v3870 = vadd.f32 %v3817, %v3869
  %v3871 = vpop.f32.mrf.mxu0
  %v3872 = vadd.f32 %v3819, %v3871
  %3873 = vdwg.mxu0
  %v3874 = vmax.f32 %v3856, 0.0
  %v3875 = vmax.f32 %v3858, 0.0
  %v3876 = vmax.f32 %v3860, 0.0
  %v3877 = vmax.f32 %v3862, 0.0
  %v3878 = vmax.f32 %v3866, 0.0
  %v3879 = vmax.f32 %v3868, 0.0
  %v3880 = vmax.f32 %v3870, 0.0
  %v3881 = vmax.f32 %v3872, 0.0
  %v3882 = vmul.f32 %v3874, %v483
  %v3883 = vmul.f32 %v3875, %v487
  %v3884 = vmul.f32 %v3876, %v483
  %v3885 = vmul.f32 %v3877, %v487
  %v3886 = vmul.f32 %v3878, %v483
  %v3887 = vmul.f32 %v3879, %v487
  %v3888 = vmul.f32 %v3880, %v483
  %v3889 = vmul.f32 %v3881, %v487
  %3890 = vrot.lane.b32.xlu0 %v3882, 11
  %v3891 = vpop.permute.xlu0 %3890
  %3892 = vrot.lane.b32.xlu0 %v3884, 11
  %v3893 = vpop.permute.xlu0 %3892
  %3894 = vrot.lane.b32.xlu0 %v3886, 11
  %v3895 = vpop.permute.xlu0 %3894
  %3896 = vrot.lane.b32.xlu0 %v3888, 11
  %v3897 = vpop.permute.xlu0 %3896
  %3898 = vrot.lane.b32.xlu0 %v3883, 11
  %v3899 = vpop.permute.xlu0 %3898
  %3900 = vrot.lane.b32.xlu0 %v3885, 11
  %v3901 = vpop.permute.xlu0 %3900
  %3902 = vrot.lane.b32.xlu0 %v3887, 11
  %v3903 = vpop.permute.xlu0 %3902
  %3904 = vrot.lane.b32.xlu0 %v3889, 11
  %v3905 = vpop.permute.xlu0 %3904
  %v3906 = vsel %vm76, %v3891, %v3899
  %v3907 = vsel %vm76, %v3893, %v3901
  %v3908 = vsel %vm76, %v3895, %v3903
  %v3909 = vsel %vm76, %v3897, %v3905
  %v3910 = vsel %vm76, %v3899, %v3891
  %v3911 = vsel %vm76, %v3901, %v3893
  %v3912 = vsel %vm76, %v3903, %v3895
  %v3913 = vsel %vm76, %v3905, %v3897
  %3914 = vrot.lane.b32.xlu0 %v3882, 10
  %v3915 = vpop.permute.xlu0 %3914
  %3916 = vrot.lane.b32.xlu0 %v3884, 10
  %v3917 = vpop.permute.xlu0 %3916
  %3918 = vrot.lane.b32.xlu0 %v3886, 10
  %v3919 = vpop.permute.xlu0 %3918
  %3920 = vrot.lane.b32.xlu0 %v3888, 10
  %v3921 = vpop.permute.xlu0 %3920
  %3922 = vrot.lane.b32.xlu0 %v3883, 10
  %v3923 = vpop.permute.xlu0 %3922
  %3924 = vrot.lane.b32.xlu0 %v3885, 10
  %v3925 = vpop.permute.xlu0 %3924
  %3926 = vrot.lane.b32.xlu0 %v3887, 10
  %v3927 = vpop.permute.xlu0 %3926
  %3928 = vrot.lane.b32.xlu0 %v3889, 10
  %v3929 = vpop.permute.xlu0 %3928
  %v3930 = vsel %vm101, %v3915, %v3923
  %v3931 = vsel %vm101, %v3917, %v3925
  %v3932 = vsel %vm101, %v3919, %v3927
  %v3933 = vsel %vm101, %v3921, %v3929
  %v3934 = vsel %vm101, %v3923, %v3915
  %v3935 = vsel %vm101, %v3925, %v3917
  %v3936 = vsel %vm101, %v3927, %v3919
  %v3937 = vsel %vm101, %v3929, %v3921
  %3938 = vrot.lane.b32.xlu0 %v3882, 9
  %v3939 = vpop.permute.xlu0 %3938
  %3940 = vrot.lane.b32.xlu0 %v3884, 9
  %v3941 = vpop.permute.xlu0 %3940
  %3942 = vrot.lane.b32.xlu0 %v3886, 9
  %v3943 = vpop.permute.xlu0 %3942
  %3944 = vrot.lane.b32.xlu0 %v3888, 9
  %v3945 = vpop.permute.xlu0 %3944
  %3946 = vrot.lane.b32.xlu0 %v3883, 9
  %v3947 = vpop.permute.xlu0 %3946
  %3948 = vrot.lane.b32.xlu0 %v3885, 9
  %v3949 = vpop.permute.xlu0 %3948
  %3950 = vrot.lane.b32.xlu0 %v3887, 9
  %v3951 = vpop.permute.xlu0 %3950
  %3952 = vrot.lane.b32.xlu0 %v3889, 9
  %v3953 = vpop.permute.xlu0 %3952
  %v3954 = vsel %vm126, %v3939, %v3947
  %v3955 = vsel %vm126, %v3941, %v3949
  %v3956 = vsel %vm126, %v3943, %v3951
  %v3957 = vsel %vm126, %v3945, %v3953
  %v3958 = vsel %vm126, %v3947, %v3939
  %v3959 = vsel %vm126, %v3949, %v3941
  %v3960 = vsel %vm126, %v3951, %v3943
  %v3961 = vsel %vm126, %v3953, %v3945
  %3962 = vrot.lane.b32.xlu0 %v3882, 1
  %v3963 = vpop.permute.xlu0 %3962
  %3964 = vrot.lane.b32.xlu0 %v3884, 1
  %v3965 = vpop.permute.xlu0 %3964
  %3966 = vrot.lane.b32.xlu0 %v3886, 1
  %v3967 = vpop.permute.xlu0 %3966
  %3968 = vrot.lane.b32.xlu0 %v3888, 1
  %v3969 = vpop.permute.xlu0 %3968
  %3970 = vrot.lane.b32.xlu0 %v3883, 1
  %v3971 = vpop.permute.xlu0 %3970
  %3972 = vrot.lane.b32.xlu0 %v3885, 1
  %v3973 = vpop.permute.xlu0 %3972
  %3974 = vrot.lane.b32.xlu0 %v3887, 1
  %v3975 = vpop.permute.xlu0 %3974
  %3976 = vrot.lane.b32.xlu0 %v3889, 1
  %v3977 = vpop.permute.xlu0 %3976
  %v3978 = vsel %vm151, %v3963, %v3971
  %v3979 = vsel %vm151, %v3965, %v3973
  %v3980 = vsel %vm151, %v3967, %v3975
  %v3981 = vsel %vm151, %v3969, %v3977
  %v3982 = vsel %vm151, %v3971, %v3963
  %v3983 = vsel %vm151, %v3973, %v3965
  %v3984 = vsel %vm151, %v3975, %v3967
  %v3985 = vsel %vm151, %v3977, %v3969
  %3986 = vrot.lane.b32.xlu0 %v3882, 127
  %v3987 = vpop.permute.xlu0 %3986
  %3988 = vrot.lane.b32.xlu0 %v3884, 127
  %v3989 = vpop.permute.xlu0 %3988
  %3990 = vrot.lane.b32.xlu0 %v3886, 127
  %v3991 = vpop.permute.xlu0 %3990
  %3992 = vrot.lane.b32.xlu0 %v3888, 127
  %v3993 = vpop.permute.xlu0 %3992
  %3994 = vrot.lane.b32.xlu0 %v3883, 127
  %v3995 = vpop.permute.xlu0 %3994
  %3996 = vrot.lane.b32.xlu0 %v3885, 127
  %v3997 = vpop.permute.xlu0 %3996
  %3998 = vrot.lane.b32.xlu0 %v3887, 127
  %v3999 = vpop.permute.xlu0 %3998
  %4000 = vrot.lane.b32.xlu0 %v3889, 127
  %v4001 = vpop.permute.xlu0 %4000
  %v4002 = vsel %vm176, %v3987, %v3995
  %v4003 = vsel %vm176, %v3989, %v3997
  %v4004 = vsel %vm176, %v3991, %v3999
  %v4005 = vsel %vm176, %v3993, %v4001
  %v4006 = vsel %vm176, %v3995, %v3987
  %v4007 = vsel %vm176, %v3997, %v3989
  %v4008 = vsel %vm176, %v3999, %v3991
  %v4009 = vsel %vm176, %v4001, %v3993
  %4010 = vrot.lane.b32.xlu0 %v3882, 119
  %v4011 = vpop.permute.xlu0 %4010
  %4012 = vrot.lane.b32.xlu0 %v3884, 119
  %v4013 = vpop.permute.xlu0 %4012
  %4014 = vrot.lane.b32.xlu0 %v3886, 119
  %v4015 = vpop.permute.xlu0 %4014
  %4016 = vrot.lane.b32.xlu0 %v3888, 119
  %v4017 = vpop.permute.xlu0 %4016
  %4018 = vrot.lane.b32.xlu0 %v3883, 119
  %v4019 = vpop.permute.xlu0 %4018
  %4020 = vrot.lane.b32.xlu0 %v3885, 119
  %v4021 = vpop.permute.xlu0 %4020
  %4022 = vrot.lane.b32.xlu0 %v3887, 119
  %v4023 = vpop.permute.xlu0 %4022
  %4024 = vrot.lane.b32.xlu0 %v3889, 119
  %v4025 = vpop.permute.xlu0 %4024
  %v4026 = vsel %vm201, %v4011, %v4019
  %v4027 = vsel %vm201, %v4013, %v4021
  %v4028 = vsel %vm201, %v4015, %v4023
  %v4029 = vsel %vm201, %v4017, %v4025
  %v4030 = vsel %vm201, %v4019, %v4011
  %v4031 = vsel %vm201, %v4021, %v4013
  %v4032 = vsel %vm201, %v4023, %v4015
  %v4033 = vsel %vm201, %v4025, %v4017
  %4034 = vrot.lane.b32.xlu0 %v3882, 118
  %v4035 = vpop.permute.xlu0 %4034
  %4036 = vrot.lane.b32.xlu0 %v3884, 118
  %v4037 = vpop.permute.xlu0 %4036
  %4038 = vrot.lane.b32.xlu0 %v3886, 118
  %v4039 = vpop.permute.xlu0 %4038
  %4040 = vrot.lane.b32.xlu0 %v3888, 118
  %v4041 = vpop.permute.xlu0 %4040
  %4042 = vrot.lane.b32.xlu0 %v3883, 118
  %v4043 = vpop.permute.xlu0 %4042
  %4044 = vrot.lane.b32.xlu0 %v3885, 118
  %v4045 = vpop.permute.xlu0 %4044
  %4046 = vrot.lane.b32.xlu0 %v3887, 118
  %v4047 = vpop.permute.xlu0 %4046
  %4048 = vrot.lane.b32.xlu0 %v3889, 118
  %v4049 = vpop.permute.xlu0 %4048
  %v4050 = vsel %vm226, %v4035, %v4043
  %v4051 = vsel %vm226, %v4037, %v4045
  %v4052 = vsel %vm226, %v4039, %v4047
  %v4053 = vsel %vm226, %v4041, %v4049
  %v4054 = vsel %vm226, %v4043, %v4035
  %v4055 = vsel %vm226, %v4045, %v4037
  %v4056 = vsel %vm226, %v4047, %v4039
  %v4057 = vsel %vm226, %v4049, %v4041
  %4058 = vrot.lane.b32.xlu0 %v3882, 117
  %v4059 = vpop.permute.xlu0 %4058
  %4060 = vrot.lane.b32.xlu0 %v3884, 117
  %v4061 = vpop.permute.xlu0 %4060
  %4062 = vrot.lane.b32.xlu0 %v3886, 117
  %v4063 = vpop.permute.xlu0 %4062
  %4064 = vrot.lane.b32.xlu0 %v3888, 117
  %v4065 = vpop.permute.xlu0 %4064
  %4066 = vrot.lane.b32.xlu0 %v3883, 117
  %v4067 = vpop.permute.xlu0 %4066
  %4068 = vrot.lane.b32.xlu0 %v3885, 117
  %v4069 = vpop.permute.xlu0 %4068
  %4070 = vrot.lane.b32.xlu0 %v3887, 117
  %v4071 = vpop.permute.xlu0 %4070
  %4072 = vrot.lane.b32.xlu0 %v3889, 117
  %v4073 = vpop.permute.xlu0 %4072
  %v4074 = vsel %vm251, %v4059, %v4067
  %v4075 = vsel %vm251, %v4061, %v4069
  %v4076 = vsel %vm251, %v4063, %v4071
  %v4077 = vsel %vm251, %v4065, %v4073
  %v4078 = vsel %vm251, %v4067, %v4059
  %v4079 = vsel %vm251, %v4069, %v4061
  %v4080 = vsel %vm251, %v4071, %v4063
  %v4081 = vsel %vm251, %v4073, %v4065
  %v4082 = vpack.c.bf16 %v3911, %v3910
  %v4083 = vpack.c.bf16 %v3907, %v3906
  %v4084 = vpack.c.bf16 %v3913, %v3912
  %v4085 = vpack.c.bf16 %v3909, %v3908
  %v4086 = vpack.c.bf16 %v3935, %v3934
  %v4087 = vpack.c.bf16 %v3931, %v3930
  %v4088 = vpack.c.bf16 %v3937, %v3936
  %v4089 = vpack.c.bf16 %v3933, %v3932
  %v4090 = vpack.c.bf16 %v3959, %v3958
  %v4091 = vpack.c.bf16 %v3955, %v3954
  %v4092 = vpack.c.bf16 %v3961, %v3960
  %v4093 = vpack.c.bf16 %v3957, %v3956
  %v4094 = vpack.c.bf16 %v3983, %v3982
  %v4095 = vpack.c.bf16 %v3979, %v3978
  %v4096 = vpack.c.bf16 %v3985, %v3984
  %v4097 = vpack.c.bf16 %v3981, %v3980
  %v4098 = vpack.c.bf16 %v3884, %v3882
  %v4099 = vpack.c.bf16 %v3885, %v3883
  %v4100 = vpack.c.bf16 %v3888, %v3886
  %v4101 = vpack.c.bf16 %v3889, %v3887
  %v4102 = vpack.c.bf16 %v4003, %v4002
  %v4103 = vpack.c.bf16 %v4007, %v4006
  %v4104 = vpack.c.bf16 %v4005, %v4004
  %v4105 = vpack.c.bf16 %v4009, %v4008
  %v4106 = vpack.c.bf16 %v4027, %v4026
  %v4107 = vpack.c.bf16 %v4031, %v4030
  %v4108 = vpack.c.bf16 %v4029, %v4028
  %v4109 = vpack.c.bf16 %v4033, %v4032
  %v4110 = vpack.c.bf16 %v4051, %v4050
  %v4111 = vpack.c.bf16 %v4055, %v4054
  %v4112 = vpack.c.bf16 %v4053, %v4052
  %v4113 = vpack.c.bf16 %v4057, %v4056
  %v4114 = vpack.c.bf16 %v4075, %v4074
  %v4115 = vpack.c.bf16 %v4079, %v4078
  %v4116 = vpack.c.bf16 %v4077, %v4076
  %v4117 = vpack.c.bf16 %v4081, %v4080
  %s4118 = scalar_lea.vmem %s3, 432
  %v4119 = vld [vmem:[%s4118] sm:$0xff]
  %v4120 = vld [vmem:[%s4118 + $0x8] sm:$0xf]
  %v4121 = vld [vmem:[%s4118 + $0xc] sm:$0xff]
  %v4122 = vld [vmem:[%s4118 + $0x14] sm:$0xf]
  %v4123 = vld [vmem:[%s4118 + $0x18] sm:$0xff]
  %v4124 = vld [vmem:[%s4118 + $0x20] sm:$0xf]
  %v4125 = vld [vmem:[%s4118 + $0x24] sm:$0xff]
  %v4126 = vld [vmem:[%s4118 + $0x2c] sm:$0xf]
  %s4127 = scalar_lea.vmem %s4, 288
  %v4128 = vld [vmem:[%s4127] sm:$0xff]
  %v4129 = vld [vmem:[%s4127 + $0x8] sm:$0xff]
  %v4130 = vld [vmem:[%s4127 + $0x10] sm:$0xff]
  %v4131 = vld [vmem:[%s4127 + $0x18] sm:$0xff]
  %4133 = vset.pattern.permute.xlu0 0
  %4134 = vperm.xlu0 %4133, %v4128
  %v4135 = vpop.permute.xlu0 %4134
  %4138 = vset.pattern.permute.xlu0 0
  %4139 = vperm.xlu0 %4138, %v4129
  %v4140 = vpop.permute.xlu0 %4139
  %4143 = vset.pattern.permute.xlu0 0
  %4144 = vperm.xlu0 %4143, %v4130
  %v4145 = vpop.permute.xlu0 %4144
  %4148 = vset.pattern.permute.xlu0 0
  %4149 = vperm.xlu0 %4148, %v4131
  %v4150 = vpop.permute.xlu0 %4149
  %v4160 = vunpack.c.l.b16 %v4119
  %v4161 = vunpack.c.h.b16 %v4119
  %v4162 = vunpack.c.l.b16 %v4120
  %v4163 = vunpack.c.l.b16 %v4121
  %v4164 = vunpack.c.h.b16 %v4121
  %v4165 = vunpack.c.l.b16 %v4122
  %v4166 = vunpack.c.l.b16 %v4123
  %v4167 = vunpack.c.h.b16 %v4123
  %v4168 = vunpack.c.l.b16 %v4124
  %v4169 = vunpack.c.l.b16 %v4125
  %v4170 = vunpack.c.h.b16 %v4125
  %v4171 = vunpack.c.l.b16 %v4126
  %v4172 = vpack.c.b16 %v4163, %v4160
  %v4173 = vpack.c.b16 %v4164, %v4161
  %v4174 = vpack.c.b16 %v4165, %v4162
  %v4175 = vpack.c.b16 %v4169, %v4166
  %v4176 = vpack.c.b16 %v4170, %v4167
  %v4177 = vpack.c.b16 %v4171, %v4168
  %v4183 = vsel %vm358, %v4174, 0
  %v4186 = vsel %vm358, %v4177, 0
  %4188 = vmatprep.subr.bf16.mxu0 %v4097
  %4189 = vmatpush1.bf16.msra.mxu0 %v4096
  %4190 = vmatprep.subr.bf16.mxu0 %v4095
  %4191 = vmatpush1.bf16.msra.mxu0 %v4094
  %4192 = vmatprep.subr.bf16.mxu0 %v4093
  %4193 = vmatpush1.bf16.msra.mxu0 %v4092
  %4194 = vmatprep.subr.bf16.mxu0 %v4091
  %4195 = vmatpush1.bf16.msra.mxu0 %v4090
  %4196 = vmatprep.subr.bf16.mxu0 %v4089
  %4197 = vmatpush1.bf16.msra.mxu0 %v4088
  %4198 = vmatprep.subr.bf16.mxu0 %v4087
  %4199 = vmatpush1.bf16.msra.mxu0 %v4086
  %4200 = vmatprep.subr.bf16.mxu0 %v4085
  %4201 = vmatpush1.bf16.msra.mxu0 %v4084
  %4202 = vmatprep.subr.bf16.mxu0 %v4083
  %4203 = vmatpush1.bf16.msra.mxu0 %v4082
  %4204 = vmatprep.subr.bf16.mxu0 %v4113
  %4205 = vmatpush2.bf16.msra.mxu0 %v4112
  %4206 = vmatprep.subr.bf16.mxu0 %v4111
  %4207 = vmatpush2.bf16.msra.mxu0 %v4110
  %4208 = vmatprep.subr.bf16.mxu0 %v4109
  %4209 = vmatpush2.bf16.msra.mxu0 %v4108
  %4210 = vmatprep.subr.bf16.mxu0 %v4107
  %4211 = vmatpush2.bf16.msra.mxu0 %v4106
  %4212 = vmatprep.subr.bf16.mxu0 %v4105
  %4213 = vmatpush2.bf16.msra.mxu0 %v4104
  %4214 = vmatprep.subr.bf16.mxu0 %v4103
  %4215 = vmatpush2.bf16.msra.mxu0 %v4102
  %4216 = vmatprep.subr.bf16.mxu0 %v4101
  %4217 = vmatpush2.bf16.msra.mxu0 %v4100
  %4218 = vmatprep.subr.bf16.mxu0 %v4099
  %4219 = vmatpush2.bf16.msra.mxu0 %v4098
  %4220 = vmatprep.mubr.bf16.mxu0 %v4173
  %4221 = vmatmul.mubr.bf16.gmra.mxu0 %v4172
  %v4222 = vpop.f32.mrf.mxu0
  %v4223 = vadd.f32 %v4135, %v4222
  %v4224 = vpop.f32.mrf.mxu0
  %v4225 = vadd.f32 %v4135, %v4224
  %v4226 = vpop.f32.mrf.mxu0
  %v4227 = vadd.f32 %v4140, %v4226
  %v4228 = vpop.f32.mrf.mxu0
  %v4229 = vadd.f32 %v4140, %v4228
  %4230 = vmatprep.mubr.bf16.mxu0 %v4176
  %4231 = vmatmul.mubr.bf16.gmra.mxu0 %v4175
  %v4232 = vpop.f32.mrf.mxu0
  %v4233 = vadd.f32 %v4145, %v4232
  %v4234 = vpop.f32.mrf.mxu0
  %v4235 = vadd.f32 %v4145, %v4234
  %v4236 = vpop.f32.mrf.mxu0
  %v4237 = vadd.f32 %v4150, %v4236
  %v4238 = vpop.f32.mrf.mxu0
  %v4239 = vadd.f32 %v4150, %v4238
  %4240 = vdwg.mxu0
  %4241 = vmatprep.subr.bf16.mxu0 0
  %4242 = vmatpush1.bf16.msra.mxu0 0
  %4243 = vmatprep.subr.bf16.mxu0 0
  %4244 = vmatpush1.bf16.msra.mxu0 0
  %4245 = vmatprep.subr.bf16.mxu0 0
  %4246 = vmatpush1.bf16.msra.mxu0 0
  %4247 = vmatprep.subr.bf16.mxu0 0
  %4248 = vmatpush1.bf16.msra.mxu0 0
  %4249 = vmatprep.subr.bf16.mxu0 0
  %4250 = vmatpush1.bf16.msra.mxu0 0
  %4251 = vmatprep.subr.bf16.mxu0 0
  %4252 = vmatpush1.bf16.msra.mxu0 0
  %4253 = vmatprep.subr.bf16.mxu0 %v4117
  %4254 = vmatpush1.bf16.msra.mxu0 %v4116
  %4255 = vmatprep.subr.bf16.mxu0 %v4115
  %4256 = vmatpush1.bf16.msra.mxu0 %v4114
  %4257 = vmatprep.subr.bf16.mxu0 0
  %4258 = vmatpush2.bf16.msra.mxu0 0
  %4259 = vmatprep.subr.bf16.mxu0 0
  %4260 = vmatpush2.bf16.msra.mxu0 0
  %4261 = vmatprep.subr.bf16.mxu0 0
  %4262 = vmatpush2.bf16.msra.mxu0 0
  %4263 = vmatprep.subr.bf16.mxu0 0
  %4264 = vmatpush2.bf16.msra.mxu0 0
  %4265 = vmatprep.subr.bf16.mxu0 0
  %4266 = vmatpush2.bf16.msra.mxu0 0
  %4267 = vmatprep.subr.bf16.mxu0 0
  %4268 = vmatpush2.bf16.msra.mxu0 0
  %4269 = vmatprep.subr.bf16.mxu0 0
  %4270 = vmatpush2.bf16.msra.mxu0 0
  %4271 = vmatprep.subr.bf16.mxu0 0
  %4272 = vmatpush2.bf16.msra.mxu0 0
  %4273 = vmatprep.mubr.bf16.mxu0 0
  %4274 = vmatmul.mubr.bf16.gmra.mxu0 %v4183
  %v4275 = vpop.f32.mrf.mxu0
  %v4276 = vadd.f32 %v4223, %v4275
  %v4277 = vpop.f32.mrf.mxu0
  %v4278 = vadd.f32 %v4225, %v4277
  %v4279 = vpop.f32.mrf.mxu0
  %v4280 = vadd.f32 %v4227, %v4279
  %v4281 = vpop.f32.mrf.mxu0
  %v4282 = vadd.f32 %v4229, %v4281
  %4283 = vmatprep.mubr.bf16.mxu0 0
  %4284 = vmatmul.mubr.bf16.gmra.mxu0 %v4186
  %v4285 = vpop.f32.mrf.mxu0
  %v4286 = vadd.f32 %v4233, %v4285
  %v4287 = vpop.f32.mrf.mxu0
  %v4288 = vadd.f32 %v4235, %v4287
  %v4289 = vpop.f32.mrf.mxu0
  %v4290 = vadd.f32 %v4237, %v4289
  %v4291 = vpop.f32.mrf.mxu0
  %v4292 = vadd.f32 %v4239, %v4291
  %4293 = vdwg.mxu0
  %v4294 = vadd.f32 %v4276, %v3462
  %v4295 = vadd.f32 %v4278, %v3463
  %v4296 = vadd.f32 %v4280, %v3464
  %v4297 = vadd.f32 %v4282, %v3465
  %v4298 = vadd.f32 %v4286, %v3466
  %v4299 = vadd.f32 %v4288, %v3467
  %v4300 = vadd.f32 %v4290, %v3468
  %v4301 = vadd.f32 %v4292, %v3469
  %v4302 = vmax.f32 %v4294, 0.0
  %v4303 = vmax.f32 %v4295, 0.0
  %v4304 = vmax.f32 %v4296, 0.0
  %v4305 = vmax.f32 %v4297, 0.0
  %v4306 = vmax.f32 %v4298, 0.0
  %v4307 = vmax.f32 %v4299, 0.0
  %v4308 = vmax.f32 %v4300, 0.0
  %v4309 = vmax.f32 %v4301, 0.0
  %v4310 = vmul.f32 %v4302, %v483
  %v4311 = vmul.f32 %v4303, %v487
  %v4312 = vmul.f32 %v4304, %v483
  %v4313 = vmul.f32 %v4305, %v487
  %v4314 = vmul.f32 %v4306, %v483
  %v4315 = vmul.f32 %v4307, %v487
  %v4316 = vmul.f32 %v4308, %v483
  %v4317 = vmul.f32 %v4309, %v487
  %v4318 = vld [vmem:[%s2] sm:$0xff]
  %v4319 = vld [vmem:[%s2 + $0x8] sm:$0xff]
  %v4320 = vld [vmem:[%s2 + $0x10] sm:$0xff]
  %v4321 = vld [vmem:[%s2 + $0x18] sm:$0xff]
  %v4322 = vld [vmem:[%s2 + $0x20] sm:$0xff]
  %v4323 = vld [vmem:[%s2 + $0x28] sm:$0xff]
  %v4324 = vld [vmem:[%s2 + $0x30] sm:$0xff]
  %v4325 = vld [vmem:[%s2 + $0x38] sm:$0xff]
  %v4326 = vld [vmem:[%s2 + $0x40] sm:$0xff]
  %v4327 = vld [vmem:[%s2 + $0x48] sm:$0xff]
  %v4328 = vld [vmem:[%s2 + $0x50] sm:$0xff]
  %v4329 = vld [vmem:[%s2 + $0x58] sm:$0xff]
  %v4330 = vld [vmem:[%s2 + $0x60] sm:$0xff]
  %v4331 = vld [vmem:[%s2 + $0x68] sm:$0xff]
  %v4332 = vld [vmem:[%s2 + $0x70] sm:$0xff]
  %v4333 = vld [vmem:[%s2 + $0x78] sm:$0xff]
  %v4334 = vld [vmem:[%s2 + $0x80] sm:$0xff]
  %v4335 = vld [vmem:[%s2 + $0x88] sm:$0xff]
  %v4336 = vld [vmem:[%s2 + $0x90] sm:$0xff]
  %v4337 = vld [vmem:[%s2 + $0x98] sm:$0xff]
  %v4338 = vld [vmem:[%s2 + $0xa0] sm:$0xff]
  %v4339 = vld [vmem:[%s2 + $0xa8] sm:$0xff]
  %v4340 = vld [vmem:[%s2 + $0xb0] sm:$0xff]
  %v4341 = vld [vmem:[%s2 + $0xb8] sm:$0xff]
  %v4342 = vld [vmem:[%s2 + $0xc0] sm:$0xff]
  %v4343 = vld [vmem:[%s2 + $0xc8] sm:$0xff]
  %v4344 = vld [vmem:[%s2 + $0xd0] sm:$0xff]
  %v4345 = vld [vmem:[%s2 + $0xd8] sm:$0xff]
  %v4346 = vld [vmem:[%s2 + $0xe0] sm:$0xff]
  %v4347 = vld [vmem:[%s2 + $0xe8] sm:$0xff]
  %v4348 = vld [vmem:[%s2 + $0xf0] sm:$0xff]
  %v4349 = vld [vmem:[%s2 + $0xf8] sm:$0xff]
  %4350 = vmatprep.subr.mxu0 0.0
  %4351 = vmatpush1.msra.mxu0 %v4333
  %4352 = vmatprep.subr.mxu0 0.0
  %4353 = vmatpush1.msra.mxu0 %v4332
  %4354 = vmatprep.subr.mxu0 0.0
  %4355 = vmatpush1.msra.mxu0 %v4331
  %4356 = vmatprep.subr.mxu0 0.0
  %4357 = vmatpush1.msra.mxu0 %v4330
  %4358 = vmatprep.subr.mxu0 0.0
  %4359 = vmatpush1.msra.mxu0 %v4329
  %4360 = vmatprep.subr.mxu0 0.0
  %4361 = vmatpush1.msra.mxu0 %v4328
  %4362 = vmatprep.subr.mxu0 0.0
  %4363 = vmatpush1.msra.mxu0 %v4327
  %4364 = vmatprep.subr.mxu0 0.0
  %4365 = vmatpush1.msra.mxu0 %v4326
  %4366 = vmatprep.subr.mxu0 0.0
  %4367 = vmatpush1.msra.mxu0 %v4325
  %4368 = vmatprep.subr.mxu0 0.0
  %4369 = vmatpush1.msra.mxu0 %v4324
  %4370 = vmatprep.subr.mxu0 0.0
  %4371 = vmatpush1.msra.mxu0 %v4323
  %4372 = vmatprep.subr.mxu0 0.0
  %4373 = vmatpush1.msra.mxu0 %v4322
  %4374 = vmatprep.subr.mxu0 0.0
  %4375 = vmatpush1.msra.mxu0 %v4321
  %4376 = vmatprep.subr.mxu0 0.0
  %4377 = vmatpush1.msra.mxu0 %v4320
  %4378 = vmatprep.subr.mxu0 0.0
  %4379 = vmatpush1.msra.mxu0 %v4319
  %4380 = vmatprep.subr.mxu0 0.0
  %4381 = vmatpush1.msra.mxu0 %v4318
  %4382 = vmatprep.subr.mxu0 0.0
  %4383 = vmatpush2.msra.mxu0 %v4349
  %4384 = vmatprep.subr.mxu0 0.0
  %4385 = vmatpush2.msra.mxu0 %v4348
  %4386 = vmatprep.subr.mxu0 0.0
  %4387 = vmatpush2.msra.mxu0 %v4347
  %4388 = vmatprep.subr.mxu0 0.0
  %4389 = vmatpush2.msra.mxu0 %v4346
  %4390 = vmatprep.subr.mxu0 0.0
  %4391 = vmatpush2.msra.mxu0 %v4345
  %4392 = vmatprep.subr.mxu0 0.0
  %4393 = vmatpush2.msra.mxu0 %v4344
  %4394 = vmatprep.subr.mxu0 0.0
  %4395 = vmatpush2.msra.mxu0 %v4343
  %4396 = vmatprep.subr.mxu0 0.0
  %4397 = vmatpush2.msra.mxu0 %v4342
  %4398 = vmatprep.subr.mxu0 0.0
  %4399 = vmatpush2.msra.mxu0 %v4341
  %4400 = vmatprep.subr.mxu0 0.0
  %4401 = vmatpush2.msra.mxu0 %v4340
  %4402 = vmatprep.subr.mxu0 0.0
  %4403 = vmatpush2.msra.mxu0 %v4339
  %4404 = vmatprep.subr.mxu0 0.0
  %4405 = vmatpush2.msra.mxu0 %v4338
  %4406 = vmatprep.subr.mxu0 0.0
  %4407 = vmatpush2.msra.mxu0 %v4337
  %4408 = vmatprep.subr.mxu0 0.0
  %4409 = vmatpush2.msra.mxu0 %v4336
  %4410 = vmatprep.subr.mxu0 0.0
  %4411 = vmatpush2.msra.mxu0 %v4335
  %4412 = vmatprep.subr.mxu0 0.0
  %4413 = vmatpush2.msra.mxu0 %v4334
  %4414 = vmatprep.mubr.f32.mxu0 %v4311
  %4415 = vmatmul.mubr.f32.gmra.mxu0 %v4310
  %v4416 = vpop.f32.mrf.mxu0
  %v4417 = vadd.f32 0.0, %v4416
  %v4418 = vpop.f32.mrf.mxu0
  %4419 = vmatprep.mubr.f32.mxu0 %v4313
  %4420 = vmatmul.mubr.f32.gmra.mxu0 %v4312
  %v4421 = vpop.f32.mrf.mxu0
  %v4422 = vadd.f32 0.0, %v4421
  %v4423 = vpop.f32.mrf.mxu0
  %4424 = vmatprep.mubr.f32.mxu0 %v4315
  %4425 = vmatmul.mubr.f32.gmra.mxu0 %v4314
  %v4426 = vpop.f32.mrf.mxu0
  %v4427 = vadd.f32 0.0, %v4426
  %v4428 = vpop.f32.mrf.mxu0
  %4429 = vmatprep.mubr.f32.mxu0 %v4317
  %4430 = vmatmul.mubr.f32.gmra.mxu0 %v4316
  %v4431 = vpop.f32.mrf.mxu0
  %v4432 = vadd.f32 0.0, %v4431
  %v4433 = vpop.f32.mrf.mxu0
  %4434 = vdwg.mxu0
  %v4435 = vld [vmem:[%s5] sm:$0xff]
  %v4436 = vld [vmem:[%s6] sm:$0xff]
  %4438 = vset.pattern.permute.xlu0 0
  %4439 = vperm.xlu0 %4438, %v4436
  %v4440 = vpop.permute.xlu0 %4439
  %v4443 = vsel %vm358, %v4435, 0
  %4445 = vmatprep.subr.mxu0 0.0
  %4446 = vmatpush1.msra.mxu0 0.0
  %4447 = vmatprep.subr.mxu0 0.0
  %4448 = vmatpush1.msra.mxu0 0.0
  %4449 = vmatprep.subr.mxu0 0.0
  %4450 = vmatpush1.msra.mxu0 0.0
  %4451 = vmatprep.subr.mxu0 0.0
  %4452 = vmatpush1.msra.mxu0 0.0
  %4453 = vmatprep.subr.mxu0 0.0
  %4454 = vmatpush1.msra.mxu0 0.0
  %4455 = vmatprep.subr.mxu0 0.0
  %4456 = vmatpush1.msra.mxu0 0.0
  %4457 = vmatprep.subr.mxu0 0.0
  %4458 = vmatpush1.msra.mxu0 0.0
  %4459 = vmatprep.subr.mxu0 0.0
  %4460 = vmatpush1.msra.mxu0 0.0
  %4461 = vmatprep.subr.mxu0 0.0
  %4462 = vmatpush1.msra.mxu0 0.0
  %4463 = vmatprep.subr.mxu0 0.0
  %4464 = vmatpush1.msra.mxu0 0.0
  %4465 = vmatprep.subr.mxu0 0.0
  %4466 = vmatpush1.msra.mxu0 0.0
  %4467 = vmatprep.subr.mxu0 0.0
  %4468 = vmatpush1.msra.mxu0 0.0
  %4469 = vmatprep.subr.mxu0 0.0
  %4470 = vmatpush1.msra.mxu0 %v4432
  %4471 = vmatprep.subr.mxu0 0.0
  %4472 = vmatpush1.msra.mxu0 %v4427
  %4473 = vmatprep.subr.mxu0 0.0
  %4474 = vmatpush1.msra.mxu0 %v4422
  %4475 = vmatprep.subr.mxu0 0.0
  %4476 = vmatpush1.msra.mxu0 %v4417
  %4477 = vmatprep.subr.mxu0 0.0
  %4478 = vmatpush2.msra.mxu0 0.0
  %4479 = vmatprep.subr.mxu0 0.0
  %4480 = vmatpush2.msra.mxu0 0.0
  %4481 = vmatprep.subr.mxu0 0.0
  %4482 = vmatpush2.msra.mxu0 0.0
  %4483 = vmatprep.subr.mxu0 0.0
  %4484 = vmatpush2.msra.mxu0 0.0
  %4485 = vmatprep.subr.mxu0 0.0
  %4486 = vmatpush2.msra.mxu0 0.0
  %4487 = vmatprep.subr.mxu0 0.0
  %4488 = vmatpush2.msra.mxu0 0.0
  %4489 = vmatprep.subr.mxu0 0.0
  %4490 = vmatpush2.msra.mxu0 0.0
  %4491 = vmatprep.subr.mxu0 0.0
  %4492 = vmatpush2.msra.mxu0 0.0
  %4493 = vmatprep.subr.mxu0 0.0
  %4494 = vmatpush2.msra.mxu0 0.0
  %4495 = vmatprep.subr.mxu0 0.0
  %4496 = vmatpush2.msra.mxu0 0.0
  %4497 = vmatprep.subr.mxu0 0.0
  %4498 = vmatpush2.msra.mxu0 0.0
  %4499 = vmatprep.subr.mxu0 0.0
  %4500 = vmatpush2.msra.mxu0 0.0
  %4501 = vmatprep.subr.mxu0 0.0
  %4502 = vmatpush2.msra.mxu0 0.0
  %4503 = vmatprep.subr.mxu0 0.0
  %4504 = vmatpush2.msra.mxu0 0.0
  %4505 = vmatprep.subr.mxu0 0.0
  %4506 = vmatpush2.msra.mxu0 0.0
  %4507 = vmatprep.subr.mxu0 0.0
  %4508 = vmatpush2.msra.mxu0 0.0
  %4509 = vmatprep.mubr.f32.mxu0 0.0
  %4510 = vmatmul.mubr.f32.gmra.mxu0 %v4443
  %v4511 = vpop.f32.mrf.mxu0
  %v4512 = vadd.f32 %v4440, %v4511
  %v4513 = vpop.f32.mrf.mxu0
  %4514 = vdwg.mxu0
  %v4515 = vmax.f32 %v4512, 0.0
  %vm4516 = vcmask 523264
  %v4517 = vsel %vm4516, %v4515, -inf
  %4518 = vmax.xlane.f32.xlu0 %v4517
  %v4519 = vpop.xlane.xlu0 %4518
  %v4520 = vrot.slane %v4519, 4
  %v4521 = vmax.f32 %v4519, %v4520
  %v4522 = vrot.slane %v4521, 2
  %v4523 = vmax.f32 %v4521, %v4522
  %v4524 = vrot.slane %v4523, 1
  %v4525 = vmax.f32 %v4523, %v4524
  %v4526 = vsub.f32 %v4515, %v4525
  %v4527 = vmul.f32 %v4526, 1.442695
  %v4528 = vpow.pop %v4527
  %v4529 = vsel %vm4516, %v4528, 0.0
  %4530 = vadd.xlane.f32.xlu0 %v4529
  %v4531 = vpop.xlane.xlu0 %4530
  %v4532 = vrot.slane %v4531, 4
  %v4533 = vadd.f32 %v4531, %v4532
  %v4534 = vrot.slane %v4533, 2
  %v4535 = vadd.f32 %v4533, %v4534
  %v4536 = vrot.slane %v4535, 1
  %v4537 = vadd.f32 %v4535, %v4536
  %v4538 = vrcp.pop %v4537
  %v4539 = vmul.f32 %v4528, %v4538
  %vm4540 = vcmask 1048064
  %v4541 = vsel %vm4540, %v4515, -inf
  %4542 = vmax.xlane.f32.xlu0 %v4541
  %v4543 = vpop.xlane.xlu0 %4542
  %v4544 = vrot.slane %v4543, 4
  %v4545 = vmax.f32 %v4543, %v4544
  %v4546 = vrot.slane %v4545, 2
  %v4547 = vmax.f32 %v4545, %v4546
  %v4548 = vrot.slane %v4547, 1
  %v4549 = vmax.f32 %v4547, %v4548
  %v4550 = vsub.f32 %v4515, %v4549
  %v4551 = vmul.f32 %v4550, 1.442695
  %v4552 = vpow.pop %v4551
  %4554 = vrot.lane.b32.xlu0 %v4552, 64
  %v4555 = vpop.permute.xlu0 %4554
  %v4557 = vsel %vm4516, %v4555, 0.0
  %4558 = vadd.xlane.f32.xlu0 %v4557
  %v4559 = vpop.xlane.xlu0 %4558
  %v4560 = vrot.slane %v4559, 4
  %v4561 = vadd.f32 %v4559, %v4560
  %v4562 = vrot.slane %v4561, 2
  %v4563 = vadd.f32 %v4561, %v4562
  %v4564 = vrot.slane %v4563, 1
  %v4565 = vadd.f32 %v4563, %v4564
  %v4566 = vrcp.pop %v4565
  %v4567 = vmul.f32 %v4552, %v4566
  %4569 = vrot.lane.b32.xlu0 %v4567, 64
  %v4570 = vpop.permute.xlu0 %4569
  %4572 = vst.msk [vmem:[%s13] sm:$0xff] %vm4516, %v4539
  %4573 = vst.msk [vmem:[%s13 + $0x8] sm:$0xff] %vm4516, %v4570
  %v4574 = vld [vmem:[%s7] sm:$0x3]
  %v4575 = vld [vmem:[%s8] sm:$0x3]
  %4577 = vset.pattern.permute.xlu0 0
  %4578 = vperm.xlu0 %4577, %v4575
  %v4579 = vpop.permute.xlu0 %4578
  %v4582 = vsel %vm358, %v4574, 0
  %4584 = vmatprep.subr.mxu0 0.0
  %4585 = vmatpush1.msra.mxu0 0.0
  %4586 = vmatprep.subr.mxu0 0.0
  %4587 = vmatpush1.msra.mxu0 0.0
  %4588 = vmatprep.subr.mxu0 0.0
  %4589 = vmatpush1.msra.mxu0 0.0
  %4590 = vmatprep.subr.mxu0 0.0
  %4591 = vmatpush1.msra.mxu0 0.0
  %4592 = vmatprep.subr.mxu0 0.0
  %4593 = vmatpush1.msra.mxu0 0.0
  %4594 = vmatprep.subr.mxu0 0.0
  %4595 = vmatpush1.msra.mxu0 0.0
  %4596 = vmatprep.subr.mxu0 0.0
  %4597 = vmatpush1.msra.mxu0 0.0
  %4598 = vmatprep.subr.mxu0 0.0
  %4599 = vmatpush1.msra.mxu0 0.0
  %4600 = vmatprep.subr.mxu0 0.0
  %4601 = vmatpush1.msra.mxu0 0.0
  %4602 = vmatprep.subr.mxu0 0.0
  %4603 = vmatpush1.msra.mxu0 0.0
  %4604 = vmatprep.subr.mxu0 0.0
  %4605 = vmatpush1.msra.mxu0 0.0
  %4606 = vmatprep.subr.mxu0 0.0
  %4607 = vmatpush1.msra.mxu0 0.0
  %4608 = vmatprep.subr.mxu0 0.0
  %4609 = vmatpush1.msra.mxu0 %v4432
  %4610 = vmatprep.subr.mxu0 0.0
  %4611 = vmatpush1.msra.mxu0 %v4427
  %4612 = vmatprep.subr.mxu0 0.0
  %4613 = vmatpush1.msra.mxu0 %v4422
  %4614 = vmatprep.subr.mxu0 0.0
  %4615 = vmatpush1.msra.mxu0 %v4417
  %4616 = vmatprep.subr.mxu0 0.0
  %4617 = vmatpush2.msra.mxu0 0.0
  %4618 = vmatprep.subr.mxu0 0.0
  %4619 = vmatpush2.msra.mxu0 0.0
  %4620 = vmatprep.subr.mxu0 0.0
  %4621 = vmatpush2.msra.mxu0 0.0
  %4622 = vmatprep.subr.mxu0 0.0
  %4623 = vmatpush2.msra.mxu0 0.0
  %4624 = vmatprep.subr.mxu0 0.0
  %4625 = vmatpush2.msra.mxu0 0.0
  %4626 = vmatprep.subr.mxu0 0.0
  %4627 = vmatpush2.msra.mxu0 0.0
  %4628 = vmatprep.subr.mxu0 0.0
  %4629 = vmatpush2.msra.mxu0 0.0
  %4630 = vmatprep.subr.mxu0 0.0
  %4631 = vmatpush2.msra.mxu0 0.0
  %4632 = vmatprep.subr.mxu0 0.0
  %4633 = vmatpush2.msra.mxu0 0.0
  %4634 = vmatprep.subr.mxu0 0.0
  %4635 = vmatpush2.msra.mxu0 0.0
  %4636 = vmatprep.subr.mxu0 0.0
  %4637 = vmatpush2.msra.mxu0 0.0
  %4638 = vmatprep.subr.mxu0 0.0
  %4639 = vmatpush2.msra.mxu0 0.0
  %4640 = vmatprep.subr.mxu0 0.0
  %4641 = vmatpush2.msra.mxu0 0.0
  %4642 = vmatprep.subr.mxu0 0.0
  %4643 = vmatpush2.msra.mxu0 0.0
  %4644 = vmatprep.subr.mxu0 0.0
  %4645 = vmatpush2.msra.mxu0 0.0
  %4646 = vmatprep.subr.mxu0 0.0
  %4647 = vmatpush2.msra.mxu0 0.0
  %4648 = vmatprep.mubr.f32.mxu0 0.0
  %4649 = vmatmul.mubr.f32.gmra.mxu0 %v4582
  %v4650 = vpop.f32.mrf.mxu0
  %v4651 = vadd.f32 %v4579, %v4650
  %v4652 = vpop.f32.mrf.mxu0
  %4653 = vdwg.mxu0
  %v4654 = vmax.f32 %v4651, 0.0
  %v4656 = vrot.slane %v4654, 1
  %4657 = vrot.lane.b32.xlu0 %v4656, 64
  %v4658 = vpop.permute.xlu0 %4657
  %v4660 = vsel %vm4516, %v4654, %v4658
  %4661 = vrot.lane.b32.xlu0 %v4654, 64
  %v4662 = vpop.permute.xlu0 %4661
  %v4665 = vsel %vm4516, %v4662, %v4656
  %v4667 = vrot.slane %v4665, 7
  %vm4669 = vcmask 1040384
  %v4670 = vsel %vm4669, %v4660, %v4667
  %v4671 = vld [vmem:[%s9] sm:$0xff]
  %v4672 = vld [vmem:[%s9 + $0x8] sm:$0xff]
  %v4673 = vld [vmem:[%s9 + $0x10] sm:$0xff]
  %v4674 = vld [vmem:[%s9 + $0x18] sm:$0xff]
  %v4675 = vld [vmem:[%s9 + $0x20] sm:$0xff]
  %v4676 = vld [vmem:[%s9 + $0x28] sm:$0xff]
  %v4677 = vld [vmem:[%s9 + $0x30] sm:$0xff]
  %v4678 = vld [vmem:[%s9 + $0x38] sm:$0xff]
  %v4679 = vld [vmem:[%s9 + $0x40] sm:$0xff]
  %v4680 = vld [vmem:[%s9 + $0x48] sm:$0xff]
  %v4681 = vld [vmem:[%s9 + $0x50] sm:$0xff]
  %v4682 = vld [vmem:[%s9 + $0x58] sm:$0xff]
  %v4683 = vld [vmem:[%s9 + $0x60] sm:$0xff]
  %v4684 = vld [vmem:[%s9 + $0x68] sm:$0xff]
  %v4685 = vld [vmem:[%s9 + $0x70] sm:$0xff]
  %v4686 = vld [vmem:[%s9 + $0x78] sm:$0xff]
  %v4687 = vld [vmem:[%s10] sm:$0x1]
  %v4689 = vlaneseq
  %v4690 = vshrl.u32 %v4689, 7
  %v4691 = vsub.s32 0, %v4690
  %v4692 = vrot.slane %v4687, %v4691
  %4694 = vmatprep.subr.mxu0 0.0
  %4695 = vmatpush1.msra.mxu0 %v4686
  %4696 = vmatprep.subr.mxu0 0.0
  %4697 = vmatpush1.msra.mxu0 %v4685
  %4698 = vmatprep.subr.mxu0 0.0
  %4699 = vmatpush1.msra.mxu0 %v4684
  %4700 = vmatprep.subr.mxu0 0.0
  %4701 = vmatpush1.msra.mxu0 %v4683
  %4702 = vmatprep.subr.mxu0 0.0
  %4703 = vmatpush1.msra.mxu0 %v4682
  %4704 = vmatprep.subr.mxu0 0.0
  %4705 = vmatpush1.msra.mxu0 %v4681
  %4706 = vmatprep.subr.mxu0 0.0
  %4707 = vmatpush1.msra.mxu0 %v4680
  %4708 = vmatprep.subr.mxu0 0.0
  %4709 = vmatpush1.msra.mxu0 %v4679
  %4710 = vmatprep.subr.mxu0 0.0
  %4711 = vmatpush1.msra.mxu0 %v4678
  %4712 = vmatprep.subr.mxu0 0.0
  %4713 = vmatpush1.msra.mxu0 %v4677
  %4714 = vmatprep.subr.mxu0 0.0
  %4715 = vmatpush1.msra.mxu0 %v4676
  %4716 = vmatprep.subr.mxu0 0.0
  %4717 = vmatpush1.msra.mxu0 %v4675
  %4718 = vmatprep.subr.mxu0 0.0
  %4719 = vmatpush1.msra.mxu0 %v4674
  %4720 = vmatprep.subr.mxu0 0.0
  %4721 = vmatpush1.msra.mxu0 %v4673
  %4722 = vmatprep.subr.mxu0 0.0
  %4723 = vmatpush1.msra.mxu0 %v4672
  %4724 = vmatprep.subr.mxu0 0.0
  %4725 = vmatpush1.msra.mxu0 %v4671
  %4726 = vmatprep.subr.mxu0 0.0
  %4727 = vmatpush2.msra.mxu0 0.0
  %4728 = vmatprep.subr.mxu0 0.0
  %4729 = vmatpush2.msra.mxu0 0.0
  %4730 = vmatprep.subr.mxu0 0.0
  %4731 = vmatpush2.msra.mxu0 0.0
  %4732 = vmatprep.subr.mxu0 0.0
  %4733 = vmatpush2.msra.mxu0 0.0
  %4734 = vmatprep.subr.mxu0 0.0
  %4735 = vmatpush2.msra.mxu0 0.0
  %4736 = vmatprep.subr.mxu0 0.0
  %4737 = vmatpush2.msra.mxu0 0.0
  %4738 = vmatprep.subr.mxu0 0.0
  %4739 = vmatpush2.msra.mxu0 0.0
  %4740 = vmatprep.subr.mxu0 0.0
  %4741 = vmatpush2.msra.mxu0 0.0
  %4742 = vmatprep.subr.mxu0 0.0
  %4743 = vmatpush2.msra.mxu0 0.0
  %4744 = vmatprep.subr.mxu0 0.0
  %4745 = vmatpush2.msra.mxu0 0.0
  %4746 = vmatprep.subr.mxu0 0.0
  %4747 = vmatpush2.msra.mxu0 0.0
  %4748 = vmatprep.subr.mxu0 0.0
  %4749 = vmatpush2.msra.mxu0 0.0
  %4750 = vmatprep.subr.mxu0 0.0
  %4751 = vmatpush2.msra.mxu0 0.0
  %4752 = vmatprep.subr.mxu0 0.0
  %4753 = vmatpush2.msra.mxu0 0.0
  %4754 = vmatprep.subr.mxu0 0.0
  %4755 = vmatpush2.msra.mxu0 0.0
  %4756 = vmatprep.subr.mxu0 0.0
  %4757 = vmatpush2.msra.mxu0 0.0
  %4758 = vmatprep.mubr.f32.mxu0 0.0
  %4759 = vmatmul.mubr.f32.gmra.mxu0 %v4670
  %v4760 = vpop.f32.mrf.mxu0
  %v4761 = vadd.f32 %v4692, %v4760
  %v4762 = vpop.f32.mrf.mxu0
  %4763 = vdwg.mxu0
  %v4764 = vmax.f32 %v4761, 0.0
  %v4765 = vld [vmem:[%s11] sm:$0xff]
  %v4766 = vld [vmem:[#allocation2] sm:$0x1]
  %v4768 = vlaneseq
  %v4769 = vshrl.u32 %v4768, 7
  %v4770 = vsub.s32 0, %v4769
  %v4771 = vrot.slane %v4766, %v4770
  %vm4773 = vcmask 64512
  %v4775 = vsel %vm4773, %v4764, 0
  %4777 = vmatprep.subr.mxu0 0.0
  %4778 = vmatpush1.msra.mxu0 0.0
  %4779 = vmatprep.subr.mxu0 0.0
  %4780 = vmatpush1.msra.mxu0 0.0
  %4781 = vmatprep.subr.mxu0 0.0
  %4782 = vmatpush1.msra.mxu0 0.0
  %4783 = vmatprep.subr.mxu0 0.0
  %4784 = vmatpush1.msra.mxu0 0.0
  %4785 = vmatprep.subr.mxu0 0.0
  %4786 = vmatpush1.msra.mxu0 0.0
  %4787 = vmatprep.subr.mxu0 0.0
  %4788 = vmatpush1.msra.mxu0 0.0
  %4789 = vmatprep.subr.mxu0 0.0
  %4790 = vmatpush1.msra.mxu0 0.0
  %4791 = vmatprep.subr.mxu0 0.0
  %4792 = vmatpush1.msra.mxu0 0.0
  %4793 = vmatprep.subr.mxu0 0.0
  %4794 = vmatpush1.msra.mxu0 0.0
  %4795 = vmatprep.subr.mxu0 0.0
  %4796 = vmatpush1.msra.mxu0 0.0
  %4797 = vmatprep.subr.mxu0 0.0
  %4798 = vmatpush1.msra.mxu0 0.0
  %4799 = vmatprep.subr.mxu0 0.0
  %4800 = vmatpush1.msra.mxu0 0.0
  %4801 = vmatprep.subr.mxu0 0.0
  %4802 = vmatpush1.msra.mxu0 0.0
  %4803 = vmatprep.subr.mxu0 0.0
  %4804 = vmatpush1.msra.mxu0 0.0
  %4805 = vmatprep.subr.mxu0 0.0
  %4806 = vmatpush1.msra.mxu0 0.0
  %4807 = vmatprep.subr.mxu0 0.0
  %4808 = vmatpush1.msra.mxu0 %v4765
  %4809 = vmatprep.subr.mxu0 0.0
  %4810 = vmatpush2.msra.mxu0 0.0
  %4811 = vmatprep.subr.mxu0 0.0
  %4812 = vmatpush2.msra.mxu0 0.0
  %4813 = vmatprep.subr.mxu0 0.0
  %4814 = vmatpush2.msra.mxu0 0.0
  %4815 = vmatprep.subr.mxu0 0.0
  %4816 = vmatpush2.msra.mxu0 0.0
  %4817 = vmatprep.subr.mxu0 0.0
  %4818 = vmatpush2.msra.mxu0 0.0
  %4819 = vmatprep.subr.mxu0 0.0
  %4820 = vmatpush2.msra.mxu0 0.0
  %4821 = vmatprep.subr.mxu0 0.0
  %4822 = vmatpush2.msra.mxu0 0.0
  %4823 = vmatprep.subr.mxu0 0.0
  %4824 = vmatpush2.msra.mxu0 0.0
  %4825 = vmatprep.subr.mxu0 0.0
  %4826 = vmatpush2.msra.mxu0 0.0
  %4827 = vmatprep.subr.mxu0 0.0
  %4828 = vmatpush2.msra.mxu0 0.0
  %4829 = vmatprep.subr.mxu0 0.0
  %4830 = vmatpush2.msra.mxu0 0.0
  %4831 = vmatprep.subr.mxu0 0.0
  %4832 = vmatpush2.msra.mxu0 0.0
  %4833 = vmatprep.subr.mxu0 0.0
  %4834 = vmatpush2.msra.mxu0 0.0
  %4835 = vmatprep.subr.mxu0 0.0
  %4836 = vmatpush2.msra.mxu0 0.0
  %4837 = vmatprep.subr.mxu0 0.0
  %4838 = vmatpush2.msra.mxu0 0.0
  %4839 = vmatprep.subr.mxu0 0.0
  %4840 = vmatpush2.msra.mxu0 0.0
  %4841 = vmatprep.mubr.f32.mxu0 0.0
  %4842 = vmatmul.mubr.f32.gmra.mxu0 %v4775
  %v4843 = vpop.f32.mrf.mxu0
  %v4844 = vadd.f32 %v4771, %v4843
  %v4845 = vpop.f32.mrf.mxu0
  %4846 = vdwg.mxu0
  %v4847 = vtanh.pop %v4844
  %vm4848 = vcmask 1024
  %4849 = vst.msk [vmem:[%s14] sm:$0x3] %vm4848, %v4847
  // Predicated region
  $region54: #{predict_net_forward.1} parent=0 // pred_check
    _
  $region55: #{predict_net_forward.1} parent=0 // pred_check_branch
    %4851 = sbr.rel (0) target = $region57
  $region56: #{predict_net_forward.1} parent=0 // pred_region
    _
  $region57: #{predict_net_forward.1} parent=0 // pred_fallthru
    _
  // Predicated region
  $region58: #{predict_net_forward.1} parent=0 // pred_check
    _
  $region59: #{predict_net_forward.1} parent=0 // pred_check_branch
    %4853 = sbr.rel (0) target = $region61
  $region60: #{predict_net_forward.1} parent=0 // pred_region
    _
  $region61: #{predict_net_forward.1} parent=0 // pred_fallthru
    _
  // Predicated region
  $region62: #{predict_net_forward.1} parent=0 // pred_check
    _
  $region63: #{predict_net_forward.1} parent=0 // pred_check_branch
    %4855 = sbr.rel (0) target = $region65
  $region64: #{predict_net_forward.1} parent=0 // pred_region
    _
  $region65: #{predict_net_forward.1} parent=0 // pred_fallthru
    _
  // Predicated region
  $region66: #{predict_net_forward.1} parent=0 // pred_check
    _
  $region67: #{predict_net_forward.1} parent=0 // pred_check_branch
    %4857 = sbr.rel (0) target = $region69
  $region68: #{predict_net_forward.1} parent=0 // pred_region
    _
  $region69: #{predict_net_forward.1} parent=0 // pred_fallthru
    _

</llo_original>
